<compile_context>
chip_gen: v7x
topology: tpu7x:2x2x1
jax: 0.10.0
libtpu: 0.0.40
codegen_flags: <defaults>
</compile_context>

<pallas_src>
import functools

import jax
import jax.numpy as jnp
from jax import lax
from jax.experimental import pallas as pl
from jax.experimental.pallas import tpu as pltpu

BN_EPS = 1e-5


# ---------------------------------------------------------------------------
# Pass 1: conv3x3 -> ReLU -> conv3x3 (+bias), per-image BN partial statistics.
# ---------------------------------------------------------------------------
def _conv_pass_kernel(x_ref, w1_ref, b1_ref, w2_ref, b2_ref,
                      y2_ref, stats_ref, pad_ref, col_ref, *, H, W, C):
    """Shapes seen by the kernel (one image of the batch per grid step):

    x_ref:     (1, H, W, C)    f32   input activations (NHWC tile)
    w1/w2_ref: (9*C, C)        bf16  HWIO weights reshaped for im2col
    b1/b2_ref: (1, C)          f32   conv biases
    y2_ref:    (1, H, W, C)    f32   pre-BatchNorm conv2 output
    stats_ref: (1, 2, C)       f32   per-image per-channel [sum, sum_sq]
    pad_ref:   (H+2, W+2, C)   f32   scratch: zero-padded conv input
    col_ref:   (H*W, 9*C)      f32   scratch: im2col patch buffer
    """
    # Zero only the 1-pixel halo; the interior is fully rewritten before each
    # conv.  Done unconditionally (4 tiny stores) so it stays correct when the
    # "parallel" batch axis is sharded across TensorCores.
    zrow = jnp.zeros((1, W + 2, C), jnp.float32)
    zcol = jnp.zeros((H + 2, 1, C), jnp.float32)
    pad_ref[0:1, :, :] = zrow
    pad_ref[H + 1:H + 2, :, :] = zrow
    pad_ref[:, 0:1, :] = zcol
    pad_ref[:, W + 1:W + 2, :] = zcol

    def conv3x3(w_bf16, b):
        # im2col straight off the padded scratch (no full-buffer load): the 9
        # shifted windows land side by side in the (H*W, 9*C) patch buffer and
        # are contracted in ONE MXU matmul, bf16 in / f32 accumulate.
        for t in range(9):
            dh, dw = divmod(t, 3)
            col_ref[:, t * C:(t + 1) * C] = (
                pad_ref[dh:dh + H, dw:dw + W, :].reshape(H * W, C))
        patch = col_ref[...].astype(jnp.bfloat16)                    # (H*W, 9C)
        return jnp.dot(patch, w_bf16,
                       preferred_element_type=jnp.float32) + b       # (H*W, C)

    # conv1 -> ReLU (elementwise kept in f32).
    pad_ref[1:H + 1, 1:W + 1, :] = x_ref[0]
    y1 = jnp.maximum(conv3x3(w1_ref[...], b1_ref[...]), 0.0)         # (H*W, C)

    # conv2 (pre-BatchNorm output of the block).
    pad_ref[1:H + 1, 1:W + 1, :] = y1.reshape(H, W, C)
    y2 = conv3x3(w2_ref[...], b2_ref[...])                           # (H*W, C)

    # Per-image per-channel partial sums for the training-mode batch stats.
    stats_ref[0:1, 0:1, :] = jnp.sum(y2, axis=0, keepdims=True)[None]
    stats_ref[0:1, 1:2, :] = jnp.sum(y2 * y2, axis=0, keepdims=True)[None]

    y2_ref[0] = y2.reshape(H, W, C)


# ---------------------------------------------------------------------------
# Pass 2: finish BatchNorm (global batch stats), residual add, final ReLU,
#         all on lane-dense (H, W*C) tiles.
# ---------------------------------------------------------------------------
def _bn_residual_kernel(x_ref, y2_ref, stats_ref, gamma_ref, beta_ref,
                        bcast_ref, o_ref, *, count):
    """x_ref / y2_ref / o_ref: (1, H, W*C) f32 lane-dense tiles
    stats_ref:              (N, 2, C)   f32 per-image [sum, sum_sq]
    gamma_ref / beta_ref:   (1, C)      f32 BN affine parameters
    bcast_ref:              (C, W*C)    f32 constant selection matrix that maps
                                        a per-channel vector onto the flattened
                                        (w*C + c) column layout
    count = N*H*W (elements per channel in the batch statistics)
    """
    stats = stats_ref[...]                                           # (N, 2, C)
    inv_n = 1.0 / count
    mean = jnp.sum(stats[:, 0, :], axis=0, keepdims=True) * inv_n    # (1, C)
    ex2 = jnp.sum(stats[:, 1, :], axis=0, keepdims=True) * inv_n     # (1, C)
    var = ex2 - mean * mean                                          # biased var
    scale = gamma_ref[...] * lax.rsqrt(var + BN_EPS)                 # (1, C)
    shift = beta_ref[...] - mean * scale                             # (1, C)

    # Channel -> lane-dense column broadcast via a tiny matmul (column w*C + c
    # picks up channel c).
    bmat = bcast_ref[...]
    scale_wc = jnp.dot(scale, bmat, preferred_element_type=jnp.float32)  # (1, W*C)
    shift_wc = jnp.dot(shift, bmat, preferred_element_type=jnp.float32)

    y = y2_ref[0] * scale_wc + shift_wc + x_ref[0]                   # BN + skip
    o_ref[0] = jnp.maximum(y, 0.0).astype(o_ref.dtype)               # final ReLU


# ---------------------------------------------------------------------------
# Wrappers
# ---------------------------------------------------------------------------
def resnet_basic_block_nhwc(x, w1, b1, w2, b2, gamma, beta):
    """ResNet basic block forward.

    x: (N, H, W, C) f32 NHWC.  w1/w2: (3, 3, C, C) HWIO.  b/gamma/beta: (C,).
    """
    N, H, W, C = x.shape
    WC = W * C

    # Free (contiguous) parameter views; weights cast to bf16 for the MXU.
    w1_r = w1.reshape(9 * C, C).astype(jnp.bfloat16)
    w2_r = w2.reshape(9 * C, C).astype(jnp.bfloat16)
    b1_r = b1.reshape(1, C).astype(jnp.float32)
    b2_r = b2.reshape(1, C).astype(jnp.float32)
    gamma_r = gamma.reshape(1, C).astype(jnp.float32)
    beta_r = beta.reshape(1, C).astype(jnp.float32)

    # Constant channel->column selection matrix for the lane-dense layout.
    col_channel = jnp.arange(WC, dtype=jnp.int32) % C
    bcast = (jnp.arange(C, dtype=jnp.int32)[:, None]
             == col_channel[None, :]).astype(jnp.float32)            # (C, W*C)

    cparams = pltpu.CompilerParams(
        dimension_semantics=("parallel",),       # shard the batch over TCs (v7x)
        vmem_limit_bytes=32 * 1024 * 1024)

    # ---- Pass 1: convs + per-image BN partial statistics -------------------
    y2, stats = pl.pallas_call(
        functools.partial(_conv_pass_kernel, H=H, W=W, C=C),
        out_shape=(jax.ShapeDtypeStruct((N, H, W, C), jnp.float32),
                   jax.ShapeDtypeStruct((N, 2, C), jnp.float32)),
        grid_spec=pltpu.PrefetchScalarGridSpec(
            num_scalar_prefetch=0,
            grid=(N,),
            in_specs=[pl.BlockSpec((1, H, W, C), lambda n: (n, 0, 0, 0)),
                      pl.BlockSpec((9 * C, C), lambda n: (0, 0)),
                      pl.BlockSpec((1, C), lambda n: (0, 0)),
                      pl.BlockSpec((9 * C, C), lambda n: (0, 0)),
                      pl.BlockSpec((1, C), lambda n: (0, 0))],
            out_specs=[pl.BlockSpec((1, H, W, C), lambda n: (n, 0, 0, 0)),
                       pl.BlockSpec((1, 2, C), lambda n: (n, 0, 0))],
            scratch_shapes=[pltpu.VMEM((H + 2, W + 2, C), jnp.float32),
                            pltpu.VMEM((H * W, 9 * C), jnp.float32)]),
        compiler_params=cparams,
    )(x, w1_r, b1_r, w2_r, b2_r)

    # Lane-dense views for the elementwise pass (free contiguous reshapes).
    x_flat = x.reshape(N, H, WC)
    y2_flat = y2.reshape(N, H, WC)

    # ---- Pass 2: BN finalize + residual + ReLU on lane-dense tiles ---------
    out_flat = pl.pallas_call(
        functools.partial(_bn_residual_kernel, count=N * H * W),
        out_shape=jax.ShapeDtypeStruct((N, H, WC), x.dtype),
        grid_spec=pltpu.PrefetchScalarGridSpec(
            num_scalar_prefetch=0,
            grid=(N,),
            in_specs=[pl.BlockSpec((1, H, WC), lambda n: (n, 0, 0)),
                      pl.BlockSpec((1, H, WC), lambda n: (n, 0, 0)),
                      pl.BlockSpec((N, 2, C), lambda n: (0, 0, 0)),
                      pl.BlockSpec((1, C), lambda n: (0, 0)),
                      pl.BlockSpec((1, C), lambda n: (0, 0)),
                      pl.BlockSpec((C, WC), lambda n: (0, 0))],
            out_specs=pl.BlockSpec((1, H, WC), lambda n: (n, 0, 0))),
        compiler_params=cparams,
    )(x_flat, y2_flat, stats, gamma_r, beta_r, bcast)

    return out_flat.reshape(N, H, W, C)


def resnet_basic_block(x_nchw, w1, b1, w2, b2, gamma, beta):
    """PyTorch-layout adapter (NCHW in/out).  Each transpose costs a full HBM
    round trip of the activations; production callers should stay in NHWC and
    use resnet_basic_block_nhwc directly."""
    x = jnp.transpose(x_nchw, (0, 2, 3, 1))
    y = resnet_basic_block_nhwc(x, w1, b1, w2, b2, gamma, beta)
    return jnp.transpose(y, (0, 3, 1, 2))


# ---------------------------------------------------------------------------
# Plain-JAX reference (NHWC) for correctness checks
# ---------------------------------------------------------------------------
def _reference_nhwc(x, w1, b1, w2, b2, gamma, beta, matmul_dtype=jnp.float32):
    dn = ('NHWC', 'HWIO', 'NHWC')

    def conv(v, w, b):
        y = lax.conv_general_dilated(v.astype(matmul_dtype), w.astype(matmul_dtype),
                                     (1, 1), 'SAME', dimension_numbers=dn,
                                     preferred_element_type=jnp.float32)
        return y + b.reshape(1, 1, 1, -1)

    y = jnp.maximum(conv(x, w1, b1), 0.0)
    y = conv(y, w2, b2)
    mean = jnp.mean(y, axis=(0, 1, 2), keepdims=True)
    var = jnp.mean((y - mean) ** 2, axis=(0, 1, 2), keepdims=True)
    y = (y - mean) * lax.rsqrt(var + BN_EPS) * gamma.reshape(1, 1, 1, -1) \
        + beta.reshape(1, 1, 1, -1)
    return jnp.maximum(y + x, 0.0)


if __name__ == "__main__":
    # W * C = 128 -> the flattened (H, W*C) tiles of pass 2 are exactly lane-dense.
    N, H, W, C = 2, 16, 16, 8
    key = jax.random.PRNGKey(0)
    kx, k1, kb1, k2, kb2 = jax.random.split(key, 5)

    x = jax.random.normal(kx, (N, H, W, C), jnp.float32)

    fan_in = C * 3 * 3
    bound = 1.0 / (fan_in ** 0.5)
    w1 = jax.random.uniform(k1, (3, 3, C, C), jnp.float32, -bound, bound)   # HWIO
    b1 = jax.random.uniform(kb1, (C,), jnp.float32, -bound, bound)
    w2 = jax.random.uniform(k2, (3, 3, C, C), jnp.float32, -bound, bound)   # HWIO
    b2 = jax.random.uniform(kb2, (C,), jnp.float32, -bound, bound)
    gamma = jnp.ones((C,), jnp.float32)    # BatchNorm2d default init
    beta = jnp.zeros((C,), jnp.float32)

    out = resnet_basic_block_nhwc(x, w1, b1, w2, b2, gamma, beta)
    out = jax.block_until_ready(out)
    assert out.shape == (N, H, W, C)

    # Reference with the same bf16 matmul quantization (tight tolerance) and a
    # pure-f32 reference (loose tolerance, bounds the bf16 error).
    ref_bf16 = _reference_nhwc(x, w1, b1, w2, b2, gamma, beta,
                               matmul_dtype=jnp.bfloat16)
    ref_f32 = _reference_nhwc(x, w1, b1, w2, b2, gamma, beta,
                              matmul_dtype=jnp.float32)
    assert jnp.allclose(out, ref_bf16, atol=2e-3, rtol=2e-3)
    assert jnp.allclose(out, ref_f32, atol=3e-2, rtol=3e-2)

    # PyTorch-layout adapter gives the identical result.
    out_nchw = resnet_basic_block(jnp.transpose(x, (0, 3, 1, 2)),
                                  w1, b1, w2, b2, gamma, beta)
    out_nchw = jax.block_until_ready(out_nchw)
    assert jnp.allclose(out_nchw, jnp.transpose(out, (0, 3, 1, 2)),
                        atol=1e-6, rtol=1e-6)

    print("KERNEL_OK")
</pallas_src>

<mosaic_0001>
module attributes {stable_mosaic.version = 11 : i64} {
  func.func @_conv_pass_kernel(%arg0: i32, %arg1: memref<1x16x16x8xf32, #tpu.memory_space<vmem>>, %arg2: memref<72x8xbf16, #tpu.memory_space<vmem>>, %arg3: memref<1x8xf32, #tpu.memory_space<vmem>>, %arg4: memref<72x8xbf16, #tpu.memory_space<vmem>>, %arg5: memref<1x8xf32, #tpu.memory_space<vmem>>, %arg6: memref<1x16x16x8xf32, #tpu.memory_space<vmem>>, %arg7: memref<1x2x8xf32, #tpu.memory_space<vmem>>, %arg8: memref<18x18x8xf32, #tpu.memory_space<vmem>>, %arg9: memref<256x72xf32, #tpu.memory_space<vmem>>) attributes {dimension_semantics = [#tpu.dimension_semantics<parallel>], iteration_bounds = array<i64: 2>, scalar_prefetch = 0 : i64, scratch_operands = 2 : i64, tpu.core_type = #tpu.core_type<tc>, window_params = [{transform_indices = @transform_0, window_bounds = array<i64: 1, 16, 16, 8>}, {pipeline_mode = #tpu.pipeline_mode<synchronous>, transform_indices = @transform_1, window_bounds = array<i64: 72, 8>}, {pipeline_mode = #tpu.pipeline_mode<synchronous>, transform_indices = @transform_2, window_bounds = array<i64: 1, 8>}, {pipeline_mode = #tpu.pipeline_mode<synchronous>, transform_indices = @transform_3, window_bounds = array<i64: 72, 8>}, {pipeline_mode = #tpu.pipeline_mode<synchronous>, transform_indices = @transform_4, window_bounds = array<i64: 1, 8>}, {transform_indices = @transform_5, window_bounds = array<i64: 1, 16, 16, 8>}, {transform_indices = @transform_6, window_bounds = array<i64: 1, 2, 8>}]} {
    %cst = arith.constant 0.000000e+00 : f32
    %0 = vector.broadcast %cst : f32 to vector<1x18x8xf32>
    %cst_0 = arith.constant 0.000000e+00 : f32
    %1 = vector.broadcast %cst_0 : f32 to vector<18x1x8xf32>
    %c0 = arith.constant 0 : index
    %c0_1 = arith.constant 0 : index
    %c0_2 = arith.constant 0 : index
    %2 = vector.load %arg8[%c0, %c0_1, %c0_2] : memref<18x18x8xf32, #tpu.memory_space<vmem>>, vector<1x18x8xf32>
    tpu.vector_store %arg8[%c0, %c0_1, %c0_2], %0 {strides = array<i32>} : memref<18x18x8xf32, #tpu.memory_space<vmem>>, vector<1x18x8xf32>,
    %c17 = arith.constant 17 : index
    %c0_3 = arith.constant 0 : index
    %c0_4 = arith.constant 0 : index
    %3 = vector.load %arg8[%c17, %c0_3, %c0_4] : memref<18x18x8xf32, #tpu.memory_space<vmem>>, vector<1x18x8xf32>
    tpu.vector_store %arg8[%c17, %c0_3, %c0_4], %0 {strides = array<i32>} : memref<18x18x8xf32, #tpu.memory_space<vmem>>, vector<1x18x8xf32>,
    %c0_5 = arith.constant 0 : index
    %c0_6 = arith.constant 0 : index
    %c0_7 = arith.constant 0 : index
    %4 = vector.load %arg8[%c0_5, %c0_6, %c0_7] : memref<18x18x8xf32, #tpu.memory_space<vmem>>, vector<18x1x8xf32>
    tpu.vector_store %arg8[%c0_5, %c0_6, %c0_7], %1 {strides = array<i32>} : memref<18x18x8xf32, #tpu.memory_space<vmem>>, vector<18x1x8xf32>,
    %c0_8 = arith.constant 0 : index
    %c17_9 = arith.constant 17 : index
    %c0_10 = arith.constant 0 : index
    %5 = vector.load %arg8[%c0_8, %c17_9, %c0_10] : memref<18x18x8xf32, #tpu.memory_space<vmem>>, vector<18x1x8xf32>
    tpu.vector_store %arg8[%c0_8, %c17_9, %c0_10], %1 {strides = array<i32>} : memref<18x18x8xf32, #tpu.memory_space<vmem>>, vector<18x1x8xf32>,
    %c0_11 = arith.constant 0 : index
    %c0_12 = arith.constant 0 : index
    %c0_13 = arith.constant 0 : index
    %c0_14 = arith.constant 0 : index
    %6 = vector.load %arg1[%c0_11, %c0_12, %c0_13, %c0_14] : memref<1x16x16x8xf32, #tpu.memory_space<vmem>>, vector<1x16x16x8xf32>
    %7 = vector.shape_cast %6 : vector<1x16x16x8xf32> to vector<16x16x8xf32>
    %c1 = arith.constant 1 : index
    %c1_15 = arith.constant 1 : index
    %c0_16 = arith.constant 0 : index
    %8 = vector.load %arg8[%c1, %c1_15, %c0_16] : memref<18x18x8xf32, #tpu.memory_space<vmem>>, vector<16x16x8xf32>
    tpu.vector_store %arg8[%c1, %c1_15, %c0_16], %7 {strides = array<i32>} : memref<18x18x8xf32, #tpu.memory_space<vmem>>, vector<16x16x8xf32>,
    %c0_17 = arith.constant 0 : index
    %c0_18 = arith.constant 0 : index
    %9 = vector.load %arg2[%c0_17, %c0_18] : memref<72x8xbf16, #tpu.memory_space<vmem>>, vector<72x8xbf16>
    %c0_19 = arith.constant 0 : index
    %c0_20 = arith.constant 0 : index
    %10 = vector.load %arg3[%c0_19, %c0_20] : memref<1x8xf32, #tpu.memory_space<vmem>>, vector<1x8xf32>
    %c0_21 = arith.constant 0 : index
    %c0_22 = arith.constant 0 : index
    %c0_23 = arith.constant 0 : index
    %11 = vector.load %arg8[%c0_21, %c0_22, %c0_23] : memref<18x18x8xf32, #tpu.memory_space<vmem>>, vector<16x16x8xf32>
    %12 = vector.shape_cast %11 : vector<16x16x8xf32> to vector<256x8xf32>
    %c0_24 = arith.constant 0 : index
    %c0_25 = arith.constant 0 : index
    %13 = vector.load %arg9[%c0_24, %c0_25] : memref<256x72xf32, #tpu.memory_space<vmem>>, vector<256x8xf32>
    tpu.vector_store %arg9[%c0_24, %c0_25], %12 {strides = array<i32>} : memref<256x72xf32, #tpu.memory_space<vmem>>, vector<256x8xf32>,
    %c0_26 = arith.constant 0 : index
    %c1_27 = arith.constant 1 : index
    %c0_28 = arith.constant 0 : index
    %14 = vector.load %arg8[%c0_26, %c1_27, %c0_28] : memref<18x18x8xf32, #tpu.memory_space<vmem>>, vector<16x16x8xf32>
    %15 = vector.shape_cast %14 : vector<16x16x8xf32> to vector<256x8xf32>
    %c0_29 = arith.constant 0 : index
    %c8 = arith.constant 8 : index
    %16 = vector.load %arg9[%c0_29, %c8] : memref<256x72xf32, #tpu.memory_space<vmem>>, vector<256x8xf32>
    tpu.vector_store %arg9[%c0_29, %c8], %15 {strides = array<i32>} : memref<256x72xf32, #tpu.memory_space<vmem>>, vector<256x8xf32>,
    %c0_30 = arith.constant 0 : index
    %c2 = arith.constant 2 : index
    %c0_31 = arith.constant 0 : index
    %17 = vector.load %arg8[%c0_30, %c2, %c0_31] : memref<18x18x8xf32, #tpu.memory_space<vmem>>, vector<16x16x8xf32>
    %18 = vector.shape_cast %17 : vector<16x16x8xf32> to vector<256x8xf32>
    %c0_32 = arith.constant 0 : index
    %c16 = arith.constant 16 : index
    %19 = vector.load %arg9[%c0_32, %c16] : memref<256x72xf32, #tpu.memory_space<vmem>>, vector<256x8xf32>
    tpu.vector_store %arg9[%c0_32, %c16], %18 {strides = array<i32>} : memref<256x72xf32, #tpu.memory_space<vmem>>, vector<256x8xf32>,
    %c1_33 = arith.constant 1 : index
    %c0_34 = arith.constant 0 : index
    %c0_35 = arith.constant 0 : index
    %20 = vector.load %arg8[%c1_33, %c0_34, %c0_35] : memref<18x18x8xf32, #tpu.memory_space<vmem>>, vector<16x16x8xf32>
    %21 = vector.shape_cast %20 : vector<16x16x8xf32> to vector<256x8xf32>
    %c0_36 = arith.constant 0 : index
    %c24 = arith.constant 24 : index
    %22 = vector.load %arg9[%c0_36, %c24] : memref<256x72xf32, #tpu.memory_space<vmem>>, vector<256x8xf32>
    tpu.vector_store %arg9[%c0_36, %c24], %21 {strides = array<i32>} : memref<256x72xf32, #tpu.memory_space<vmem>>, vector<256x8xf32>,
    %c1_37 = arith.constant 1 : index
    %c1_38 = arith.constant 1 : index
    %c0_39 = arith.constant 0 : index
    %23 = vector.load %arg8[%c1_37, %c1_38, %c0_39] : memref<18x18x8xf32, #tpu.memory_space<vmem>>, vector<16x16x8xf32>
    %24 = vector.shape_cast %23 : vector<16x16x8xf32> to vector<256x8xf32>
    %c0_40 = arith.constant 0 : index
    %c32 = arith.constant 32 : index
    %25 = vector.load %arg9[%c0_40, %c32] : memref<256x72xf32, #tpu.memory_space<vmem>>, vector<256x8xf32>
    tpu.vector_store %arg9[%c0_40, %c32], %24 {strides = array<i32>} : memref<256x72xf32, #tpu.memory_space<vmem>>, vector<256x8xf32>,
    %c1_41 = arith.constant 1 : index
    %c2_42 = arith.constant 2 : index
    %c0_43 = arith.constant 0 : index
    %26 = vector.load %arg8[%c1_41, %c2_42, %c0_43] : memref<18x18x8xf32, #tpu.memory_space<vmem>>, vector<16x16x8xf32>
    %27 = vector.shape_cast %26 : vector<16x16x8xf32> to vector<256x8xf32>
    %c0_44 = arith.constant 0 : index
    %c40 = arith.constant 40 : index
    %28 = vector.load %arg9[%c0_44, %c40] : memref<256x72xf32, #tpu.memory_space<vmem>>, vector<256x8xf32>
    tpu.vector_store %arg9[%c0_44, %c40], %27 {strides = array<i32>} : memref<256x72xf32, #tpu.memory_space<vmem>>, vector<256x8xf32>,
    %c2_45 = arith.constant 2 : index
    %c0_46 = arith.constant 0 : index
    %c0_47 = arith.constant 0 : index
    %29 = vector.load %arg8[%c2_45, %c0_46, %c0_47] : memref<18x18x8xf32, #tpu.memory_space<vmem>>, vector<16x16x8xf32>
    %30 = vector.shape_cast %29 : vector<16x16x8xf32> to vector<256x8xf32>
    %c0_48 = arith.constant 0 : index
    %c48 = arith.constant 48 : index
    %31 = vector.load %arg9[%c0_48, %c48] : memref<256x72xf32, #tpu.memory_space<vmem>>, vector<256x8xf32>
    tpu.vector_store %arg9[%c0_48, %c48], %30 {strides = array<i32>} : memref<256x72xf32, #tpu.memory_space<vmem>>, vector<256x8xf32>,
    %c2_49 = arith.constant 2 : index
    %c1_50 = arith.constant 1 : index
    %c0_51 = arith.constant 0 : index
    %32 = vector.load %arg8[%c2_49, %c1_50, %c0_51] : memref<18x18x8xf32, #tpu.memory_space<vmem>>, vector<16x16x8xf32>
    %33 = vector.shape_cast %32 : vector<16x16x8xf32> to vector<256x8xf32>
    %c0_52 = arith.constant 0 : index
    %c56 = arith.constant 56 : index
    %34 = vector.load %arg9[%c0_52, %c56] : memref<256x72xf32, #tpu.memory_space<vmem>>, vector<256x8xf32>
    tpu.vector_store %arg9[%c0_52, %c56], %33 {strides = array<i32>} : memref<256x72xf32, #tpu.memory_space<vmem>>, vector<256x8xf32>,
    %c2_53 = arith.constant 2 : index
    %c2_54 = arith.constant 2 : index
    %c0_55 = arith.constant 0 : index
    %35 = vector.load %arg8[%c2_53, %c2_54, %c0_55] : memref<18x18x8xf32, #tpu.memory_space<vmem>>, vector<16x16x8xf32>
    %36 = vector.shape_cast %35 : vector<16x16x8xf32> to vector<256x8xf32>
    %c0_56 = arith.constant 0 : index
    %c64 = arith.constant 64 : index
    %37 = vector.load %arg9[%c0_56, %c64] : memref<256x72xf32, #tpu.memory_space<vmem>>, vector<256x8xf32>
    tpu.vector_store %arg9[%c0_56, %c64], %36 {strides = array<i32>} : memref<256x72xf32, #tpu.memory_space<vmem>>, vector<256x8xf32>,
    %c0_57 = arith.constant 0 : index
    %c0_58 = arith.constant 0 : index
    %38 = vector.load %arg9[%c0_57, %c0_58] : memref<256x72xf32, #tpu.memory_space<vmem>>, vector<256x72xf32>
    %39 = arith.truncf %38 : vector<256x72xf32> to vector<256x72xbf16>
    %cst_59 = arith.constant dense<0.000000e+00> : vector<256x8xf32>
    %40 = tpu.matmul %39, %9, %cst_59 {dimension_numbers = #tpu.dot_dimension_numbers<[1], [0], [0], [1], [0, 0, 1, 1], [], []>} : vector<256x72xbf16>, vector<72x8xbf16>, vector<256x8xf32> -> vector<256x8xf32>
    %41 = vector.broadcast %10 : vector<1x8xf32> to vector<256x8xf32>
    %42 = arith.addf %40, %41 : vector<256x8xf32>
    %cst_60 = arith.constant 0.000000e+00 : f32
    %43 = vector.broadcast %cst_60 : f32 to vector<256x8xf32>
    %44 = arith.maximumf %42, %43 : vector<256x8xf32>
    %45 = vector.shape_cast %44 : vector<256x8xf32> to vector<16x16x8xf32>
    %c1_61 = arith.constant 1 : index
    %c1_62 = arith.constant 1 : index
    %c0_63 = arith.constant 0 : index
    %46 = vector.load %arg8[%c1_61, %c1_62, %c0_63] : memref<18x18x8xf32, #tpu.memory_space<vmem>>, vector<16x16x8xf32>
    tpu.vector_store %arg8[%c1_61, %c1_62, %c0_63], %45 {strides = array<i32>} : memref<18x18x8xf32, #tpu.memory_space<vmem>>, vector<16x16x8xf32>,
    %c0_64 = arith.constant 0 : index
    %c0_65 = arith.constant 0 : index
    %47 = vector.load %arg4[%c0_64, %c0_65] : memref<72x8xbf16, #tpu.memory_space<vmem>>, vector<72x8xbf16>
    %c0_66 = arith.constant 0 : index
    %c0_67 = arith.constant 0 : index
    %48 = vector.load %arg5[%c0_66, %c0_67] : memref<1x8xf32, #tpu.memory_space<vmem>>, vector<1x8xf32>
    %c0_68 = arith.constant 0 : index
    %c0_69 = arith.constant 0 : index
    %c0_70 = arith.constant 0 : index
    %49 = vector.load %arg8[%c0_68, %c0_69, %c0_70] : memref<18x18x8xf32, #tpu.memory_space<vmem>>, vector<16x16x8xf32>
    %50 = vector.shape_cast %49 : vector<16x16x8xf32> to vector<256x8xf32>
    %c0_71 = arith.constant 0 : index
    %c0_72 = arith.constant 0 : index
    %51 = vector.load %arg9[%c0_71, %c0_72] : memref<256x72xf32, #tpu.memory_space<vmem>>, vector<256x8xf32>
    tpu.vector_store %arg9[%c0_71, %c0_72], %50 {strides = array<i32>} : memref<256x72xf32, #tpu.memory_space<vmem>>, vector<256x8xf32>,
    %c0_73 = arith.constant 0 : index
    %c1_74 = arith.constant 1 : index
    %c0_75 = arith.constant 0 : index
    %52 = vector.load %arg8[%c0_73, %c1_74, %c0_75] : memref<18x18x8xf32, #tpu.memory_space<vmem>>, vector<16x16x8xf32>
    %53 = vector.shape_cast %52 : vector<16x16x8xf32> to vector<256x8xf32>
    %c0_76 = arith.constant 0 : index
    %c8_77 = arith.constant 8 : index
    %54 = vector.load %arg9[%c0_76, %c8_77] : memref<256x72xf32, #tpu.memory_space<vmem>>, vector<256x8xf32>
    tpu.vector_store %arg9[%c0_76, %c8_77], %53 {strides = array<i32>} : memref<256x72xf32, #tpu.memory_space<vmem>>, vector<256x8xf32>,
    %c0_78 = arith.constant 0 : index
    %c2_79 = arith.constant 2 : index
    %c0_80 = arith.constant 0 : index
    %55 = vector.load %arg8[%c0_78, %c2_79, %c0_80] : memref<18x18x8xf32, #tpu.memory_space<vmem>>, vector<16x16x8xf32>
    %56 = vector.shape_cast %55 : vector<16x16x8xf32> to vector<256x8xf32>
    %c0_81 = arith.constant 0 : index
    %c16_82 = arith.constant 16 : index
    %57 = vector.load %arg9[%c0_81, %c16_82] : memref<256x72xf32, #tpu.memory_space<vmem>>, vector<256x8xf32>
    tpu.vector_store %arg9[%c0_81, %c16_82], %56 {strides = array<i32>} : memref<256x72xf32, #tpu.memory_space<vmem>>, vector<256x8xf32>,
    %c1_83 = arith.constant 1 : index
    %c0_84 = arith.constant 0 : index
    %c0_85 = arith.constant 0 : index
    %58 = vector.load %arg8[%c1_83, %c0_84, %c0_85] : memref<18x18x8xf32, #tpu.memory_space<vmem>>, vector<16x16x8xf32>
    %59 = vector.shape_cast %58 : vector<16x16x8xf32> to vector<256x8xf32>
    %c0_86 = arith.constant 0 : index
    %c24_87 = arith.constant 24 : index
    %60 = vector.load %arg9[%c0_86, %c24_87] : memref<256x72xf32, #tpu.memory_space<vmem>>, vector<256x8xf32>
    tpu.vector_store %arg9[%c0_86, %c24_87], %59 {strides = array<i32>} : memref<256x72xf32, #tpu.memory_space<vmem>>, vector<256x8xf32>,
    %c1_88 = arith.constant 1 : index
    %c1_89 = arith.constant 1 : index
    %c0_90 = arith.constant 0 : index
    %61 = vector.load %arg8[%c1_88, %c1_89, %c0_90] : memref<18x18x8xf32, #tpu.memory_space<vmem>>, vector<16x16x8xf32>
    %62 = vector.shape_cast %61 : vector<16x16x8xf32> to vector<256x8xf32>
    %c0_91 = arith.constant 0 : index
    %c32_92 = arith.constant 32 : index
    %63 = vector.load %arg9[%c0_91, %c32_92] : memref<256x72xf32, #tpu.memory_space<vmem>>, vector<256x8xf32>
    tpu.vector_store %arg9[%c0_91, %c32_92], %62 {strides = array<i32>} : memref<256x72xf32, #tpu.memory_space<vmem>>, vector<256x8xf32>,
    %c1_93 = arith.constant 1 : index
    %c2_94 = arith.constant 2 : index
    %c0_95 = arith.constant 0 : index
    %64 = vector.load %arg8[%c1_93, %c2_94, %c0_95] : memref<18x18x8xf32, #tpu.memory_space<vmem>>, vector<16x16x8xf32>
    %65 = vector.shape_cast %64 : vector<16x16x8xf32> to vector<256x8xf32>
    %c0_96 = arith.constant 0 : index
    %c40_97 = arith.constant 40 : index
    %66 = vector.load %arg9[%c0_96, %c40_97] : memref<256x72xf32, #tpu.memory_space<vmem>>, vector<256x8xf32>
    tpu.vector_store %arg9[%c0_96, %c40_97], %65 {strides = array<i32>} : memref<256x72xf32, #tpu.memory_space<vmem>>, vector<256x8xf32>,
    %c2_98 = arith.constant 2 : index
    %c0_99 = arith.constant 0 : index
    %c0_100 = arith.constant 0 : index
    %67 = vector.load %arg8[%c2_98, %c0_99, %c0_100] : memref<18x18x8xf32, #tpu.memory_space<vmem>>, vector<16x16x8xf32>
    %68 = vector.shape_cast %67 : vector<16x16x8xf32> to vector<256x8xf32>
    %c0_101 = arith.constant 0 : index
    %c48_102 = arith.constant 48 : index
    %69 = vector.load %arg9[%c0_101, %c48_102] : memref<256x72xf32, #tpu.memory_space<vmem>>, vector<256x8xf32>
    tpu.vector_store %arg9[%c0_101, %c48_102], %68 {strides = array<i32>} : memref<256x72xf32, #tpu.memory_space<vmem>>, vector<256x8xf32>,
    %c2_103 = arith.constant 2 : index
    %c1_104 = arith.constant 1 : index
    %c0_105 = arith.constant 0 : index
    %70 = vector.load %arg8[%c2_103, %c1_104, %c0_105] : memref<18x18x8xf32, #tpu.memory_space<vmem>>, vector<16x16x8xf32>
    %71 = vector.shape_cast %70 : vector<16x16x8xf32> to vector<256x8xf32>
    %c0_106 = arith.constant 0 : index
    %c56_107 = arith.constant 56 : index
    %72 = vector.load %arg9[%c0_106, %c56_107] : memref<256x72xf32, #tpu.memory_space<vmem>>, vector<256x8xf32>
    tpu.vector_store %arg9[%c0_106, %c56_107], %71 {strides = array<i32>} : memref<256x72xf32, #tpu.memory_space<vmem>>, vector<256x8xf32>,
    %c2_108 = arith.constant 2 : index
    %c2_109 = arith.constant 2 : index
    %c0_110 = arith.constant 0 : index
    %73 = vector.load %arg8[%c2_108, %c2_109, %c0_110] : memref<18x18x8xf32, #tpu.memory_space<vmem>>, vector<16x16x8xf32>
    %74 = vector.shape_cast %73 : vector<16x16x8xf32> to vector<256x8xf32>
    %c0_111 = arith.constant 0 : index
    %c64_112 = arith.constant 64 : index
    %75 = vector.load %arg9[%c0_111, %c64_112] : memref<256x72xf32, #tpu.memory_space<vmem>>, vector<256x8xf32>
    tpu.vector_store %arg9[%c0_111, %c64_112], %74 {strides = array<i32>} : memref<256x72xf32, #tpu.memory_space<vmem>>, vector<256x8xf32>,
    %c0_113 = arith.constant 0 : index
    %c0_114 = arith.constant 0 : index
    %76 = vector.load %arg9[%c0_113, %c0_114] : memref<256x72xf32, #tpu.memory_space<vmem>>, vector<256x72xf32>
    %77 = arith.truncf %76 : vector<256x72xf32> to vector<256x72xbf16>
    %cst_115 = arith.constant dense<0.000000e+00> : vector<256x8xf32>
    %78 = tpu.matmul %77, %47, %cst_115 {dimension_numbers = #tpu.dot_dimension_numbers<[1], [0], [0], [1], [0, 0, 1, 1], [], []>} : vector<256x72xbf16>, vector<72x8xbf16>, vector<256x8xf32> -> vector<256x8xf32>
    %79 = vector.broadcast %48 : vector<1x8xf32> to vector<256x8xf32>
    %80 = arith.addf %78, %79 : vector<256x8xf32>
    %cst_116 = arith.constant dense<0.000000e+00> : vector<8xf32>
    %81 = vector.multi_reduction <add>, %80, %cst_116 [0] : vector<256x8xf32> to vector<8xf32>
    %82 = vector.shape_cast %81 : vector<8xf32> to vector<1x8xf32>
    %83 = vector.shape_cast %82 : vector<1x8xf32> to vector<1x1x8xf32>
    %c0_117 = arith.constant 0 : index
    %c0_118 = arith.constant 0 : index
    %c0_119 = arith.constant 0 : index
    %84 = vector.load %arg7[%c0_117, %c0_118, %c0_119] : memref<1x2x8xf32, #tpu.memory_space<vmem>>, vector<1x1x8xf32>
    tpu.vector_store %arg7[%c0_117, %c0_118, %c0_119], %83 {strides = array<i32>} : memref<1x2x8xf32, #tpu.memory_space<vmem>>, vector<1x1x8xf32>,
    %85 = arith.mulf %80, %80 : vector<256x8xf32>
    %cst_120 = arith.constant dense<0.000000e+00> : vector<8xf32>
    %86 = vector.multi_reduction <add>, %85, %cst_120 [0] : vector<256x8xf32> to vector<8xf32>
    %87 = vector.shape_cast %86 : vector<8xf32> to vector<1x8xf32>
    %88 = vector.shape_cast %87 : vector<1x8xf32> to vector<1x1x8xf32>
    %c0_121 = arith.constant 0 : index
    %c1_122 = arith.constant 1 : index
    %c0_123 = arith.constant 0 : index
    %89 = vector.load %arg7[%c0_121, %c1_122, %c0_123] : memref<1x2x8xf32, #tpu.memory_space<vmem>>, vector<1x1x8xf32>
    tpu.vector_store %arg7[%c0_121, %c1_122, %c0_123], %88 {strides = array<i32>} : memref<1x2x8xf32, #tpu.memory_space<vmem>>, vector<1x1x8xf32>,
    %90 = vector.shape_cast %80 : vector<256x8xf32> to vector<16x16x8xf32>
    %c0_124 = arith.constant 0 : index
    %c0_125 = arith.constant 0 : index
    %c0_126 = arith.constant 0 : index
    %c0_127 = arith.constant 0 : index
    %91 = vector.load %arg6[%c0_124, %c0_125, %c0_126, %c0_127] : memref<1x16x16x8xf32, #tpu.memory_space<vmem>>, vector<1x16x16x8xf32>
    %92 = vector.shape_cast %91 : vector<1x16x16x8xf32> to vector<16x16x8xf32>
    %93 = vector.shape_cast %90 : vector<16x16x8xf32> to vector<1x16x16x8xf32>
    tpu.vector_store %arg6[%c0_124, %c0_125, %c0_126, %c0_127], %93 {strides = array<i32>} : memref<1x16x16x8xf32, #tpu.memory_space<vmem>>, vector<1x16x16x8xf32>,
    return
  }
  func.func @transform_0(%arg0: i32) -> (i32, i32, i32, i32) {
    %c0_i32 = arith.constant 0 : i32
    %c0_i32_0 = arith.constant 0 : i32
    %c0_i32_1 = arith.constant 0 : i32
    %c0_i32_2 = arith.constant 0 : i32
    return %arg0, %c0_i32, %c0_i32_0, %c0_i32_1 : i32, i32, i32, i32
  }
  func.func @transform_1(%arg0: i32) -> (i32, i32) {
    %c0_i32 = arith.constant 0 : i32
    %c0_i32_0 = arith.constant 0 : i32
    %c0_i32_1 = arith.constant 0 : i32
    return %c0_i32, %c0_i32_0 : i32, i32
  }
  func.func @transform_2(%arg0: i32) -> (i32, i32) {
    %c0_i32 = arith.constant 0 : i32
    %c0_i32_0 = arith.constant 0 : i32
    %c0_i32_1 = arith.constant 0 : i32
    return %c0_i32, %c0_i32_0 : i32, i32
  }
  func.func @transform_3(%arg0: i32) -> (i32, i32) {
    %c0_i32 = arith.constant 0 : i32
    %c0_i32_0 = arith.constant 0 : i32
    %c0_i32_1 = arith.constant 0 : i32
    return %c0_i32, %c0_i32_0 : i32, i32
  }
  func.func @transform_4(%arg0: i32) -> (i32, i32) {
    %c0_i32 = arith.constant 0 : i32
    %c0_i32_0 = arith.constant 0 : i32
    %c0_i32_1 = arith.constant 0 : i32
    return %c0_i32, %c0_i32_0 : i32, i32
  }
  func.func @transform_5(%arg0: i32) -> (i32, i32, i32, i32) {
    %c0_i32 = arith.constant 0 : i32
    %c0_i32_0 = arith.constant 0 : i32
    %c0_i32_1 = arith.constant 0 : i32
    %c0_i32_2 = arith.constant 0 : i32
    return %arg0, %c0_i32, %c0_i32_0, %c0_i32_1 : i32, i32, i32, i32
  }
  func.func @transform_6(%arg0: i32) -> (i32, i32, i32) {
    %c0_i32 = arith.constant 0 : i32
    %c0_i32_0 = arith.constant 0 : i32
    %c0_i32_1 = arith.constant 0 : i32
    return %arg0, %c0_i32, %c0_i32_0 : i32, i32, i32
  }
}

</mosaic_0001>

<llo_original>
// kernel: tpu_custom_call.1
$region0: #{tpu_custom_call.1}
  #allocation0 [shape = 'u32[]', space=smem, size = 0x4, offset = 0x4, fixed_abs, tag = 'smem constant byte address 0x4 - core index']
  #allocation1 [shape = 'u32[144,128]{1,0:T(1,128)}', space=vmem, size = 0x12000, scoped, tag = 'internal scratch']
  #allocation2 [shape = 'f32[18,18,8]{2,1,0:T(8,128)}', space=vmem, size = 0x36000, scoped, tag = 'scratch operand']
  #allocation3 [shape = 'f32[256,72]{1,0:T(8,128)}', space=vmem, size = 0x20000, scoped, tag = 'scratch operand']
  %s0 = inlined_call_operand.vmem [shape: f32[2,16,16,8], index: 0, kind: input, shape index: {}]
  %s1 = inlined_call_operand.vmem [shape: bf16[72,8], index: 1, kind: input, shape index: {}]
  %s2 = inlined_call_operand.vmem [shape: f32[1,8], index: 2, kind: input, shape index: {}]
  %s3 = inlined_call_operand.vmem [shape: bf16[72,8], index: 3, kind: input, shape index: {}]
  %s4 = inlined_call_operand.vmem [shape: f32[1,8], index: 4, kind: input, shape index: {}]
  %s5 = inlined_call_operand.vmem [shape: f32[2,16,16,8], index: 5, kind: output, shape index: {0}]
  %s6 = inlined_call_operand.hbm [shape: f32[2,2,8], index: 6, kind: output, shape index: {1}]
  %7 = xla_tuple %s5, %s6
  %s8 = sld [smem:[#allocation0]]
  $region61: #{tpu_custom_call.1} parent=0
    _
  %s10 = ssub.s32 1, %s8
  %s11 = scalar_select 0, %s10, %s8
  $region1: #{tpu_custom_call.1} parent=0
    #allocation4 [shape = 'u8[2048]{0}', space=vmem, size = 0x800, scoped, tag = 'output window, operand 1']
    #allocation5 [shape = 's32[2]{0}', space=sflag, size = 0x8, scoped, tag = 'scoped memory for tpu_custom_call.1']
    %12 = vsyncpa [#allocation5], 0
    %s13 = scalar_lea.sflag [#allocation5], 1
    %14 = vsyncpa %s13, 0
    loop: start=0, step=1, limit=4
    $region2: #{tpu_custom_call.1} parent=1 // loop_pre_header
      _
    $region3: #{tpu_custom_call.1} parent=1 // loop_header
      %s16 = sphi 0, %s20
      %p17 = scmp.ge.s32.totalorder %s16, 4
      %s26 = sphi 0, %s28
      %s29 = sphi 0, %s26
      %s30 = sphi 0, %s29
      %s46 = sphi 0, %s30
      %s50 = sphi 0, %s50
      %s52 = sphi 0, %s50
      %s53 = sphi 0, %s52
      %s67 = sphi 0, %s53
      %s71 = sphi 0, %s71
      %s73 = sphi 0, %s71
      %s74 = sphi 0, %s73
      %s88 = sphi 0, %s74
      %s92 = sphi 0, %s92
      %s94 = sphi 0, %s92
      %s95 = sphi 0, %s94
      %s109 = sphi 0, %s95
      %s113 = sphi 0, %s113
      %s115 = sphi 0, %s113
      %s116 = sphi 0, %s115
      %s130 = sphi 0, %s116
      %s136 = sphi 0, %s138
      %s139 = sphi 0, %s136
      %s140 = sphi 0, %s139
      %s156 = sphi 0, %s140
      %s162 = sphi 0, %s164
      %s165 = sphi 0, %s162
      %s166 = sphi 0, %s165
      %s182 = sphi 0, %s166
    $region4: #{tpu_custom_call.1} parent=1 // loop_header_branch
      %19 = sbr.rel (%p17) target = $region8
    $region5: #{tpu_custom_call.1} parent=1 // loop_body
      %s21 = ssub.s32 %s16, 1
      %s22 = ssub.s32 %s16, 2
      %s23 = sadd.s32 %s16, 1
      %s24 = ssub.s32 %s16, %s23
      %p25 = scmp.eq.s32.totalorder %s24, 0
      %s27 = sadd.s32 %s26, 1
      %s28 = scalar_select %p25, %s26, %s27
      %p31 = pneg %p25
      %p32 = scmp.eq.s32.totalorder %s16, 1
      %p33 = por %p31, %p32
      %p34 = scmp.ne.s32.totalorder %s26, %s29
      %p35 = scmp.eq.s32.totalorder %s16, 0
      %p36 = por %p34, %p35
      %p37 = scmp.ne.s32.totalorder %s26, %s29
      %p38 = scmp.eq.s32.totalorder %s21, 1
      %p39 = por %p37, %p38
      %p40 = scmp.ne.s32.totalorder %s29, %s30
      %p41 = scmp.eq.s32.totalorder %s21, 0
      %p42 = por %p40, %p41
      %p43 = scmp.ne.s32.totalorder %s29, %s30
      %p44 = scmp.eq.s32.totalorder %s22, 1
      %p45 = por %p43, %p44
      %p47 = scmp.ne.s32.totalorder %s30, %s46
      %p48 = scmp.eq.s32.totalorder %s22, 0
      %p49 = por %p47, %p48
      %s51 = sadd.s32 %s50, 1
      %p54 = scmp.eq.s32.totalorder %s16, 1
      %p55 = scmp.ne.s32.totalorder %s50, %s52
      %p56 = scmp.eq.s32.totalorder %s16, 0
      %p57 = por %p55, %p56
      %p58 = scmp.ne.s32.totalorder %s50, %s52
      %p59 = scmp.eq.s32.totalorder %s21, 1
      %p60 = por %p58, %p59
      %p61 = scmp.ne.s32.totalorder %s52, %s53
      %p62 = scmp.eq.s32.totalorder %s21, 0
      %p63 = por %p61, %p62
      %p64 = scmp.ne.s32.totalorder %s52, %s53
      %p65 = scmp.eq.s32.totalorder %s22, 1
      %p66 = por %p64, %p65
      %p68 = scmp.ne.s32.totalorder %s53, %s67
      %p69 = scmp.eq.s32.totalorder %s22, 0
      %p70 = por %p68, %p69
      %s72 = sadd.s32 %s71, 1
      %p75 = scmp.eq.s32.totalorder %s16, 1
      %p76 = scmp.ne.s32.totalorder %s71, %s73
      %p77 = scmp.eq.s32.totalorder %s16, 0
      %p78 = por %p76, %p77
      %p79 = scmp.ne.s32.totalorder %s71, %s73
      %p80 = scmp.eq.s32.totalorder %s21, 1
      %p81 = por %p79, %p80
      %p82 = scmp.ne.s32.totalorder %s73, %s74
      %p83 = scmp.eq.s32.totalorder %s21, 0
      %p84 = por %p82, %p83
      %p85 = scmp.ne.s32.totalorder %s73, %s74
      %p86 = scmp.eq.s32.totalorder %s22, 1
      %p87 = por %p85, %p86
      %p89 = scmp.ne.s32.totalorder %s74, %s88
      %p90 = scmp.eq.s32.totalorder %s22, 0
      %p91 = por %p89, %p90
      %s93 = sadd.s32 %s92, 1
      %p96 = scmp.eq.s32.totalorder %s16, 1
      %p97 = scmp.ne.s32.totalorder %s92, %s94
      %p98 = scmp.eq.s32.totalorder %s16, 0
      %p99 = por %p97, %p98
      %p100 = scmp.ne.s32.totalorder %s92, %s94
      %p101 = scmp.eq.s32.totalorder %s21, 1
      %p102 = por %p100, %p101
      %p103 = scmp.ne.s32.totalorder %s94, %s95
      %p104 = scmp.eq.s32.totalorder %s21, 0
      %p105 = por %p103, %p104
      %p106 = scmp.ne.s32.totalorder %s94, %s95
      %p107 = scmp.eq.s32.totalorder %s22, 1
      %p108 = por %p106, %p107
      %p110 = scmp.ne.s32.totalorder %s95, %s109
      %p111 = scmp.eq.s32.totalorder %s22, 0
      %p112 = por %p110, %p111
      %s114 = sadd.s32 %s113, 1
      %p117 = scmp.eq.s32.totalorder %s16, 1
      %p118 = scmp.ne.s32.totalorder %s113, %s115
      %p119 = scmp.eq.s32.totalorder %s16, 0
      %p120 = por %p118, %p119
      %p121 = scmp.ne.s32.totalorder %s113, %s115
      %p122 = scmp.eq.s32.totalorder %s21, 1
      %p123 = por %p121, %p122
      %p124 = scmp.ne.s32.totalorder %s115, %s116
      %p125 = scmp.eq.s32.totalorder %s21, 0
      %p126 = por %p124, %p125
      %p127 = scmp.ne.s32.totalorder %s115, %s116
      %p128 = scmp.eq.s32.totalorder %s22, 1
      %p129 = por %p127, %p128
      %p131 = scmp.ne.s32.totalorder %s116, %s130
      %p132 = scmp.eq.s32.totalorder %s22, 0
      %p133 = por %p131, %p132
      %s134 = ssub.s32 %s16, %s23
      %p135 = scmp.eq.s32.totalorder %s134, 0
      %s137 = sadd.s32 %s136, 1
      %s138 = scalar_select %p135, %s136, %s137
      %p141 = pneg %p135
      %p142 = scmp.eq.s32.totalorder %s16, 1
      %p143 = por %p141, %p142
      %p144 = scmp.ne.s32.totalorder %s136, %s139
      %p145 = scmp.eq.s32.totalorder %s16, 0
      %p146 = por %p144, %p145
      %p147 = scmp.ne.s32.totalorder %s136, %s139
      %p148 = scmp.eq.s32.totalorder %s21, 1
      %p149 = por %p147, %p148
      %p150 = scmp.ne.s32.totalorder %s139, %s140
      %p151 = scmp.eq.s32.totalorder %s21, 0
      %p152 = por %p150, %p151
      %p153 = scmp.ne.s32.totalorder %s139, %s140
      %p154 = scmp.eq.s32.totalorder %s22, 1
      %p155 = por %p153, %p154
      %p157 = scmp.ne.s32.totalorder %s140, %s156
      %p158 = scmp.eq.s32.totalorder %s22, 0
      %p159 = por %p157, %p158
      %s160 = ssub.s32 %s16, %s23
      %p161 = scmp.eq.s32.totalorder %s160, 0
      %s163 = sadd.s32 %s162, 1
      %s164 = scalar_select %p161, %s162, %s163
      %p167 = pneg %p161
      %p168 = scmp.eq.s32.totalorder %s16, 1
      %p169 = por %p167, %p168
      %p170 = scmp.ne.s32.totalorder %s162, %s165
      %p171 = scmp.eq.s32.totalorder %s16, 0
      %p172 = por %p170, %p171
      %p173 = scmp.ne.s32.totalorder %s162, %s165
      %p174 = scmp.eq.s32.totalorder %s21, 1
      %p175 = por %p173, %p174
      %p176 = scmp.ne.s32.totalorder %s165, %s166
      %p177 = scmp.eq.s32.totalorder %s21, 0
      %p178 = por %p176, %p177
      %p179 = scmp.ne.s32.totalorder %s165, %s166
      %p180 = scmp.eq.s32.totalorder %s22, 1
      %p181 = por %p179, %p180
      %p183 = scmp.ne.s32.totalorder %s166, %s182
      %p184 = scmp.eq.s32.totalorder %s22, 0
      %p185 = por %p183, %p184
      %p186 = scmp.le.s32.totalorder 1, %s16
      %p187 = scmp.lt.s32.totalorder %s16, 3
      %p188 = pnand %p186, %p187
      %p189 = pneg %p188
      // Predicated region
      $region9: #{tpu_custom_call.1} parent=5 // pred_check
        _
      $region10: #{tpu_custom_call.1} parent=5 // pred_check_branch
        %191 = sbr.rel (%p188) target = $region12
      $region11: #{tpu_custom_call.1} parent=5 // pred_region
        %s192 = ssub.s32 %s16, 1
        // Predicated region
        $region13: #{tpu_custom_call.1} parent=11 // pred_check
          %p193 = pneg %p63
        $region14: #{tpu_custom_call.1} parent=11 // pred_check_branch
          %195 = sbr.rel (%p193) target = $region16
        $region15: #{tpu_custom_call.1} parent=11 // pred_region
          _
        $region16: #{tpu_custom_call.1} parent=11 // pred_fallthru
          _
        // Predicated region
        $region17: #{tpu_custom_call.1} parent=11 // pred_check
          %p196 = pneg %p84
        $region18: #{tpu_custom_call.1} parent=11 // pred_check_branch
          %198 = sbr.rel (%p196) target = $region20
        $region19: #{tpu_custom_call.1} parent=11 // pred_region
          _
        $region20: #{tpu_custom_call.1} parent=11 // pred_fallthru
          _
        // Predicated region
        $region21: #{tpu_custom_call.1} parent=11 // pred_check
          %p199 = pneg %p105
        $region22: #{tpu_custom_call.1} parent=11 // pred_check_branch
          %201 = sbr.rel (%p199) target = $region24
        $region23: #{tpu_custom_call.1} parent=11 // pred_region
          _
        $region24: #{tpu_custom_call.1} parent=11 // pred_fallthru
          _
        // Predicated region
        $region25: #{tpu_custom_call.1} parent=11 // pred_check
          %p202 = pneg %p126
        $region26: #{tpu_custom_call.1} parent=11 // pred_check_branch
          %204 = sbr.rel (%p202) target = $region28
        $region27: #{tpu_custom_call.1} parent=11 // pred_region
          _
        $region28: #{tpu_custom_call.1} parent=11 // pred_fallthru
          _
      $region12: #{tpu_custom_call.1} parent=5 // pred_fallthru
        _
      %p205 = scmp.lt.s32.totalorder %s16, 2
      // Predicated region
      $region29: #{tpu_custom_call.1} parent=5 // pred_check
        %p206 = pneg %p205
      $region30: #{tpu_custom_call.1} parent=5 // pred_check_branch
        %208 = sbr.rel (%p206) target = $region32
      $region31: #{tpu_custom_call.1} parent=5 // pred_region
        // Predicated region
        $region33: #{tpu_custom_call.1} parent=31 // pred_check
          %p209 = pneg %p36
        $region34: #{tpu_custom_call.1} parent=31 // pred_check_branch
          %211 = sbr.rel (%p209) target = $region36
        $region35: #{tpu_custom_call.1} parent=31 // pred_region
          %p212 = scmp.lt.s32.totalorder %s16, 1
          %s213 = scalar_select %p212, %s16, 1
          %s214 = smul.addr %s213, 32
          %s215 = smul.addr %s214, 8
          %s216 = scalar_lea.vmem %s0, %s215
        $region36: #{tpu_custom_call.1} parent=31 // pred_fallthru
          _
      $region32: #{tpu_custom_call.1} parent=5 // pred_fallthru
        _
      %p217 = scmp.le.s32.totalorder 1, %s16
      %p218 = scmp.lt.s32.totalorder %s16, 3
      %p219 = pnand %p217, %p218
      %p220 = pneg %p219
      // Predicated region
      $region37: #{tpu_custom_call.1} parent=5 // pred_check
        _
      $region38: #{tpu_custom_call.1} parent=5 // pred_check_branch
        %222 = sbr.rel (%p219) target = $region40
      $region39: #{tpu_custom_call.1} parent=5 // pred_region
        %s223 = ssub.s32 %s16, 1
        %p224 = scmp.lt.s32.totalorder %s21, 1
        %s225 = scalar_select %p224, %s21, 1
        %s226 = smul.addr %s225, 32
        %s227 = smul.addr %s226, 8
        %s228 = scalar_lea.vmem %s0, %s227
        %p229 = pneg %p42
        %p230 = pneg %p39
        %p231 = pneg %p63
        %p232 = pneg %p60
        %p233 = pneg %p84
        %p234 = pneg %p81
        %p235 = pneg %p105
        %p236 = pneg %p102
        %p237 = pneg %p126
        %p238 = pneg %p123
        %p239 = pneg %p152
        %p240 = pneg %p149
        %p241 = scmp.lt.s32.totalorder %s21, 1
        %s242 = scalar_select %p241, %s21, 1
        %s243 = smul.addr %s242, 32
        %s244 = smul.addr %s243, 8
        %s245 = scalar_lea.vmem %s5, %s244
        %p246 = pneg %p178
        %p247 = pneg %p175
        %s248 = sand.u32 %s165, 1
        %s249 = scalar_lea.sflag [#allocation5], %s248
        %s250 = sand.u32 %s165, 1
        %s251 = smul.addr %s250, 2
        %s252 = scalar_lea.vmem [#allocation4], %s251
        %p253 = scmp.lt.s32.totalorder %s21, 1
        %s254 = scalar_select %p253, %s21, 1
        %s255 = smul.addr %s254, 32
        %s256 = smul.addr %s255, 8
        %s257 = scalar_lea.vmem %s0, %s256
        %p258 = scmp.lt.s32.totalorder %s21, 1
        %s259 = scalar_select %p258, %s21, 1
        %s260 = smul.addr %s259, 32
        %s261 = smul.addr %s260, 8
        %s262 = scalar_lea.vmem %s5, %s261
        %vm264 = vcmask 64512
        %265 = vst.msk [vmem:[#allocation2] sm:$0xff] %vm264, 0.0
        %266 = vst.msk [vmem:[#allocation2 + $0x8] sm:$0xff] %vm264, 0.0
        %vm267 = vcmask 58368
        %268 = vst.msk [vmem:[#allocation2 + $0x10] sm:$0x3] %vm267, 0.0
        %s269 = scalar_lea.vmem [#allocation2], 408
        %270 = vst.msk [vmem:[%s269] sm:$0xff] %vm264, 0.0
        %271 = vst.msk [vmem:[%s269 + $0x8] sm:$0xff] %vm264, 0.0
        %272 = vst.msk [vmem:[%s269 + $0x10] sm:$0x3] %vm267, 0.0
        %vm273 = vcmask 57344
        %274 = vst.msk [vmem:[#allocation2] sm:$0x1] %vm273, 0.0
        %275 = vst.msk [vmem:[#allocation2 + $0x18] sm:$0x1] %vm273, 0.0
        %276 = vst.msk [vmem:[#allocation2 + $0x30] sm:$0x1] %vm273, 0.0
        %277 = vst.msk [vmem:[#allocation2 + $0x48] sm:$0x1] %vm273, 0.0
        %278 = vst.msk [vmem:[#allocation2 + $0x60] sm:$0x1] %vm273, 0.0
        %279 = vst.msk [vmem:[#allocation2 + $0x78] sm:$0x1] %vm273, 0.0
        %280 = vst.msk [vmem:[#allocation2 + $0x90] sm:$0x1] %vm273, 0.0
        %281 = vst.msk [vmem:[#allocation2 + $0xa8] sm:$0x1] %vm273, 0.0
        %282 = vst.msk [vmem:[#allocation2 + $0xc0] sm:$0x1] %vm273, 0.0
        %283 = vst.msk [vmem:[#allocation2 + $0xd8] sm:$0x1] %vm273, 0.0
        %284 = vst.msk [vmem:[#allocation2 + $0xf0] sm:$0x1] %vm273, 0.0
        %285 = vst.msk [vmem:[#allocation2 + $0x108] sm:$0x1] %vm273, 0.0
        %286 = vst.msk [vmem:[#allocation2 + $0x120] sm:$0x1] %vm273, 0.0
        %287 = vst.msk [vmem:[#allocation2 + $0x138] sm:$0x1] %vm273, 0.0
        %288 = vst.msk [vmem:[#allocation2 + $0x150] sm:$0x1] %vm273, 0.0
        %289 = vst.msk [vmem:[#allocation2 + $0x168] sm:$0x1] %vm273, 0.0
        %290 = vst.msk [vmem:[#allocation2 + $0x180] sm:$0x1] %vm273, 0.0
        %291 = vst.msk [vmem:[#allocation2 + $0x198] sm:$0x1] %vm273, 0.0
        %292 = vst.msk [vmem:[#allocation2 + $0x11] sm:$0x1] %vm273, 0.0
        %293 = vst.msk [vmem:[#allocation2 + $0x29] sm:$0x1] %vm273, 0.0
        %294 = vst.msk [vmem:[#allocation2 + $0x41] sm:$0x1] %vm273, 0.0
        %295 = vst.msk [vmem:[#allocation2 + $0x59] sm:$0x1] %vm273, 0.0
        %296 = vst.msk [vmem:[#allocation2 + $0x71] sm:$0x1] %vm273, 0.0
        %297 = vst.msk [vmem:[#allocation2 + $0x89] sm:$0x1] %vm273, 0.0
        %298 = vst.msk [vmem:[#allocation2 + $0xa1] sm:$0x1] %vm273, 0.0
        %299 = vst.msk [vmem:[#allocation2 + $0xb9] sm:$0x1] %vm273, 0.0
        %300 = vst.msk [vmem:[#allocation2 + $0xd1] sm:$0x1] %vm273, 0.0
        %301 = vst.msk [vmem:[#allocation2 + $0xe9] sm:$0x1] %vm273, 0.0
        %302 = vst.msk [vmem:[#allocation2 + $0x101] sm:$0x1] %vm273, 0.0
        %303 = vst.msk [vmem:[#allocation2 + $0x119] sm:$0x1] %vm273, 0.0
        %304 = vst.msk [vmem:[#allocation2 + $0x131] sm:$0x1] %vm273, 0.0
        %305 = vst.msk [vmem:[#allocation2 + $0x149] sm:$0x1] %vm273, 0.0
        %306 = vst.msk [vmem:[#allocation2 + $0x161] sm:$0x1] %vm273, 0.0
        %307 = vst.msk [vmem:[#allocation2 + $0x179] sm:$0x1] %vm273, 0.0
        %308 = vst.msk [vmem:[#allocation2 + $0x191] sm:$0x1] %vm273, 0.0
        %309 = vst.msk [vmem:[#allocation2 + $0x1a9] sm:$0x1] %vm273, 0.0
        %v310 = vld [vmem:[%s257] sm:$0xff]
        %v311 = vld [vmem:[%s257 + $0x8] sm:$0xff]
        %v312 = vld [vmem:[%s257 + $0x10] sm:$0xff]
        %v313 = vld [vmem:[%s257 + $0x18] sm:$0xff]
        %v314 = vld [vmem:[%s257 + $0x20] sm:$0xff]
        %v315 = vld [vmem:[%s257 + $0x28] sm:$0xff]
        %v316 = vld [vmem:[%s257 + $0x30] sm:$0xff]
        %v317 = vld [vmem:[%s257 + $0x38] sm:$0xff]
        %v318 = vld [vmem:[%s257 + $0x40] sm:$0xff]
        %v319 = vld [vmem:[%s257 + $0x48] sm:$0xff]
        %v320 = vld [vmem:[%s257 + $0x50] sm:$0xff]
        %v321 = vld [vmem:[%s257 + $0x58] sm:$0xff]
        %v322 = vld [vmem:[%s257 + $0x60] sm:$0xff]
        %v323 = vld [vmem:[%s257 + $0x68] sm:$0xff]
        %v324 = vld [vmem:[%s257 + $0x70] sm:$0xff]
        %v325 = vld [vmem:[%s257 + $0x78] sm:$0xff]
        %v326 = vld [vmem:[%s257 + $0x80] sm:$0xff]
        %v327 = vld [vmem:[%s257 + $0x88] sm:$0xff]
        %v328 = vld [vmem:[%s257 + $0x90] sm:$0xff]
        %v329 = vld [vmem:[%s257 + $0x98] sm:$0xff]
        %v330 = vld [vmem:[%s257 + $0xa0] sm:$0xff]
        %v331 = vld [vmem:[%s257 + $0xa8] sm:$0xff]
        %v332 = vld [vmem:[%s257 + $0xb0] sm:$0xff]
        %v333 = vld [vmem:[%s257 + $0xb8] sm:$0xff]
        %v334 = vld [vmem:[%s257 + $0xc0] sm:$0xff]
        %v335 = vld [vmem:[%s257 + $0xc8] sm:$0xff]
        %v336 = vld [vmem:[%s257 + $0xd0] sm:$0xff]
        %v337 = vld [vmem:[%s257 + $0xd8] sm:$0xff]
        %v338 = vld [vmem:[%s257 + $0xe0] sm:$0xff]
        %v339 = vld [vmem:[%s257 + $0xe8] sm:$0xff]
        %v340 = vld [vmem:[%s257 + $0xf0] sm:$0xff]
        %v341 = vld [vmem:[%s257 + $0xf8] sm:$0xff]
        %s342 = scalar_lea.vmem [#allocation2], 24
        %343 = vst.msk [vmem:[%s342 + $0x1] sm:$0xff] %vm264, %v310
        %344 = vst.msk [vmem:[%s342 + $0x9] sm:$0xff] %vm264, %v311
        %345 = vst.msk [vmem:[%s342 + $0x19] sm:$0xff] %vm264, %v312
        %346 = vst.msk [vmem:[%s342 + $0x21] sm:$0xff] %vm264, %v313
        %347 = vst.msk [vmem:[%s342 + $0x31] sm:$0xff] %vm264, %v314
        %348 = vst.msk [vmem:[%s342 + $0x39] sm:$0xff] %vm264, %v315
        %349 = vst.msk [vmem:[%s342 + $0x49] sm:$0xff] %vm264, %v316
        %350 = vst.msk [vmem:[%s342 + $0x51] sm:$0xff] %vm264, %v317
        %351 = vst.msk [vmem:[%s342 + $0x61] sm:$0xff] %vm264, %v318
        %352 = vst.msk [vmem:[%s342 + $0x69] sm:$0xff] %vm264, %v319
        %353 = vst.msk [vmem:[%s342 + $0x79] sm:$0xff] %vm264, %v320
        %354 = vst.msk [vmem:[%s342 + $0x81] sm:$0xff] %vm264, %v321
        %355 = vst.msk [vmem:[%s342 + $0x91] sm:$0xff] %vm264, %v322
        %356 = vst.msk [vmem:[%s342 + $0x99] sm:$0xff] %vm264, %v323
        %357 = vst.msk [vmem:[%s342 + $0xa9] sm:$0xff] %vm264, %v324
        %358 = vst.msk [vmem:[%s342 + $0xb1] sm:$0xff] %vm264, %v325
        %359 = vst.msk [vmem:[%s342 + $0xc1] sm:$0xff] %vm264, %v326
        %360 = vst.msk [vmem:[%s342 + $0xc9] sm:$0xff] %vm264, %v327
        %361 = vst.msk [vmem:[%s342 + $0xd9] sm:$0xff] %vm264, %v328
        %362 = vst.msk [vmem:[%s342 + $0xe1] sm:$0xff] %vm264, %v329
        %363 = vst.msk [vmem:[%s342 + $0xf1] sm:$0xff] %vm264, %v330
        %364 = vst.msk [vmem:[%s342 + $0xf9] sm:$0xff] %vm264, %v331
        %365 = vst.msk [vmem:[%s342 + $0x109] sm:$0xff] %vm264, %v332
        %366 = vst.msk [vmem:[%s342 + $0x111] sm:$0xff] %vm264, %v333
        %367 = vst.msk [vmem:[%s342 + $0x121] sm:$0xff] %vm264, %v334
        %368 = vst.msk [vmem:[%s342 + $0x129] sm:$0xff] %vm264, %v335
        %369 = vst.msk [vmem:[%s342 + $0x139] sm:$0xff] %vm264, %v336
        %370 = vst.msk [vmem:[%s342 + $0x141] sm:$0xff] %vm264, %v337
        %371 = vst.msk [vmem:[%s342 + $0x151] sm:$0xff] %vm264, %v338
        %372 = vst.msk [vmem:[%s342 + $0x159] sm:$0xff] %vm264, %v339
        %373 = vst.msk [vmem:[%s342 + $0x169] sm:$0xff] %vm264, %v340
        %374 = vst.msk [vmem:[%s342 + $0x171] sm:$0xff] %vm264, %v341
        %v375 = vld [vmem:[%s1] sm:$0xf]
        %v376 = vld [vmem:[%s1 + $0x4] sm:$0xf]
        %v377 = vld [vmem:[%s1 + $0x8] sm:$0xf]
        %v378 = vld [vmem:[%s1 + $0xc] sm:$0xf]
        %v379 = vld [vmem:[%s1 + $0x10] sm:$0xf]
        %v380 = vld [vmem:[%s1 + $0x14] sm:$0xf]
        %v381 = vld [vmem:[%s1 + $0x18] sm:$0xf]
        %v382 = vld [vmem:[%s1 + $0x1c] sm:$0xf]
        %v383 = vld [vmem:[%s1 + $0x20] sm:$0xf]
        %v384 = vld [vmem:[%s2] sm:$0x1]
        %v385 = vld [vmem:[#allocation2] sm:$0xff]
        %v386 = vld [vmem:[#allocation2 + $0x8] sm:$0xff]
        %v387 = vld [vmem:[#allocation2 + $0x18] sm:$0xff]
        %v388 = vld [vmem:[#allocation2 + $0x20] sm:$0xff]
        %v389 = vld [vmem:[#allocation2 + $0x30] sm:$0xff]
        %v390 = vld [vmem:[#allocation2 + $0x38] sm:$0xff]
        %v391 = vld [vmem:[#allocation2 + $0x48] sm:$0xff]
        %v392 = vld [vmem:[#allocation2 + $0x50] sm:$0xff]
        %v393 = vld [vmem:[#allocation2 + $0x60] sm:$0xff]
        %v394 = vld [vmem:[#allocation2 + $0x68] sm:$0xff]
        %v395 = vld [vmem:[#allocation2 + $0x78] sm:$0xff]
        %v396 = vld [vmem:[#allocation2 + $0x80] sm:$0xff]
        %v397 = vld [vmem:[#allocation2 + $0x90] sm:$0xff]
        %v398 = vld [vmem:[#allocation2 + $0x98] sm:$0xff]
        %v399 = vld [vmem:[#allocation2 + $0xa8] sm:$0xff]
        %v400 = vld [vmem:[#allocation2 + $0xb0] sm:$0xff]
        %v401 = vld [vmem:[#allocation2 + $0xc0] sm:$0xff]
        %v402 = vld [vmem:[#allocation2 + $0xc8] sm:$0xff]
        %v403 = vld [vmem:[#allocation2 + $0xd8] sm:$0xff]
        %v404 = vld [vmem:[#allocation2 + $0xe0] sm:$0xff]
        %v405 = vld [vmem:[#allocation2 + $0xf0] sm:$0xff]
        %v406 = vld [vmem:[#allocation2 + $0xf8] sm:$0xff]
        %v407 = vld [vmem:[#allocation2 + $0x108] sm:$0xff]
        %v408 = vld [vmem:[#allocation2 + $0x110] sm:$0xff]
        %v409 = vld [vmem:[#allocation2 + $0x120] sm:$0xff]
        %v410 = vld [vmem:[#allocation2 + $0x128] sm:$0xff]
        %v411 = vld [vmem:[#allocation2 + $0x138] sm:$0xff]
        %v412 = vld [vmem:[#allocation2 + $0x140] sm:$0xff]
        %v413 = vld [vmem:[#allocation2 + $0x150] sm:$0xff]
        %v414 = vld [vmem:[#allocation2 + $0x158] sm:$0xff]
        %v415 = vld [vmem:[#allocation2 + $0x168] sm:$0xff]
        %v416 = vld [vmem:[#allocation2 + $0x170] sm:$0xff]
        %417 = vst.msk [vmem:[#allocation3] sm:$0xff] %vm264, %v385
        %418 = vst.msk [vmem:[#allocation3 + $0x8] sm:$0xff] %vm264, %v386
        %419 = vst.msk [vmem:[#allocation3 + $0x10] sm:$0xff] %vm264, %v387
        %420 = vst.msk [vmem:[#allocation3 + $0x18] sm:$0xff] %vm264, %v388
        %421 = vst.msk [vmem:[#allocation3 + $0x20] sm:$0xff] %vm264, %v389
        %422 = vst.msk [vmem:[#allocation3 + $0x28] sm:$0xff] %vm264, %v390
        %423 = vst.msk [vmem:[#allocation3 + $0x30] sm:$0xff] %vm264, %v391
        %424 = vst.msk [vmem:[#allocation3 + $0x38] sm:$0xff] %vm264, %v392
        %425 = vst.msk [vmem:[#allocation3 + $0x40] sm:$0xff] %vm264, %v393
        %426 = vst.msk [vmem:[#allocation3 + $0x48] sm:$0xff] %vm264, %v394
        %427 = vst.msk [vmem:[#allocation3 + $0x50] sm:$0xff] %vm264, %v395
        %428 = vst.msk [vmem:[#allocation3 + $0x58] sm:$0xff] %vm264, %v396
        %429 = vst.msk [vmem:[#allocation3 + $0x60] sm:$0xff] %vm264, %v397
        %430 = vst.msk [vmem:[#allocation3 + $0x68] sm:$0xff] %vm264, %v398
        %431 = vst.msk [vmem:[#allocation3 + $0x70] sm:$0xff] %vm264, %v399
        %432 = vst.msk [vmem:[#allocation3 + $0x78] sm:$0xff] %vm264, %v400
        %433 = vst.msk [vmem:[#allocation3 + $0x80] sm:$0xff] %vm264, %v401
        %434 = vst.msk [vmem:[#allocation3 + $0x88] sm:$0xff] %vm264, %v402
        %435 = vst.msk [vmem:[#allocation3 + $0x90] sm:$0xff] %vm264, %v403
        %436 = vst.msk [vmem:[#allocation3 + $0x98] sm:$0xff] %vm264, %v404
        %437 = vst.msk [vmem:[#allocation3 + $0xa0] sm:$0xff] %vm264, %v405
        %438 = vst.msk [vmem:[#allocation3 + $0xa8] sm:$0xff] %vm264, %v406
        %439 = vst.msk [vmem:[#allocation3 + $0xb0] sm:$0xff] %vm264, %v407
        %440 = vst.msk [vmem:[#allocation3 + $0xb8] sm:$0xff] %vm264, %v408
        %441 = vst.msk [vmem:[#allocation3 + $0xc0] sm:$0xff] %vm264, %v409
        %442 = vst.msk [vmem:[#allocation3 + $0xc8] sm:$0xff] %vm264, %v410
        %443 = vst.msk [vmem:[#allocation3 + $0xd0] sm:$0xff] %vm264, %v411
        %444 = vst.msk [vmem:[#allocation3 + $0xd8] sm:$0xff] %vm264, %v412
        %445 = vst.msk [vmem:[#allocation3 + $0xe0] sm:$0xff] %vm264, %v413
        %446 = vst.msk [vmem:[#allocation3 + $0xe8] sm:$0xff] %vm264, %v414
        %447 = vst.msk [vmem:[#allocation3 + $0xf0] sm:$0xff] %vm264, %v415
        %448 = vst.msk [vmem:[#allocation3 + $0xf8] sm:$0xff] %vm264, %v416
        %v449 = vld [vmem:[#allocation2 + $0x1] sm:$0xff]
        %v450 = vld [vmem:[#allocation2 + $0x9] sm:$0xff]
        %v451 = vld [vmem:[#allocation2 + $0x19] sm:$0xff]
        %v452 = vld [vmem:[#allocation2 + $0x21] sm:$0xff]
        %v453 = vld [vmem:[#allocation2 + $0x31] sm:$0xff]
        %v454 = vld [vmem:[#allocation2 + $0x39] sm:$0xff]
        %v455 = vld [vmem:[#allocation2 + $0x49] sm:$0xff]
        %v456 = vld [vmem:[#allocation2 + $0x51] sm:$0xff]
        %v457 = vld [vmem:[#allocation2 + $0x61] sm:$0xff]
        %v458 = vld [vmem:[#allocation2 + $0x69] sm:$0xff]
        %v459 = vld [vmem:[#allocation2 + $0x79] sm:$0xff]
        %v460 = vld [vmem:[#allocation2 + $0x81] sm:$0xff]
        %v461 = vld [vmem:[#allocation2 + $0x91] sm:$0xff]
        %v462 = vld [vmem:[#allocation2 + $0x99] sm:$0xff]
        %v463 = vld [vmem:[#allocation2 + $0xa9] sm:$0xff]
        %v464 = vld [vmem:[#allocation2 + $0xb1] sm:$0xff]
        %v465 = vld [vmem:[#allocation2 + $0xc1] sm:$0xff]
        %v466 = vld [vmem:[#allocation2 + $0xc9] sm:$0xff]
        %v467 = vld [vmem:[#allocation2 + $0xd9] sm:$0xff]
        %v468 = vld [vmem:[#allocation2 + $0xe1] sm:$0xff]
        %v469 = vld [vmem:[#allocation2 + $0xf1] sm:$0xff]
        %v470 = vld [vmem:[#allocation2 + $0xf9] sm:$0xff]
        %v471 = vld [vmem:[#allocation2 + $0x109] sm:$0xff]
        %v472 = vld [vmem:[#allocation2 + $0x111] sm:$0xff]
        %v473 = vld [vmem:[#allocation2 + $0x121] sm:$0xff]
        %v474 = vld [vmem:[#allocation2 + $0x129] sm:$0xff]
        %v475 = vld [vmem:[#allocation2 + $0x139] sm:$0xff]
        %v476 = vld [vmem:[#allocation2 + $0x141] sm:$0xff]
        %v477 = vld [vmem:[#allocation2 + $0x151] sm:$0xff]
        %v478 = vld [vmem:[#allocation2 + $0x159] sm:$0xff]
        %v479 = vld [vmem:[#allocation2 + $0x169] sm:$0xff]
        %v480 = vld [vmem:[#allocation2 + $0x171] sm:$0xff]
        %513 = vrot.lane.b32.xlu0 %v449, 8
        %v514 = vpop.permute.xlu0 %513
        %515 = vrot.lane.b32.xlu0 %v450, 8
        %v516 = vpop.permute.xlu0 %515
        %517 = vrot.lane.b32.xlu0 %v451, 8
        %v518 = vpop.permute.xlu0 %517
        %519 = vrot.lane.b32.xlu0 %v452, 8
        %v520 = vpop.permute.xlu0 %519
        %521 = vrot.lane.b32.xlu0 %v453, 8
        %v522 = vpop.permute.xlu0 %521
        %523 = vrot.lane.b32.xlu0 %v454, 8
        %v524 = vpop.permute.xlu0 %523
        %525 = vrot.lane.b32.xlu0 %v455, 8
        %v526 = vpop.permute.xlu0 %525
        %527 = vrot.lane.b32.xlu0 %v456, 8
        %v528 = vpop.permute.xlu0 %527
        %529 = vrot.lane.b32.xlu0 %v457, 8
        %v530 = vpop.permute.xlu0 %529
        %531 = vrot.lane.b32.xlu0 %v458, 8
        %v532 = vpop.permute.xlu0 %531
        %533 = vrot.lane.b32.xlu0 %v459, 8
        %v534 = vpop.permute.xlu0 %533
        %535 = vrot.lane.b32.xlu0 %v460, 8
        %v536 = vpop.permute.xlu0 %535
        %537 = vrot.lane.b32.xlu0 %v461, 8
        %v538 = vpop.permute.xlu0 %537
        %539 = vrot.lane.b32.xlu0 %v462, 8
        %v540 = vpop.permute.xlu0 %539
        %541 = vrot.lane.b32.xlu0 %v463, 8
        %v542 = vpop.permute.xlu0 %541
        %543 = vrot.lane.b32.xlu0 %v464, 8
        %v544 = vpop.permute.xlu0 %543
        %545 = vrot.lane.b32.xlu0 %v465, 8
        %v546 = vpop.permute.xlu0 %545
        %547 = vrot.lane.b32.xlu0 %v466, 8
        %v548 = vpop.permute.xlu0 %547
        %549 = vrot.lane.b32.xlu0 %v467, 8
        %v550 = vpop.permute.xlu0 %549
        %551 = vrot.lane.b32.xlu0 %v468, 8
        %v552 = vpop.permute.xlu0 %551
        %553 = vrot.lane.b32.xlu0 %v469, 8
        %v554 = vpop.permute.xlu0 %553
        %555 = vrot.lane.b32.xlu0 %v470, 8
        %v556 = vpop.permute.xlu0 %555
        %557 = vrot.lane.b32.xlu0 %v471, 8
        %v558 = vpop.permute.xlu0 %557
        %559 = vrot.lane.b32.xlu0 %v472, 8
        %v560 = vpop.permute.xlu0 %559
        %561 = vrot.lane.b32.xlu0 %v473, 8
        %v562 = vpop.permute.xlu0 %561
        %563 = vrot.lane.b32.xlu0 %v474, 8
        %v564 = vpop.permute.xlu0 %563
        %565 = vrot.lane.b32.xlu0 %v475, 8
        %v566 = vpop.permute.xlu0 %565
        %567 = vrot.lane.b32.xlu0 %v476, 8
        %v568 = vpop.permute.xlu0 %567
        %569 = vrot.lane.b32.xlu0 %v477, 8
        %v570 = vpop.permute.xlu0 %569
        %571 = vrot.lane.b32.xlu0 %v478, 8
        %v572 = vpop.permute.xlu0 %571
        %573 = vrot.lane.b32.xlu0 %v479, 8
        %v574 = vpop.permute.xlu0 %573
        %575 = vrot.lane.b32.xlu0 %v480, 8
        %v576 = vpop.permute.xlu0 %575
        %vm609 = vcmask 130112
        %610 = vst.msk [vmem:[#allocation3] sm:$0xff] %vm609, %v514
        %611 = vst.msk [vmem:[#allocation3 + $0x8] sm:$0xff] %vm609, %v516
        %612 = vst.msk [vmem:[#allocation3 + $0x10] sm:$0xff] %vm609, %v518
        %613 = vst.msk [vmem:[#allocation3 + $0x18] sm:$0xff] %vm609, %v520
        %614 = vst.msk [vmem:[#allocation3 + $0x20] sm:$0xff] %vm609, %v522
        %615 = vst.msk [vmem:[#allocation3 + $0x28] sm:$0xff] %vm609, %v524
        %616 = vst.msk [vmem:[#allocation3 + $0x30] sm:$0xff] %vm609, %v526
        %617 = vst.msk [vmem:[#allocation3 + $0x38] sm:$0xff] %vm609, %v528
        %618 = vst.msk [vmem:[#allocation3 + $0x40] sm:$0xff] %vm609, %v530
        %619 = vst.msk [vmem:[#allocation3 + $0x48] sm:$0xff] %vm609, %v532
        %620 = vst.msk [vmem:[#allocation3 + $0x50] sm:$0xff] %vm609, %v534
        %621 = vst.msk [vmem:[#allocation3 + $0x58] sm:$0xff] %vm609, %v536
        %622 = vst.msk [vmem:[#allocation3 + $0x60] sm:$0xff] %vm609, %v538
        %623 = vst.msk [vmem:[#allocation3 + $0x68] sm:$0xff] %vm609, %v540
        %624 = vst.msk [vmem:[#allocation3 + $0x70] sm:$0xff] %vm609, %v542
        %625 = vst.msk [vmem:[#allocation3 + $0x78] sm:$0xff] %vm609, %v544
        %626 = vst.msk [vmem:[#allocation3 + $0x80] sm:$0xff] %vm609, %v546
        %627 = vst.msk [vmem:[#allocation3 + $0x88] sm:$0xff] %vm609, %v548
        %628 = vst.msk [vmem:[#allocation3 + $0x90] sm:$0xff] %vm609, %v550
        %629 = vst.msk [vmem:[#allocation3 + $0x98] sm:$0xff] %vm609, %v552
        %630 = vst.msk [vmem:[#allocation3 + $0xa0] sm:$0xff] %vm609, %v554
        %631 = vst.msk [vmem:[#allocation3 + $0xa8] sm:$0xff] %vm609, %v556
        %632 = vst.msk [vmem:[#allocation3 + $0xb0] sm:$0xff] %vm609, %v558
        %633 = vst.msk [vmem:[#allocation3 + $0xb8] sm:$0xff] %vm609, %v560
        %634 = vst.msk [vmem:[#allocation3 + $0xc0] sm:$0xff] %vm609, %v562
        %635 = vst.msk [vmem:[#allocation3 + $0xc8] sm:$0xff] %vm609, %v564
        %636 = vst.msk [vmem:[#allocation3 + $0xd0] sm:$0xff] %vm609, %v566
        %637 = vst.msk [vmem:[#allocation3 + $0xd8] sm:$0xff] %vm609, %v568
        %638 = vst.msk [vmem:[#allocation3 + $0xe0] sm:$0xff] %vm609, %v570
        %639 = vst.msk [vmem:[#allocation3 + $0xe8] sm:$0xff] %vm609, %v572
        %640 = vst.msk [vmem:[#allocation3 + $0xf0] sm:$0xff] %vm609, %v574
        %641 = vst.msk [vmem:[#allocation3 + $0xf8] sm:$0xff] %vm609, %v576
        %v642 = vld [vmem:[#allocation2 + $0x2] sm:$0xff]
        %v643 = vld [vmem:[#allocation2 + $0xa] sm:$0xff]
        %v644 = vld [vmem:[#allocation2 + $0x1a] sm:$0xff]
        %v645 = vld [vmem:[#allocation2 + $0x22] sm:$0xff]
        %v646 = vld [vmem:[#allocation2 + $0x32] sm:$0xff]
        %v647 = vld [vmem:[#allocation2 + $0x3a] sm:$0xff]
        %v648 = vld [vmem:[#allocation2 + $0x4a] sm:$0xff]
        %v649 = vld [vmem:[#allocation2 + $0x52] sm:$0xff]
        %v650 = vld [vmem:[#allocation2 + $0x62] sm:$0xff]
        %v651 = vld [vmem:[#allocation2 + $0x6a] sm:$0xff]
        %v652 = vld [vmem:[#allocation2 + $0x7a] sm:$0xff]
        %v653 = vld [vmem:[#allocation2 + $0x82] sm:$0xff]
        %v654 = vld [vmem:[#allocation2 + $0x92] sm:$0xff]
        %v655 = vld [vmem:[#allocation2 + $0x9a] sm:$0xff]
        %v656 = vld [vmem:[#allocation2 + $0xaa] sm:$0xff]
        %v657 = vld [vmem:[#allocation2 + $0xb2] sm:$0xff]
        %v658 = vld [vmem:[#allocation2 + $0xc2] sm:$0xff]
        %v659 = vld [vmem:[#allocation2 + $0xca] sm:$0xff]
        %v660 = vld [vmem:[#allocation2 + $0xda] sm:$0xff]
        %v661 = vld [vmem:[#allocation2 + $0xe2] sm:$0xff]
        %v662 = vld [vmem:[#allocation2 + $0xf2] sm:$0xff]
        %v663 = vld [vmem:[#allocation2 + $0xfa] sm:$0xff]
        %v664 = vld [vmem:[#allocation2 + $0x10a] sm:$0xff]
        %v665 = vld [vmem:[#allocation2 + $0x112] sm:$0xff]
        %v666 = vld [vmem:[#allocation2 + $0x122] sm:$0xff]
        %v667 = vld [vmem:[#allocation2 + $0x12a] sm:$0xff]
        %v668 = vld [vmem:[#allocation2 + $0x13a] sm:$0xff]
        %v669 = vld [vmem:[#allocation2 + $0x142] sm:$0xff]
        %v670 = vld [vmem:[#allocation2 + $0x152] sm:$0xff]
        %v671 = vld [vmem:[#allocation2 + $0x15a] sm:$0xff]
        %v672 = vld [vmem:[#allocation2 + $0x16a] sm:$0xff]
        %v673 = vld [vmem:[#allocation2 + $0x172] sm:$0xff]
        %706 = vrot.lane.b32.xlu0 %v642, 16
        %v707 = vpop.permute.xlu0 %706
        %708 = vrot.lane.b32.xlu0 %v643, 16
        %v709 = vpop.permute.xlu0 %708
        %710 = vrot.lane.b32.xlu0 %v644, 16
        %v711 = vpop.permute.xlu0 %710
        %712 = vrot.lane.b32.xlu0 %v645, 16
        %v713 = vpop.permute.xlu0 %712
        %714 = vrot.lane.b32.xlu0 %v646, 16
        %v715 = vpop.permute.xlu0 %714
        %716 = vrot.lane.b32.xlu0 %v647, 16
        %v717 = vpop.permute.xlu0 %716
        %718 = vrot.lane.b32.xlu0 %v648, 16
        %v719 = vpop.permute.xlu0 %718
        %720 = vrot.lane.b32.xlu0 %v649, 16
        %v721 = vpop.permute.xlu0 %720
        %722 = vrot.lane.b32.xlu0 %v650, 16
        %v723 = vpop.permute.xlu0 %722
        %724 = vrot.lane.b32.xlu0 %v651, 16
        %v725 = vpop.permute.xlu0 %724
        %726 = vrot.lane.b32.xlu0 %v652, 16
        %v727 = vpop.permute.xlu0 %726
        %728 = vrot.lane.b32.xlu0 %v653, 16
        %v729 = vpop.permute.xlu0 %728
        %730 = vrot.lane.b32.xlu0 %v654, 16
        %v731 = vpop.permute.xlu0 %730
        %732 = vrot.lane.b32.xlu0 %v655, 16
        %v733 = vpop.permute.xlu0 %732
        %734 = vrot.lane.b32.xlu0 %v656, 16
        %v735 = vpop.permute.xlu0 %734
        %736 = vrot.lane.b32.xlu0 %v657, 16
        %v737 = vpop.permute.xlu0 %736
        %738 = vrot.lane.b32.xlu0 %v658, 16
        %v739 = vpop.permute.xlu0 %738
        %740 = vrot.lane.b32.xlu0 %v659, 16
        %v741 = vpop.permute.xlu0 %740
        %742 = vrot.lane.b32.xlu0 %v660, 16
        %v743 = vpop.permute.xlu0 %742
        %744 = vrot.lane.b32.xlu0 %v661, 16
        %v745 = vpop.permute.xlu0 %744
        %746 = vrot.lane.b32.xlu0 %v662, 16
        %v747 = vpop.permute.xlu0 %746
        %748 = vrot.lane.b32.xlu0 %v663, 16
        %v749 = vpop.permute.xlu0 %748
        %750 = vrot.lane.b32.xlu0 %v664, 16
        %v751 = vpop.permute.xlu0 %750
        %752 = vrot.lane.b32.xlu0 %v665, 16
        %v753 = vpop.permute.xlu0 %752
        %754 = vrot.lane.b32.xlu0 %v666, 16
        %v755 = vpop.permute.xlu0 %754
        %756 = vrot.lane.b32.xlu0 %v667, 16
        %v757 = vpop.permute.xlu0 %756
        %758 = vrot.lane.b32.xlu0 %v668, 16
        %v759 = vpop.permute.xlu0 %758
        %760 = vrot.lane.b32.xlu0 %v669, 16
        %v761 = vpop.permute.xlu0 %760
        %762 = vrot.lane.b32.xlu0 %v670, 16
        %v763 = vpop.permute.xlu0 %762
        %764 = vrot.lane.b32.xlu0 %v671, 16
        %v765 = vpop.permute.xlu0 %764
        %766 = vrot.lane.b32.xlu0 %v672, 16
        %v767 = vpop.permute.xlu0 %766
        %768 = vrot.lane.b32.xlu0 %v673, 16
        %v769 = vpop.permute.xlu0 %768
        %vm802 = vcmask 195712
        %803 = vst.msk [vmem:[#allocation3] sm:$0xff] %vm802, %v707
        %804 = vst.msk [vmem:[#allocation3 + $0x8] sm:$0xff] %vm802, %v709
        %805 = vst.msk [vmem:[#allocation3 + $0x10] sm:$0xff] %vm802, %v711
        %806 = vst.msk [vmem:[#allocation3 + $0x18] sm:$0xff] %vm802, %v713
        %807 = vst.msk [vmem:[#allocation3 + $0x20] sm:$0xff] %vm802, %v715
        %808 = vst.msk [vmem:[#allocation3 + $0x28] sm:$0xff] %vm802, %v717
        %809 = vst.msk [vmem:[#allocation3 + $0x30] sm:$0xff] %vm802, %v719
        %810 = vst.msk [vmem:[#allocation3 + $0x38] sm:$0xff] %vm802, %v721
        %811 = vst.msk [vmem:[#allocation3 + $0x40] sm:$0xff] %vm802, %v723
        %812 = vst.msk [vmem:[#allocation3 + $0x48] sm:$0xff] %vm802, %v725
        %813 = vst.msk [vmem:[#allocation3 + $0x50] sm:$0xff] %vm802, %v727
        %814 = vst.msk [vmem:[#allocation3 + $0x58] sm:$0xff] %vm802, %v729
        %815 = vst.msk [vmem:[#allocation3 + $0x60] sm:$0xff] %vm802, %v731
        %816 = vst.msk [vmem:[#allocation3 + $0x68] sm:$0xff] %vm802, %v733
        %817 = vst.msk [vmem:[#allocation3 + $0x70] sm:$0xff] %vm802, %v735
        %818 = vst.msk [vmem:[#allocation3 + $0x78] sm:$0xff] %vm802, %v737
        %819 = vst.msk [vmem:[#allocation3 + $0x80] sm:$0xff] %vm802, %v739
        %820 = vst.msk [vmem:[#allocation3 + $0x88] sm:$0xff] %vm802, %v741
        %821 = vst.msk [vmem:[#allocation3 + $0x90] sm:$0xff] %vm802, %v743
        %822 = vst.msk [vmem:[#allocation3 + $0x98] sm:$0xff] %vm802, %v745
        %823 = vst.msk [vmem:[#allocation3 + $0xa0] sm:$0xff] %vm802, %v747
        %824 = vst.msk [vmem:[#allocation3 + $0xa8] sm:$0xff] %vm802, %v749
        %825 = vst.msk [vmem:[#allocation3 + $0xb0] sm:$0xff] %vm802, %v751
        %826 = vst.msk [vmem:[#allocation3 + $0xb8] sm:$0xff] %vm802, %v753
        %827 = vst.msk [vmem:[#allocation3 + $0xc0] sm:$0xff] %vm802, %v755
        %828 = vst.msk [vmem:[#allocation3 + $0xc8] sm:$0xff] %vm802, %v757
        %829 = vst.msk [vmem:[#allocation3 + $0xd0] sm:$0xff] %vm802, %v759
        %830 = vst.msk [vmem:[#allocation3 + $0xd8] sm:$0xff] %vm802, %v761
        %831 = vst.msk [vmem:[#allocation3 + $0xe0] sm:$0xff] %vm802, %v763
        %832 = vst.msk [vmem:[#allocation3 + $0xe8] sm:$0xff] %vm802, %v765
        %833 = vst.msk [vmem:[#allocation3 + $0xf0] sm:$0xff] %vm802, %v767
        %834 = vst.msk [vmem:[#allocation3 + $0xf8] sm:$0xff] %vm802, %v769
        %v835 = vld [vmem:[%s342] sm:$0xff]
        %v836 = vld [vmem:[%s342 + $0x8] sm:$0xff]
        %v837 = vld [vmem:[%s342 + $0x18] sm:$0xff]
        %v838 = vld [vmem:[%s342 + $0x20] sm:$0xff]
        %v839 = vld [vmem:[%s342 + $0x30] sm:$0xff]
        %v840 = vld [vmem:[%s342 + $0x38] sm:$0xff]
        %v841 = vld [vmem:[%s342 + $0x48] sm:$0xff]
        %v842 = vld [vmem:[%s342 + $0x50] sm:$0xff]
        %v843 = vld [vmem:[%s342 + $0x60] sm:$0xff]
        %v844 = vld [vmem:[%s342 + $0x68] sm:$0xff]
        %v845 = vld [vmem:[%s342 + $0x78] sm:$0xff]
        %v846 = vld [vmem:[%s342 + $0x80] sm:$0xff]
        %v847 = vld [vmem:[%s342 + $0x90] sm:$0xff]
        %v848 = vld [vmem:[%s342 + $0x98] sm:$0xff]
        %v849 = vld [vmem:[%s342 + $0xa8] sm:$0xff]
        %v850 = vld [vmem:[%s342 + $0xb0] sm:$0xff]
        %v851 = vld [vmem:[%s342 + $0xc0] sm:$0xff]
        %v852 = vld [vmem:[%s342 + $0xc8] sm:$0xff]
        %v853 = vld [vmem:[%s342 + $0xd8] sm:$0xff]
        %v854 = vld [vmem:[%s342 + $0xe0] sm:$0xff]
        %v855 = vld [vmem:[%s342 + $0xf0] sm:$0xff]
        %v856 = vld [vmem:[%s342 + $0xf8] sm:$0xff]
        %v857 = vld [vmem:[%s342 + $0x108] sm:$0xff]
        %v858 = vld [vmem:[%s342 + $0x110] sm:$0xff]
        %v859 = vld [vmem:[%s342 + $0x120] sm:$0xff]
        %v860 = vld [vmem:[%s342 + $0x128] sm:$0xff]
        %v861 = vld [vmem:[%s342 + $0x138] sm:$0xff]
        %v862 = vld [vmem:[%s342 + $0x140] sm:$0xff]
        %v863 = vld [vmem:[%s342 + $0x150] sm:$0xff]
        %v864 = vld [vmem:[%s342 + $0x158] sm:$0xff]
        %v865 = vld [vmem:[%s342 + $0x168] sm:$0xff]
        %v866 = vld [vmem:[%s342 + $0x170] sm:$0xff]
        %899 = vrot.lane.b32.xlu0 %v835, 24
        %v900 = vpop.permute.xlu0 %899
        %901 = vrot.lane.b32.xlu0 %v836, 24
        %v902 = vpop.permute.xlu0 %901
        %903 = vrot.lane.b32.xlu0 %v837, 24
        %v904 = vpop.permute.xlu0 %903
        %905 = vrot.lane.b32.xlu0 %v838, 24
        %v906 = vpop.permute.xlu0 %905
        %907 = vrot.lane.b32.xlu0 %v839, 24
        %v908 = vpop.permute.xlu0 %907
        %909 = vrot.lane.b32.xlu0 %v840, 24
        %v910 = vpop.permute.xlu0 %909
        %911 = vrot.lane.b32.xlu0 %v841, 24
        %v912 = vpop.permute.xlu0 %911
        %913 = vrot.lane.b32.xlu0 %v842, 24
        %v914 = vpop.permute.xlu0 %913
        %915 = vrot.lane.b32.xlu0 %v843, 24
        %v916 = vpop.permute.xlu0 %915
        %917 = vrot.lane.b32.xlu0 %v844, 24
        %v918 = vpop.permute.xlu0 %917
        %919 = vrot.lane.b32.xlu0 %v845, 24
        %v920 = vpop.permute.xlu0 %919
        %921 = vrot.lane.b32.xlu0 %v846, 24
        %v922 = vpop.permute.xlu0 %921
        %923 = vrot.lane.b32.xlu0 %v847, 24
        %v924 = vpop.permute.xlu0 %923
        %925 = vrot.lane.b32.xlu0 %v848, 24
        %v926 = vpop.permute.xlu0 %925
        %927 = vrot.lane.b32.xlu0 %v849, 24
        %v928 = vpop.permute.xlu0 %927
        %929 = vrot.lane.b32.xlu0 %v850, 24
        %v930 = vpop.permute.xlu0 %929
        %931 = vrot.lane.b32.xlu0 %v851, 24
        %v932 = vpop.permute.xlu0 %931
        %933 = vrot.lane.b32.xlu0 %v852, 24
        %v934 = vpop.permute.xlu0 %933
        %935 = vrot.lane.b32.xlu0 %v853, 24
        %v936 = vpop.permute.xlu0 %935
        %937 = vrot.lane.b32.xlu0 %v854, 24
        %v938 = vpop.permute.xlu0 %937
        %939 = vrot.lane.b32.xlu0 %v855, 24
        %v940 = vpop.permute.xlu0 %939
        %941 = vrot.lane.b32.xlu0 %v856, 24
        %v942 = vpop.permute.xlu0 %941
        %943 = vrot.lane.b32.xlu0 %v857, 24
        %v944 = vpop.permute.xlu0 %943
        %945 = vrot.lane.b32.xlu0 %v858, 24
        %v946 = vpop.permute.xlu0 %945
        %947 = vrot.lane.b32.xlu0 %v859, 24
        %v948 = vpop.permute.xlu0 %947
        %949 = vrot.lane.b32.xlu0 %v860, 24
        %v950 = vpop.permute.xlu0 %949
        %951 = vrot.lane.b32.xlu0 %v861, 24
        %v952 = vpop.permute.xlu0 %951
        %953 = vrot.lane.b32.xlu0 %v862, 24
        %v954 = vpop.permute.xlu0 %953
        %955 = vrot.lane.b32.xlu0 %v863, 24
        %v956 = vpop.permute.xlu0 %955
        %957 = vrot.lane.b32.xlu0 %v864, 24
        %v958 = vpop.permute.xlu0 %957
        %959 = vrot.lane.b32.xlu0 %v865, 24
        %v960 = vpop.permute.xlu0 %959
        %961 = vrot.lane.b32.xlu0 %v866, 24
        %v962 = vpop.permute.xlu0 %961
        %vm995 = vcmask 261312
        %996 = vst.msk [vmem:[#allocation3] sm:$0xff] %vm995, %v900
        %997 = vst.msk [vmem:[#allocation3 + $0x8] sm:$0xff] %vm995, %v902
        %998 = vst.msk [vmem:[#allocation3 + $0x10] sm:$0xff] %vm995, %v904
        %999 = vst.msk [vmem:[#allocation3 + $0x18] sm:$0xff] %vm995, %v906
        %1000 = vst.msk [vmem:[#allocation3 + $0x20] sm:$0xff] %vm995, %v908
        %1001 = vst.msk [vmem:[#allocation3 + $0x28] sm:$0xff] %vm995, %v910
        %1002 = vst.msk [vmem:[#allocation3 + $0x30] sm:$0xff] %vm995, %v912
        %1003 = vst.msk [vmem:[#allocation3 + $0x38] sm:$0xff] %vm995, %v914
        %1004 = vst.msk [vmem:[#allocation3 + $0x40] sm:$0xff] %vm995, %v916
        %1005 = vst.msk [vmem:[#allocation3 + $0x48] sm:$0xff] %vm995, %v918
        %1006 = vst.msk [vmem:[#allocation3 + $0x50] sm:$0xff] %vm995, %v920
        %1007 = vst.msk [vmem:[#allocation3 + $0x58] sm:$0xff] %vm995, %v922
        %1008 = vst.msk [vmem:[#allocation3 + $0x60] sm:$0xff] %vm995, %v924
        %1009 = vst.msk [vmem:[#allocation3 + $0x68] sm:$0xff] %vm995, %v926
        %1010 = vst.msk [vmem:[#allocation3 + $0x70] sm:$0xff] %vm995, %v928
        %1011 = vst.msk [vmem:[#allocation3 + $0x78] sm:$0xff] %vm995, %v930
        %1012 = vst.msk [vmem:[#allocation3 + $0x80] sm:$0xff] %vm995, %v932
        %1013 = vst.msk [vmem:[#allocation3 + $0x88] sm:$0xff] %vm995, %v934
        %1014 = vst.msk [vmem:[#allocation3 + $0x90] sm:$0xff] %vm995, %v936
        %1015 = vst.msk [vmem:[#allocation3 + $0x98] sm:$0xff] %vm995, %v938
        %1016 = vst.msk [vmem:[#allocation3 + $0xa0] sm:$0xff] %vm995, %v940
        %1017 = vst.msk [vmem:[#allocation3 + $0xa8] sm:$0xff] %vm995, %v942
        %1018 = vst.msk [vmem:[#allocation3 + $0xb0] sm:$0xff] %vm995, %v944
        %1019 = vst.msk [vmem:[#allocation3 + $0xb8] sm:$0xff] %vm995, %v946
        %1020 = vst.msk [vmem:[#allocation3 + $0xc0] sm:$0xff] %vm995, %v948
        %1021 = vst.msk [vmem:[#allocation3 + $0xc8] sm:$0xff] %vm995, %v950
        %1022 = vst.msk [vmem:[#allocation3 + $0xd0] sm:$0xff] %vm995, %v952
        %1023 = vst.msk [vmem:[#allocation3 + $0xd8] sm:$0xff] %vm995, %v954
        %1024 = vst.msk [vmem:[#allocation3 + $0xe0] sm:$0xff] %vm995, %v956
        %1025 = vst.msk [vmem:[#allocation3 + $0xe8] sm:$0xff] %vm995, %v958
        %1026 = vst.msk [vmem:[#allocation3 + $0xf0] sm:$0xff] %vm995, %v960
        %1027 = vst.msk [vmem:[#allocation3 + $0xf8] sm:$0xff] %vm995, %v962
        %v1028 = vld [vmem:[%s342 + $0x1] sm:$0xff]
        %v1029 = vld [vmem:[%s342 + $0x9] sm:$0xff]
        %v1030 = vld [vmem:[%s342 + $0x19] sm:$0xff]
        %v1031 = vld [vmem:[%s342 + $0x21] sm:$0xff]
        %v1032 = vld [vmem:[%s342 + $0x31] sm:$0xff]
        %v1033 = vld [vmem:[%s342 + $0x39] sm:$0xff]
        %v1034 = vld [vmem:[%s342 + $0x49] sm:$0xff]
        %v1035 = vld [vmem:[%s342 + $0x51] sm:$0xff]
        %v1036 = vld [vmem:[%s342 + $0x61] sm:$0xff]
        %v1037 = vld [vmem:[%s342 + $0x69] sm:$0xff]
        %v1038 = vld [vmem:[%s342 + $0x79] sm:$0xff]
        %v1039 = vld [vmem:[%s342 + $0x81] sm:$0xff]
        %v1040 = vld [vmem:[%s342 + $0x91] sm:$0xff]
        %v1041 = vld [vmem:[%s342 + $0x99] sm:$0xff]
        %v1042 = vld [vmem:[%s342 + $0xa9] sm:$0xff]
        %v1043 = vld [vmem:[%s342 + $0xb1] sm:$0xff]
        %v1044 = vld [vmem:[%s342 + $0xc1] sm:$0xff]
        %v1045 = vld [vmem:[%s342 + $0xc9] sm:$0xff]
        %v1046 = vld [vmem:[%s342 + $0xd9] sm:$0xff]
        %v1047 = vld [vmem:[%s342 + $0xe1] sm:$0xff]
        %v1048 = vld [vmem:[%s342 + $0xf1] sm:$0xff]
        %v1049 = vld [vmem:[%s342 + $0xf9] sm:$0xff]
        %v1050 = vld [vmem:[%s342 + $0x109] sm:$0xff]
        %v1051 = vld [vmem:[%s342 + $0x111] sm:$0xff]
        %v1052 = vld [vmem:[%s342 + $0x121] sm:$0xff]
        %v1053 = vld [vmem:[%s342 + $0x129] sm:$0xff]
        %v1054 = vld [vmem:[%s342 + $0x139] sm:$0xff]
        %v1055 = vld [vmem:[%s342 + $0x141] sm:$0xff]
        %v1056 = vld [vmem:[%s342 + $0x151] sm:$0xff]
        %v1057 = vld [vmem:[%s342 + $0x159] sm:$0xff]
        %v1058 = vld [vmem:[%s342 + $0x169] sm:$0xff]
        %v1059 = vld [vmem:[%s342 + $0x171] sm:$0xff]
        %1092 = vrot.lane.b32.xlu0 %v1028, 32
        %v1093 = vpop.permute.xlu0 %1092
        %1094 = vrot.lane.b32.xlu0 %v1029, 32
        %v1095 = vpop.permute.xlu0 %1094
        %1096 = vrot.lane.b32.xlu0 %v1030, 32
        %v1097 = vpop.permute.xlu0 %1096
        %1098 = vrot.lane.b32.xlu0 %v1031, 32
        %v1099 = vpop.permute.xlu0 %1098
        %1100 = vrot.lane.b32.xlu0 %v1032, 32
        %v1101 = vpop.permute.xlu0 %1100
        %1102 = vrot.lane.b32.xlu0 %v1033, 32
        %v1103 = vpop.permute.xlu0 %1102
        %1104 = vrot.lane.b32.xlu0 %v1034, 32
        %v1105 = vpop.permute.xlu0 %1104
        %1106 = vrot.lane.b32.xlu0 %v1035, 32
        %v1107 = vpop.permute.xlu0 %1106
        %1108 = vrot.lane.b32.xlu0 %v1036, 32
        %v1109 = vpop.permute.xlu0 %1108
        %1110 = vrot.lane.b32.xlu0 %v1037, 32
        %v1111 = vpop.permute.xlu0 %1110
        %1112 = vrot.lane.b32.xlu0 %v1038, 32
        %v1113 = vpop.permute.xlu0 %1112
        %1114 = vrot.lane.b32.xlu0 %v1039, 32
        %v1115 = vpop.permute.xlu0 %1114
        %1116 = vrot.lane.b32.xlu0 %v1040, 32
        %v1117 = vpop.permute.xlu0 %1116
        %1118 = vrot.lane.b32.xlu0 %v1041, 32
        %v1119 = vpop.permute.xlu0 %1118
        %1120 = vrot.lane.b32.xlu0 %v1042, 32
        %v1121 = vpop.permute.xlu0 %1120
        %1122 = vrot.lane.b32.xlu0 %v1043, 32
        %v1123 = vpop.permute.xlu0 %1122
        %1124 = vrot.lane.b32.xlu0 %v1044, 32
        %v1125 = vpop.permute.xlu0 %1124
        %1126 = vrot.lane.b32.xlu0 %v1045, 32
        %v1127 = vpop.permute.xlu0 %1126
        %1128 = vrot.lane.b32.xlu0 %v1046, 32
        %v1129 = vpop.permute.xlu0 %1128
        %1130 = vrot.lane.b32.xlu0 %v1047, 32
        %v1131 = vpop.permute.xlu0 %1130
        %1132 = vrot.lane.b32.xlu0 %v1048, 32
        %v1133 = vpop.permute.xlu0 %1132
        %1134 = vrot.lane.b32.xlu0 %v1049, 32
        %v1135 = vpop.permute.xlu0 %1134
        %1136 = vrot.lane.b32.xlu0 %v1050, 32
        %v1137 = vpop.permute.xlu0 %1136
        %1138 = vrot.lane.b32.xlu0 %v1051, 32
        %v1139 = vpop.permute.xlu0 %1138
        %1140 = vrot.lane.b32.xlu0 %v1052, 32
        %v1141 = vpop.permute.xlu0 %1140
        %1142 = vrot.lane.b32.xlu0 %v1053, 32
        %v1143 = vpop.permute.xlu0 %1142
        %1144 = vrot.lane.b32.xlu0 %v1054, 32
        %v1145 = vpop.permute.xlu0 %1144
        %1146 = vrot.lane.b32.xlu0 %v1055, 32
        %v1147 = vpop.permute.xlu0 %1146
        %1148 = vrot.lane.b32.xlu0 %v1056, 32
        %v1149 = vpop.permute.xlu0 %1148
        %1150 = vrot.lane.b32.xlu0 %v1057, 32
        %v1151 = vpop.permute.xlu0 %1150
        %1152 = vrot.lane.b32.xlu0 %v1058, 32
        %v1153 = vpop.permute.xlu0 %1152
        %1154 = vrot.lane.b32.xlu0 %v1059, 32
        %v1155 = vpop.permute.xlu0 %1154
        %vm1188 = vcmask 326912
        %1189 = vst.msk [vmem:[#allocation3] sm:$0xff] %vm1188, %v1093
        %1190 = vst.msk [vmem:[#allocation3 + $0x8] sm:$0xff] %vm1188, %v1095
        %1191 = vst.msk [vmem:[#allocation3 + $0x10] sm:$0xff] %vm1188, %v1097
        %1192 = vst.msk [vmem:[#allocation3 + $0x18] sm:$0xff] %vm1188, %v1099
        %1193 = vst.msk [vmem:[#allocation3 + $0x20] sm:$0xff] %vm1188, %v1101
        %1194 = vst.msk [vmem:[#allocation3 + $0x28] sm:$0xff] %vm1188, %v1103
        %1195 = vst.msk [vmem:[#allocation3 + $0x30] sm:$0xff] %vm1188, %v1105
        %1196 = vst.msk [vmem:[#allocation3 + $0x38] sm:$0xff] %vm1188, %v1107
        %1197 = vst.msk [vmem:[#allocation3 + $0x40] sm:$0xff] %vm1188, %v1109
        %1198 = vst.msk [vmem:[#allocation3 + $0x48] sm:$0xff] %vm1188, %v1111
        %1199 = vst.msk [vmem:[#allocation3 + $0x50] sm:$0xff] %vm1188, %v1113
        %1200 = vst.msk [vmem:[#allocation3 + $0x58] sm:$0xff] %vm1188, %v1115
        %1201 = vst.msk [vmem:[#allocation3 + $0x60] sm:$0xff] %vm1188, %v1117
        %1202 = vst.msk [vmem:[#allocation3 + $0x68] sm:$0xff] %vm1188, %v1119
        %1203 = vst.msk [vmem:[#allocation3 + $0x70] sm:$0xff] %vm1188, %v1121
        %1204 = vst.msk [vmem:[#allocation3 + $0x78] sm:$0xff] %vm1188, %v1123
        %1205 = vst.msk [vmem:[#allocation3 + $0x80] sm:$0xff] %vm1188, %v1125
        %1206 = vst.msk [vmem:[#allocation3 + $0x88] sm:$0xff] %vm1188, %v1127
        %1207 = vst.msk [vmem:[#allocation3 + $0x90] sm:$0xff] %vm1188, %v1129
        %1208 = vst.msk [vmem:[#allocation3 + $0x98] sm:$0xff] %vm1188, %v1131
        %1209 = vst.msk [vmem:[#allocation3 + $0xa0] sm:$0xff] %vm1188, %v1133
        %1210 = vst.msk [vmem:[#allocation3 + $0xa8] sm:$0xff] %vm1188, %v1135
        %1211 = vst.msk [vmem:[#allocation3 + $0xb0] sm:$0xff] %vm1188, %v1137
        %1212 = vst.msk [vmem:[#allocation3 + $0xb8] sm:$0xff] %vm1188, %v1139
        %1213 = vst.msk [vmem:[#allocation3 + $0xc0] sm:$0xff] %vm1188, %v1141
        %1214 = vst.msk [vmem:[#allocation3 + $0xc8] sm:$0xff] %vm1188, %v1143
        %1215 = vst.msk [vmem:[#allocation3 + $0xd0] sm:$0xff] %vm1188, %v1145
        %1216 = vst.msk [vmem:[#allocation3 + $0xd8] sm:$0xff] %vm1188, %v1147
        %1217 = vst.msk [vmem:[#allocation3 + $0xe0] sm:$0xff] %vm1188, %v1149
        %1218 = vst.msk [vmem:[#allocation3 + $0xe8] sm:$0xff] %vm1188, %v1151
        %1219 = vst.msk [vmem:[#allocation3 + $0xf0] sm:$0xff] %vm1188, %v1153
        %1220 = vst.msk [vmem:[#allocation3 + $0xf8] sm:$0xff] %vm1188, %v1155
        %v1221 = vld [vmem:[%s342 + $0x2] sm:$0xff]
        %v1222 = vld [vmem:[%s342 + $0xa] sm:$0xff]
        %v1223 = vld [vmem:[%s342 + $0x1a] sm:$0xff]
        %v1224 = vld [vmem:[%s342 + $0x22] sm:$0xff]
        %v1225 = vld [vmem:[%s342 + $0x32] sm:$0xff]
        %v1226 = vld [vmem:[%s342 + $0x3a] sm:$0xff]
        %v1227 = vld [vmem:[%s342 + $0x4a] sm:$0xff]
        %v1228 = vld [vmem:[%s342 + $0x52] sm:$0xff]
        %v1229 = vld [vmem:[%s342 + $0x62] sm:$0xff]
        %v1230 = vld [vmem:[%s342 + $0x6a] sm:$0xff]
        %v1231 = vld [vmem:[%s342 + $0x7a] sm:$0xff]
        %v1232 = vld [vmem:[%s342 + $0x82] sm:$0xff]
        %v1233 = vld [vmem:[%s342 + $0x92] sm:$0xff]
        %v1234 = vld [vmem:[%s342 + $0x9a] sm:$0xff]
        %v1235 = vld [vmem:[%s342 + $0xaa] sm:$0xff]
        %v1236 = vld [vmem:[%s342 + $0xb2] sm:$0xff]
        %v1237 = vld [vmem:[%s342 + $0xc2] sm:$0xff]
        %v1238 = vld [vmem:[%s342 + $0xca] sm:$0xff]
        %v1239 = vld [vmem:[%s342 + $0xda] sm:$0xff]
        %v1240 = vld [vmem:[%s342 + $0xe2] sm:$0xff]
        %v1241 = vld [vmem:[%s342 + $0xf2] sm:$0xff]
        %v1242 = vld [vmem:[%s342 + $0xfa] sm:$0xff]
        %v1243 = vld [vmem:[%s342 + $0x10a] sm:$0xff]
        %v1244 = vld [vmem:[%s342 + $0x112] sm:$0xff]
        %v1245 = vld [vmem:[%s342 + $0x122] sm:$0xff]
        %v1246 = vld [vmem:[%s342 + $0x12a] sm:$0xff]
        %v1247 = vld [vmem:[%s342 + $0x13a] sm:$0xff]
        %v1248 = vld [vmem:[%s342 + $0x142] sm:$0xff]
        %v1249 = vld [vmem:[%s342 + $0x152] sm:$0xff]
        %v1250 = vld [vmem:[%s342 + $0x15a] sm:$0xff]
        %v1251 = vld [vmem:[%s342 + $0x16a] sm:$0xff]
        %v1252 = vld [vmem:[%s342 + $0x172] sm:$0xff]
        %1285 = vrot.lane.b32.xlu0 %v1221, 40
        %v1286 = vpop.permute.xlu0 %1285
        %1287 = vrot.lane.b32.xlu0 %v1222, 40
        %v1288 = vpop.permute.xlu0 %1287
        %1289 = vrot.lane.b32.xlu0 %v1223, 40
        %v1290 = vpop.permute.xlu0 %1289
        %1291 = vrot.lane.b32.xlu0 %v1224, 40
        %v1292 = vpop.permute.xlu0 %1291
        %1293 = vrot.lane.b32.xlu0 %v1225, 40
        %v1294 = vpop.permute.xlu0 %1293
        %1295 = vrot.lane.b32.xlu0 %v1226, 40
        %v1296 = vpop.permute.xlu0 %1295
        %1297 = vrot.lane.b32.xlu0 %v1227, 40
        %v1298 = vpop.permute.xlu0 %1297
        %1299 = vrot.lane.b32.xlu0 %v1228, 40
        %v1300 = vpop.permute.xlu0 %1299
        %1301 = vrot.lane.b32.xlu0 %v1229, 40
        %v1302 = vpop.permute.xlu0 %1301
        %1303 = vrot.lane.b32.xlu0 %v1230, 40
        %v1304 = vpop.permute.xlu0 %1303
        %1305 = vrot.lane.b32.xlu0 %v1231, 40
        %v1306 = vpop.permute.xlu0 %1305
        %1307 = vrot.lane.b32.xlu0 %v1232, 40
        %v1308 = vpop.permute.xlu0 %1307
        %1309 = vrot.lane.b32.xlu0 %v1233, 40
        %v1310 = vpop.permute.xlu0 %1309
        %1311 = vrot.lane.b32.xlu0 %v1234, 40
        %v1312 = vpop.permute.xlu0 %1311
        %1313 = vrot.lane.b32.xlu0 %v1235, 40
        %v1314 = vpop.permute.xlu0 %1313
        %1315 = vrot.lane.b32.xlu0 %v1236, 40
        %v1316 = vpop.permute.xlu0 %1315
        %1317 = vrot.lane.b32.xlu0 %v1237, 40
        %v1318 = vpop.permute.xlu0 %1317
        %1319 = vrot.lane.b32.xlu0 %v1238, 40
        %v1320 = vpop.permute.xlu0 %1319
        %1321 = vrot.lane.b32.xlu0 %v1239, 40
        %v1322 = vpop.permute.xlu0 %1321
        %1323 = vrot.lane.b32.xlu0 %v1240, 40
        %v1324 = vpop.permute.xlu0 %1323
        %1325 = vrot.lane.b32.xlu0 %v1241, 40
        %v1326 = vpop.permute.xlu0 %1325
        %1327 = vrot.lane.b32.xlu0 %v1242, 40
        %v1328 = vpop.permute.xlu0 %1327
        %1329 = vrot.lane.b32.xlu0 %v1243, 40
        %v1330 = vpop.permute.xlu0 %1329
        %1331 = vrot.lane.b32.xlu0 %v1244, 40
        %v1332 = vpop.permute.xlu0 %1331
        %1333 = vrot.lane.b32.xlu0 %v1245, 40
        %v1334 = vpop.permute.xlu0 %1333
        %1335 = vrot.lane.b32.xlu0 %v1246, 40
        %v1336 = vpop.permute.xlu0 %1335
        %1337 = vrot.lane.b32.xlu0 %v1247, 40
        %v1338 = vpop.permute.xlu0 %1337
        %1339 = vrot.lane.b32.xlu0 %v1248, 40
        %v1340 = vpop.permute.xlu0 %1339
        %1341 = vrot.lane.b32.xlu0 %v1249, 40
        %v1342 = vpop.permute.xlu0 %1341
        %1343 = vrot.lane.b32.xlu0 %v1250, 40
        %v1344 = vpop.permute.xlu0 %1343
        %1345 = vrot.lane.b32.xlu0 %v1251, 40
        %v1346 = vpop.permute.xlu0 %1345
        %1347 = vrot.lane.b32.xlu0 %v1252, 40
        %v1348 = vpop.permute.xlu0 %1347
        %vm1381 = vcmask 392512
        %1382 = vst.msk [vmem:[#allocation3] sm:$0xff] %vm1381, %v1286
        %1383 = vst.msk [vmem:[#allocation3 + $0x8] sm:$0xff] %vm1381, %v1288
        %1384 = vst.msk [vmem:[#allocation3 + $0x10] sm:$0xff] %vm1381, %v1290
        %1385 = vst.msk [vmem:[#allocation3 + $0x18] sm:$0xff] %vm1381, %v1292
        %1386 = vst.msk [vmem:[#allocation3 + $0x20] sm:$0xff] %vm1381, %v1294
        %1387 = vst.msk [vmem:[#allocation3 + $0x28] sm:$0xff] %vm1381, %v1296
        %1388 = vst.msk [vmem:[#allocation3 + $0x30] sm:$0xff] %vm1381, %v1298
        %1389 = vst.msk [vmem:[#allocation3 + $0x38] sm:$0xff] %vm1381, %v1300
        %1390 = vst.msk [vmem:[#allocation3 + $0x40] sm:$0xff] %vm1381, %v1302
        %1391 = vst.msk [vmem:[#allocation3 + $0x48] sm:$0xff] %vm1381, %v1304
        %1392 = vst.msk [vmem:[#allocation3 + $0x50] sm:$0xff] %vm1381, %v1306
        %1393 = vst.msk [vmem:[#allocation3 + $0x58] sm:$0xff] %vm1381, %v1308
        %1394 = vst.msk [vmem:[#allocation3 + $0x60] sm:$0xff] %vm1381, %v1310
        %1395 = vst.msk [vmem:[#allocation3 + $0x68] sm:$0xff] %vm1381, %v1312
        %1396 = vst.msk [vmem:[#allocation3 + $0x70] sm:$0xff] %vm1381, %v1314
        %1397 = vst.msk [vmem:[#allocation3 + $0x78] sm:$0xff] %vm1381, %v1316
        %1398 = vst.msk [vmem:[#allocation3 + $0x80] sm:$0xff] %vm1381, %v1318
        %1399 = vst.msk [vmem:[#allocation3 + $0x88] sm:$0xff] %vm1381, %v1320
        %1400 = vst.msk [vmem:[#allocation3 + $0x90] sm:$0xff] %vm1381, %v1322
        %1401 = vst.msk [vmem:[#allocation3 + $0x98] sm:$0xff] %vm1381, %v1324
        %1402 = vst.msk [vmem:[#allocation3 + $0xa0] sm:$0xff] %vm1381, %v1326
        %1403 = vst.msk [vmem:[#allocation3 + $0xa8] sm:$0xff] %vm1381, %v1328
        %1404 = vst.msk [vmem:[#allocation3 + $0xb0] sm:$0xff] %vm1381, %v1330
        %1405 = vst.msk [vmem:[#allocation3 + $0xb8] sm:$0xff] %vm1381, %v1332
        %1406 = vst.msk [vmem:[#allocation3 + $0xc0] sm:$0xff] %vm1381, %v1334
        %1407 = vst.msk [vmem:[#allocation3 + $0xc8] sm:$0xff] %vm1381, %v1336
        %1408 = vst.msk [vmem:[#allocation3 + $0xd0] sm:$0xff] %vm1381, %v1338
        %1409 = vst.msk [vmem:[#allocation3 + $0xd8] sm:$0xff] %vm1381, %v1340
        %1410 = vst.msk [vmem:[#allocation3 + $0xe0] sm:$0xff] %vm1381, %v1342
        %1411 = vst.msk [vmem:[#allocation3 + $0xe8] sm:$0xff] %vm1381, %v1344
        %1412 = vst.msk [vmem:[#allocation3 + $0xf0] sm:$0xff] %vm1381, %v1346
        %1413 = vst.msk [vmem:[#allocation3 + $0xf8] sm:$0xff] %vm1381, %v1348
        %s1414 = scalar_lea.vmem [#allocation2], 48
        %v1415 = vld [vmem:[%s1414] sm:$0xff]
        %v1416 = vld [vmem:[%s1414 + $0x8] sm:$0xff]
        %v1417 = vld [vmem:[%s1414 + $0x18] sm:$0xff]
        %v1418 = vld [vmem:[%s1414 + $0x20] sm:$0xff]
        %v1419 = vld [vmem:[%s1414 + $0x30] sm:$0xff]
        %v1420 = vld [vmem:[%s1414 + $0x38] sm:$0xff]
        %v1421 = vld [vmem:[%s1414 + $0x48] sm:$0xff]
        %v1422 = vld [vmem:[%s1414 + $0x50] sm:$0xff]
        %v1423 = vld [vmem:[%s1414 + $0x60] sm:$0xff]
        %v1424 = vld [vmem:[%s1414 + $0x68] sm:$0xff]
        %v1425 = vld [vmem:[%s1414 + $0x78] sm:$0xff]
        %v1426 = vld [vmem:[%s1414 + $0x80] sm:$0xff]
        %v1427 = vld [vmem:[%s1414 + $0x90] sm:$0xff]
        %v1428 = vld [vmem:[%s1414 + $0x98] sm:$0xff]
        %v1429 = vld [vmem:[%s1414 + $0xa8] sm:$0xff]
        %v1430 = vld [vmem:[%s1414 + $0xb0] sm:$0xff]
        %v1431 = vld [vmem:[%s1414 + $0xc0] sm:$0xff]
        %v1432 = vld [vmem:[%s1414 + $0xc8] sm:$0xff]
        %v1433 = vld [vmem:[%s1414 + $0xd8] sm:$0xff]
        %v1434 = vld [vmem:[%s1414 + $0xe0] sm:$0xff]
        %v1435 = vld [vmem:[%s1414 + $0xf0] sm:$0xff]
        %v1436 = vld [vmem:[%s1414 + $0xf8] sm:$0xff]
        %v1437 = vld [vmem:[%s1414 + $0x108] sm:$0xff]
        %v1438 = vld [vmem:[%s1414 + $0x110] sm:$0xff]
        %v1439 = vld [vmem:[%s1414 + $0x120] sm:$0xff]
        %v1440 = vld [vmem:[%s1414 + $0x128] sm:$0xff]
        %v1441 = vld [vmem:[%s1414 + $0x138] sm:$0xff]
        %v1442 = vld [vmem:[%s1414 + $0x140] sm:$0xff]
        %v1443 = vld [vmem:[%s1414 + $0x150] sm:$0xff]
        %v1444 = vld [vmem:[%s1414 + $0x158] sm:$0xff]
        %v1445 = vld [vmem:[%s1414 + $0x168] sm:$0xff]
        %v1446 = vld [vmem:[%s1414 + $0x170] sm:$0xff]
        %1479 = vrot.lane.b32.xlu0 %v1415, 48
        %v1480 = vpop.permute.xlu0 %1479
        %1481 = vrot.lane.b32.xlu0 %v1416, 48
        %v1482 = vpop.permute.xlu0 %1481
        %1483 = vrot.lane.b32.xlu0 %v1417, 48
        %v1484 = vpop.permute.xlu0 %1483
        %1485 = vrot.lane.b32.xlu0 %v1418, 48
        %v1486 = vpop.permute.xlu0 %1485
        %1487 = vrot.lane.b32.xlu0 %v1419, 48
        %v1488 = vpop.permute.xlu0 %1487
        %1489 = vrot.lane.b32.xlu0 %v1420, 48
        %v1490 = vpop.permute.xlu0 %1489
        %1491 = vrot.lane.b32.xlu0 %v1421, 48
        %v1492 = vpop.permute.xlu0 %1491
        %1493 = vrot.lane.b32.xlu0 %v1422, 48
        %v1494 = vpop.permute.xlu0 %1493
        %1495 = vrot.lane.b32.xlu0 %v1423, 48
        %v1496 = vpop.permute.xlu0 %1495
        %1497 = vrot.lane.b32.xlu0 %v1424, 48
        %v1498 = vpop.permute.xlu0 %1497
        %1499 = vrot.lane.b32.xlu0 %v1425, 48
        %v1500 = vpop.permute.xlu0 %1499
        %1501 = vrot.lane.b32.xlu0 %v1426, 48
        %v1502 = vpop.permute.xlu0 %1501
        %1503 = vrot.lane.b32.xlu0 %v1427, 48
        %v1504 = vpop.permute.xlu0 %1503
        %1505 = vrot.lane.b32.xlu0 %v1428, 48
        %v1506 = vpop.permute.xlu0 %1505
        %1507 = vrot.lane.b32.xlu0 %v1429, 48
        %v1508 = vpop.permute.xlu0 %1507
        %1509 = vrot.lane.b32.xlu0 %v1430, 48
        %v1510 = vpop.permute.xlu0 %1509
        %1511 = vrot.lane.b32.xlu0 %v1431, 48
        %v1512 = vpop.permute.xlu0 %1511
        %1513 = vrot.lane.b32.xlu0 %v1432, 48
        %v1514 = vpop.permute.xlu0 %1513
        %1515 = vrot.lane.b32.xlu0 %v1433, 48
        %v1516 = vpop.permute.xlu0 %1515
        %1517 = vrot.lane.b32.xlu0 %v1434, 48
        %v1518 = vpop.permute.xlu0 %1517
        %1519 = vrot.lane.b32.xlu0 %v1435, 48
        %v1520 = vpop.permute.xlu0 %1519
        %1521 = vrot.lane.b32.xlu0 %v1436, 48
        %v1522 = vpop.permute.xlu0 %1521
        %1523 = vrot.lane.b32.xlu0 %v1437, 48
        %v1524 = vpop.permute.xlu0 %1523
        %1525 = vrot.lane.b32.xlu0 %v1438, 48
        %v1526 = vpop.permute.xlu0 %1525
        %1527 = vrot.lane.b32.xlu0 %v1439, 48
        %v1528 = vpop.permute.xlu0 %1527
        %1529 = vrot.lane.b32.xlu0 %v1440, 48
        %v1530 = vpop.permute.xlu0 %1529
        %1531 = vrot.lane.b32.xlu0 %v1441, 48
        %v1532 = vpop.permute.xlu0 %1531
        %1533 = vrot.lane.b32.xlu0 %v1442, 48
        %v1534 = vpop.permute.xlu0 %1533
        %1535 = vrot.lane.b32.xlu0 %v1443, 48
        %v1536 = vpop.permute.xlu0 %1535
        %1537 = vrot.lane.b32.xlu0 %v1444, 48
        %v1538 = vpop.permute.xlu0 %1537
        %1539 = vrot.lane.b32.xlu0 %v1445, 48
        %v1540 = vpop.permute.xlu0 %1539
        %1541 = vrot.lane.b32.xlu0 %v1446, 48
        %v1542 = vpop.permute.xlu0 %1541
        %vm1575 = vcmask 458112
        %1576 = vst.msk [vmem:[#allocation3] sm:$0xff] %vm1575, %v1480
        %1577 = vst.msk [vmem:[#allocation3 + $0x8] sm:$0xff] %vm1575, %v1482
        %1578 = vst.msk [vmem:[#allocation3 + $0x10] sm:$0xff] %vm1575, %v1484
        %1579 = vst.msk [vmem:[#allocation3 + $0x18] sm:$0xff] %vm1575, %v1486
        %1580 = vst.msk [vmem:[#allocation3 + $0x20] sm:$0xff] %vm1575, %v1488
        %1581 = vst.msk [vmem:[#allocation3 + $0x28] sm:$0xff] %vm1575, %v1490
        %1582 = vst.msk [vmem:[#allocation3 + $0x30] sm:$0xff] %vm1575, %v1492
        %1583 = vst.msk [vmem:[#allocation3 + $0x38] sm:$0xff] %vm1575, %v1494
        %1584 = vst.msk [vmem:[#allocation3 + $0x40] sm:$0xff] %vm1575, %v1496
        %1585 = vst.msk [vmem:[#allocation3 + $0x48] sm:$0xff] %vm1575, %v1498
        %1586 = vst.msk [vmem:[#allocation3 + $0x50] sm:$0xff] %vm1575, %v1500
        %1587 = vst.msk [vmem:[#allocation3 + $0x58] sm:$0xff] %vm1575, %v1502
        %1588 = vst.msk [vmem:[#allocation3 + $0x60] sm:$0xff] %vm1575, %v1504
        %1589 = vst.msk [vmem:[#allocation3 + $0x68] sm:$0xff] %vm1575, %v1506
        %1590 = vst.msk [vmem:[#allocation3 + $0x70] sm:$0xff] %vm1575, %v1508
        %1591 = vst.msk [vmem:[#allocation3 + $0x78] sm:$0xff] %vm1575, %v1510
        %1592 = vst.msk [vmem:[#allocation3 + $0x80] sm:$0xff] %vm1575, %v1512
        %1593 = vst.msk [vmem:[#allocation3 + $0x88] sm:$0xff] %vm1575, %v1514
        %1594 = vst.msk [vmem:[#allocation3 + $0x90] sm:$0xff] %vm1575, %v1516
        %1595 = vst.msk [vmem:[#allocation3 + $0x98] sm:$0xff] %vm1575, %v1518
        %1596 = vst.msk [vmem:[#allocation3 + $0xa0] sm:$0xff] %vm1575, %v1520
        %1597 = vst.msk [vmem:[#allocation3 + $0xa8] sm:$0xff] %vm1575, %v1522
        %1598 = vst.msk [vmem:[#allocation3 + $0xb0] sm:$0xff] %vm1575, %v1524
        %1599 = vst.msk [vmem:[#allocation3 + $0xb8] sm:$0xff] %vm1575, %v1526
        %1600 = vst.msk [vmem:[#allocation3 + $0xc0] sm:$0xff] %vm1575, %v1528
        %1601 = vst.msk [vmem:[#allocation3 + $0xc8] sm:$0xff] %vm1575, %v1530
        %1602 = vst.msk [vmem:[#allocation3 + $0xd0] sm:$0xff] %vm1575, %v1532
        %1603 = vst.msk [vmem:[#allocation3 + $0xd8] sm:$0xff] %vm1575, %v1534
        %1604 = vst.msk [vmem:[#allocation3 + $0xe0] sm:$0xff] %vm1575, %v1536
        %1605 = vst.msk [vmem:[#allocation3 + $0xe8] sm:$0xff] %vm1575, %v1538
        %1606 = vst.msk [vmem:[#allocation3 + $0xf0] sm:$0xff] %vm1575, %v1540
        %1607 = vst.msk [vmem:[#allocation3 + $0xf8] sm:$0xff] %vm1575, %v1542
        %v1608 = vld [vmem:[%s1414 + $0x1] sm:$0xff]
        %v1609 = vld [vmem:[%s1414 + $0x9] sm:$0xff]
        %v1610 = vld [vmem:[%s1414 + $0x19] sm:$0xff]
        %v1611 = vld [vmem:[%s1414 + $0x21] sm:$0xff]
        %v1612 = vld [vmem:[%s1414 + $0x31] sm:$0xff]
        %v1613 = vld [vmem:[%s1414 + $0x39] sm:$0xff]
        %v1614 = vld [vmem:[%s1414 + $0x49] sm:$0xff]
        %v1615 = vld [vmem:[%s1414 + $0x51] sm:$0xff]
        %v1616 = vld [vmem:[%s1414 + $0x61] sm:$0xff]
        %v1617 = vld [vmem:[%s1414 + $0x69] sm:$0xff]
        %v1618 = vld [vmem:[%s1414 + $0x79] sm:$0xff]
        %v1619 = vld [vmem:[%s1414 + $0x81] sm:$0xff]
        %v1620 = vld [vmem:[%s1414 + $0x91] sm:$0xff]
        %v1621 = vld [vmem:[%s1414 + $0x99] sm:$0xff]
        %v1622 = vld [vmem:[%s1414 + $0xa9] sm:$0xff]
        %v1623 = vld [vmem:[%s1414 + $0xb1] sm:$0xff]
        %v1624 = vld [vmem:[%s1414 + $0xc1] sm:$0xff]
        %v1625 = vld [vmem:[%s1414 + $0xc9] sm:$0xff]
        %v1626 = vld [vmem:[%s1414 + $0xd9] sm:$0xff]
        %v1627 = vld [vmem:[%s1414 + $0xe1] sm:$0xff]
        %v1628 = vld [vmem:[%s1414 + $0xf1] sm:$0xff]
        %v1629 = vld [vmem:[%s1414 + $0xf9] sm:$0xff]
        %v1630 = vld [vmem:[%s1414 + $0x109] sm:$0xff]
        %v1631 = vld [vmem:[%s1414 + $0x111] sm:$0xff]
        %v1632 = vld [vmem:[%s1414 + $0x121] sm:$0xff]
        %v1633 = vld [vmem:[%s1414 + $0x129] sm:$0xff]
        %v1634 = vld [vmem:[%s1414 + $0x139] sm:$0xff]
        %v1635 = vld [vmem:[%s1414 + $0x141] sm:$0xff]
        %v1636 = vld [vmem:[%s1414 + $0x151] sm:$0xff]
        %v1637 = vld [vmem:[%s1414 + $0x159] sm:$0xff]
        %v1638 = vld [vmem:[%s1414 + $0x169] sm:$0xff]
        %v1639 = vld [vmem:[%s1414 + $0x171] sm:$0xff]
        %1672 = vrot.lane.b32.xlu0 %v1608, 56
        %v1673 = vpop.permute.xlu0 %1672
        %1674 = vrot.lane.b32.xlu0 %v1609, 56
        %v1675 = vpop.permute.xlu0 %1674
        %1676 = vrot.lane.b32.xlu0 %v1610, 56
        %v1677 = vpop.permute.xlu0 %1676
        %1678 = vrot.lane.b32.xlu0 %v1611, 56
        %v1679 = vpop.permute.xlu0 %1678
        %1680 = vrot.lane.b32.xlu0 %v1612, 56
        %v1681 = vpop.permute.xlu0 %1680
        %1682 = vrot.lane.b32.xlu0 %v1613, 56
        %v1683 = vpop.permute.xlu0 %1682
        %1684 = vrot.lane.b32.xlu0 %v1614, 56
        %v1685 = vpop.permute.xlu0 %1684
        %1686 = vrot.lane.b32.xlu0 %v1615, 56
        %v1687 = vpop.permute.xlu0 %1686
        %1688 = vrot.lane.b32.xlu0 %v1616, 56
        %v1689 = vpop.permute.xlu0 %1688
        %1690 = vrot.lane.b32.xlu0 %v1617, 56
        %v1691 = vpop.permute.xlu0 %1690
        %1692 = vrot.lane.b32.xlu0 %v1618, 56
        %v1693 = vpop.permute.xlu0 %1692
        %1694 = vrot.lane.b32.xlu0 %v1619, 56
        %v1695 = vpop.permute.xlu0 %1694
        %1696 = vrot.lane.b32.xlu0 %v1620, 56
        %v1697 = vpop.permute.xlu0 %1696
        %1698 = vrot.lane.b32.xlu0 %v1621, 56
        %v1699 = vpop.permute.xlu0 %1698
        %1700 = vrot.lane.b32.xlu0 %v1622, 56
        %v1701 = vpop.permute.xlu0 %1700
        %1702 = vrot.lane.b32.xlu0 %v1623, 56
        %v1703 = vpop.permute.xlu0 %1702
        %1704 = vrot.lane.b32.xlu0 %v1624, 56
        %v1705 = vpop.permute.xlu0 %1704
        %1706 = vrot.lane.b32.xlu0 %v1625, 56
        %v1707 = vpop.permute.xlu0 %1706
        %1708 = vrot.lane.b32.xlu0 %v1626, 56
        %v1709 = vpop.permute.xlu0 %1708
        %1710 = vrot.lane.b32.xlu0 %v1627, 56
        %v1711 = vpop.permute.xlu0 %1710
        %1712 = vrot.lane.b32.xlu0 %v1628, 56
        %v1713 = vpop.permute.xlu0 %1712
        %1714 = vrot.lane.b32.xlu0 %v1629, 56
        %v1715 = vpop.permute.xlu0 %1714
        %1716 = vrot.lane.b32.xlu0 %v1630, 56
        %v1717 = vpop.permute.xlu0 %1716
        %1718 = vrot.lane.b32.xlu0 %v1631, 56
        %v1719 = vpop.permute.xlu0 %1718
        %1720 = vrot.lane.b32.xlu0 %v1632, 56
        %v1721 = vpop.permute.xlu0 %1720
        %1722 = vrot.lane.b32.xlu0 %v1633, 56
        %v1723 = vpop.permute.xlu0 %1722
        %1724 = vrot.lane.b32.xlu0 %v1634, 56
        %v1725 = vpop.permute.xlu0 %1724
        %1726 = vrot.lane.b32.xlu0 %v1635, 56
        %v1727 = vpop.permute.xlu0 %1726
        %1728 = vrot.lane.b32.xlu0 %v1636, 56
        %v1729 = vpop.permute.xlu0 %1728
        %1730 = vrot.lane.b32.xlu0 %v1637, 56
        %v1731 = vpop.permute.xlu0 %1730
        %1732 = vrot.lane.b32.xlu0 %v1638, 56
        %v1733 = vpop.permute.xlu0 %1732
        %1734 = vrot.lane.b32.xlu0 %v1639, 56
        %v1735 = vpop.permute.xlu0 %1734
        %vm1768 = vcmask 523712
        %1769 = vst.msk [vmem:[#allocation3] sm:$0xff] %vm1768, %v1673
        %1770 = vst.msk [vmem:[#allocation3 + $0x8] sm:$0xff] %vm1768, %v1675
        %1771 = vst.msk [vmem:[#allocation3 + $0x10] sm:$0xff] %vm1768, %v1677
        %1772 = vst.msk [vmem:[#allocation3 + $0x18] sm:$0xff] %vm1768, %v1679
        %1773 = vst.msk [vmem:[#allocation3 + $0x20] sm:$0xff] %vm1768, %v1681
        %1774 = vst.msk [vmem:[#allocation3 + $0x28] sm:$0xff] %vm1768, %v1683
        %1775 = vst.msk [vmem:[#allocation3 + $0x30] sm:$0xff] %vm1768, %v1685
        %1776 = vst.msk [vmem:[#allocation3 + $0x38] sm:$0xff] %vm1768, %v1687
        %1777 = vst.msk [vmem:[#allocation3 + $0x40] sm:$0xff] %vm1768, %v1689
        %1778 = vst.msk [vmem:[#allocation3 + $0x48] sm:$0xff] %vm1768, %v1691
        %1779 = vst.msk [vmem:[#allocation3 + $0x50] sm:$0xff] %vm1768, %v1693
        %1780 = vst.msk [vmem:[#allocation3 + $0x58] sm:$0xff] %vm1768, %v1695
        %1781 = vst.msk [vmem:[#allocation3 + $0x60] sm:$0xff] %vm1768, %v1697
        %1782 = vst.msk [vmem:[#allocation3 + $0x68] sm:$0xff] %vm1768, %v1699
        %1783 = vst.msk [vmem:[#allocation3 + $0x70] sm:$0xff] %vm1768, %v1701
        %1784 = vst.msk [vmem:[#allocation3 + $0x78] sm:$0xff] %vm1768, %v1703
        %1785 = vst.msk [vmem:[#allocation3 + $0x80] sm:$0xff] %vm1768, %v1705
        %1786 = vst.msk [vmem:[#allocation3 + $0x88] sm:$0xff] %vm1768, %v1707
        %1787 = vst.msk [vmem:[#allocation3 + $0x90] sm:$0xff] %vm1768, %v1709
        %1788 = vst.msk [vmem:[#allocation3 + $0x98] sm:$0xff] %vm1768, %v1711
        %1789 = vst.msk [vmem:[#allocation3 + $0xa0] sm:$0xff] %vm1768, %v1713
        %1790 = vst.msk [vmem:[#allocation3 + $0xa8] sm:$0xff] %vm1768, %v1715
        %1791 = vst.msk [vmem:[#allocation3 + $0xb0] sm:$0xff] %vm1768, %v1717
        %1792 = vst.msk [vmem:[#allocation3 + $0xb8] sm:$0xff] %vm1768, %v1719
        %1793 = vst.msk [vmem:[#allocation3 + $0xc0] sm:$0xff] %vm1768, %v1721
        %1794 = vst.msk [vmem:[#allocation3 + $0xc8] sm:$0xff] %vm1768, %v1723
        %1795 = vst.msk [vmem:[#allocation3 + $0xd0] sm:$0xff] %vm1768, %v1725
        %1796 = vst.msk [vmem:[#allocation3 + $0xd8] sm:$0xff] %vm1768, %v1727
        %1797 = vst.msk [vmem:[#allocation3 + $0xe0] sm:$0xff] %vm1768, %v1729
        %1798 = vst.msk [vmem:[#allocation3 + $0xe8] sm:$0xff] %vm1768, %v1731
        %1799 = vst.msk [vmem:[#allocation3 + $0xf0] sm:$0xff] %vm1768, %v1733
        %1800 = vst.msk [vmem:[#allocation3 + $0xf8] sm:$0xff] %vm1768, %v1735
        %v1801 = vld [vmem:[%s1414 + $0x2] sm:$0xff]
        %v1802 = vld [vmem:[%s1414 + $0xa] sm:$0xff]
        %v1803 = vld [vmem:[%s1414 + $0x1a] sm:$0xff]
        %v1804 = vld [vmem:[%s1414 + $0x22] sm:$0xff]
        %v1805 = vld [vmem:[%s1414 + $0x32] sm:$0xff]
        %v1806 = vld [vmem:[%s1414 + $0x3a] sm:$0xff]
        %v1807 = vld [vmem:[%s1414 + $0x4a] sm:$0xff]
        %v1808 = vld [vmem:[%s1414 + $0x52] sm:$0xff]
        %v1809 = vld [vmem:[%s1414 + $0x62] sm:$0xff]
        %v1810 = vld [vmem:[%s1414 + $0x6a] sm:$0xff]
        %v1811 = vld [vmem:[%s1414 + $0x7a] sm:$0xff]
        %v1812 = vld [vmem:[%s1414 + $0x82] sm:$0xff]
        %v1813 = vld [vmem:[%s1414 + $0x92] sm:$0xff]
        %v1814 = vld [vmem:[%s1414 + $0x9a] sm:$0xff]
        %v1815 = vld [vmem:[%s1414 + $0xaa] sm:$0xff]
        %v1816 = vld [vmem:[%s1414 + $0xb2] sm:$0xff]
        %v1817 = vld [vmem:[%s1414 + $0xc2] sm:$0xff]
        %v1818 = vld [vmem:[%s1414 + $0xca] sm:$0xff]
        %v1819 = vld [vmem:[%s1414 + $0xda] sm:$0xff]
        %v1820 = vld [vmem:[%s1414 + $0xe2] sm:$0xff]
        %v1821 = vld [vmem:[%s1414 + $0xf2] sm:$0xff]
        %v1822 = vld [vmem:[%s1414 + $0xfa] sm:$0xff]
        %v1823 = vld [vmem:[%s1414 + $0x10a] sm:$0xff]
        %v1824 = vld [vmem:[%s1414 + $0x112] sm:$0xff]
        %v1825 = vld [vmem:[%s1414 + $0x122] sm:$0xff]
        %v1826 = vld [vmem:[%s1414 + $0x12a] sm:$0xff]
        %v1827 = vld [vmem:[%s1414 + $0x13a] sm:$0xff]
        %v1828 = vld [vmem:[%s1414 + $0x142] sm:$0xff]
        %v1829 = vld [vmem:[%s1414 + $0x152] sm:$0xff]
        %v1830 = vld [vmem:[%s1414 + $0x15a] sm:$0xff]
        %v1831 = vld [vmem:[%s1414 + $0x16a] sm:$0xff]
        %v1832 = vld [vmem:[%s1414 + $0x172] sm:$0xff]
        %1865 = vrot.lane.b32.xlu0 %v1801, 64
        %v1866 = vpop.permute.xlu0 %1865
        %1867 = vrot.lane.b32.xlu0 %v1802, 64
        %v1868 = vpop.permute.xlu0 %1867
        %1869 = vrot.lane.b32.xlu0 %v1803, 64
        %v1870 = vpop.permute.xlu0 %1869
        %1871 = vrot.lane.b32.xlu0 %v1804, 64
        %v1872 = vpop.permute.xlu0 %1871
        %1873 = vrot.lane.b32.xlu0 %v1805, 64
        %v1874 = vpop.permute.xlu0 %1873
        %1875 = vrot.lane.b32.xlu0 %v1806, 64
        %v1876 = vpop.permute.xlu0 %1875
        %1877 = vrot.lane.b32.xlu0 %v1807, 64
        %v1878 = vpop.permute.xlu0 %1877
        %1879 = vrot.lane.b32.xlu0 %v1808, 64
        %v1880 = vpop.permute.xlu0 %1879
        %1881 = vrot.lane.b32.xlu0 %v1809, 64
        %v1882 = vpop.permute.xlu0 %1881
        %1883 = vrot.lane.b32.xlu0 %v1810, 64
        %v1884 = vpop.permute.xlu0 %1883
        %1885 = vrot.lane.b32.xlu0 %v1811, 64
        %v1886 = vpop.permute.xlu0 %1885
        %1887 = vrot.lane.b32.xlu0 %v1812, 64
        %v1888 = vpop.permute.xlu0 %1887
        %1889 = vrot.lane.b32.xlu0 %v1813, 64
        %v1890 = vpop.permute.xlu0 %1889
        %1891 = vrot.lane.b32.xlu0 %v1814, 64
        %v1892 = vpop.permute.xlu0 %1891
        %1893 = vrot.lane.b32.xlu0 %v1815, 64
        %v1894 = vpop.permute.xlu0 %1893
        %1895 = vrot.lane.b32.xlu0 %v1816, 64
        %v1896 = vpop.permute.xlu0 %1895
        %1897 = vrot.lane.b32.xlu0 %v1817, 64
        %v1898 = vpop.permute.xlu0 %1897
        %1899 = vrot.lane.b32.xlu0 %v1818, 64
        %v1900 = vpop.permute.xlu0 %1899
        %1901 = vrot.lane.b32.xlu0 %v1819, 64
        %v1902 = vpop.permute.xlu0 %1901
        %1903 = vrot.lane.b32.xlu0 %v1820, 64
        %v1904 = vpop.permute.xlu0 %1903
        %1905 = vrot.lane.b32.xlu0 %v1821, 64
        %v1906 = vpop.permute.xlu0 %1905
        %1907 = vrot.lane.b32.xlu0 %v1822, 64
        %v1908 = vpop.permute.xlu0 %1907
        %1909 = vrot.lane.b32.xlu0 %v1823, 64
        %v1910 = vpop.permute.xlu0 %1909
        %1911 = vrot.lane.b32.xlu0 %v1824, 64
        %v1912 = vpop.permute.xlu0 %1911
        %1913 = vrot.lane.b32.xlu0 %v1825, 64
        %v1914 = vpop.permute.xlu0 %1913
        %1915 = vrot.lane.b32.xlu0 %v1826, 64
        %v1916 = vpop.permute.xlu0 %1915
        %1917 = vrot.lane.b32.xlu0 %v1827, 64
        %v1918 = vpop.permute.xlu0 %1917
        %1919 = vrot.lane.b32.xlu0 %v1828, 64
        %v1920 = vpop.permute.xlu0 %1919
        %1921 = vrot.lane.b32.xlu0 %v1829, 64
        %v1922 = vpop.permute.xlu0 %1921
        %1923 = vrot.lane.b32.xlu0 %v1830, 64
        %v1924 = vpop.permute.xlu0 %1923
        %1925 = vrot.lane.b32.xlu0 %v1831, 64
        %v1926 = vpop.permute.xlu0 %1925
        %1927 = vrot.lane.b32.xlu0 %v1832, 64
        %v1928 = vpop.permute.xlu0 %1927
        %vm1961 = vcmask 589312
        %1962 = vst.msk [vmem:[#allocation3] sm:$0xff] %vm1961, %v1866
        %1963 = vst.msk [vmem:[#allocation3 + $0x8] sm:$0xff] %vm1961, %v1868
        %1964 = vst.msk [vmem:[#allocation3 + $0x10] sm:$0xff] %vm1961, %v1870
        %1965 = vst.msk [vmem:[#allocation3 + $0x18] sm:$0xff] %vm1961, %v1872
        %1966 = vst.msk [vmem:[#allocation3 + $0x20] sm:$0xff] %vm1961, %v1874
        %1967 = vst.msk [vmem:[#allocation3 + $0x28] sm:$0xff] %vm1961, %v1876
        %1968 = vst.msk [vmem:[#allocation3 + $0x30] sm:$0xff] %vm1961, %v1878
        %1969 = vst.msk [vmem:[#allocation3 + $0x38] sm:$0xff] %vm1961, %v1880
        %1970 = vst.msk [vmem:[#allocation3 + $0x40] sm:$0xff] %vm1961, %v1882
        %1971 = vst.msk [vmem:[#allocation3 + $0x48] sm:$0xff] %vm1961, %v1884
        %1972 = vst.msk [vmem:[#allocation3 + $0x50] sm:$0xff] %vm1961, %v1886
        %1973 = vst.msk [vmem:[#allocation3 + $0x58] sm:$0xff] %vm1961, %v1888
        %1974 = vst.msk [vmem:[#allocation3 + $0x60] sm:$0xff] %vm1961, %v1890
        %1975 = vst.msk [vmem:[#allocation3 + $0x68] sm:$0xff] %vm1961, %v1892
        %1976 = vst.msk [vmem:[#allocation3 + $0x70] sm:$0xff] %vm1961, %v1894
        %1977 = vst.msk [vmem:[#allocation3 + $0x78] sm:$0xff] %vm1961, %v1896
        %1978 = vst.msk [vmem:[#allocation3 + $0x80] sm:$0xff] %vm1961, %v1898
        %1979 = vst.msk [vmem:[#allocation3 + $0x88] sm:$0xff] %vm1961, %v1900
        %1980 = vst.msk [vmem:[#allocation3 + $0x90] sm:$0xff] %vm1961, %v1902
        %1981 = vst.msk [vmem:[#allocation3 + $0x98] sm:$0xff] %vm1961, %v1904
        %1982 = vst.msk [vmem:[#allocation3 + $0xa0] sm:$0xff] %vm1961, %v1906
        %1983 = vst.msk [vmem:[#allocation3 + $0xa8] sm:$0xff] %vm1961, %v1908
        %1984 = vst.msk [vmem:[#allocation3 + $0xb0] sm:$0xff] %vm1961, %v1910
        %1985 = vst.msk [vmem:[#allocation3 + $0xb8] sm:$0xff] %vm1961, %v1912
        %1986 = vst.msk [vmem:[#allocation3 + $0xc0] sm:$0xff] %vm1961, %v1914
        %1987 = vst.msk [vmem:[#allocation3 + $0xc8] sm:$0xff] %vm1961, %v1916
        %1988 = vst.msk [vmem:[#allocation3 + $0xd0] sm:$0xff] %vm1961, %v1918
        %1989 = vst.msk [vmem:[#allocation3 + $0xd8] sm:$0xff] %vm1961, %v1920
        %1990 = vst.msk [vmem:[#allocation3 + $0xe0] sm:$0xff] %vm1961, %v1922
        %1991 = vst.msk [vmem:[#allocation3 + $0xe8] sm:$0xff] %vm1961, %v1924
        %1992 = vst.msk [vmem:[#allocation3 + $0xf0] sm:$0xff] %vm1961, %v1926
        %1993 = vst.msk [vmem:[#allocation3 + $0xf8] sm:$0xff] %vm1961, %v1928
        %v1994 = vld [vmem:[#allocation3] sm:$0xff]
        %v1995 = vld [vmem:[#allocation3 + $0x8] sm:$0xff]
        %v1996 = vld [vmem:[#allocation3 + $0x10] sm:$0xff]
        %v1997 = vld [vmem:[#allocation3 + $0x18] sm:$0xff]
        %v1998 = vld [vmem:[#allocation3 + $0x20] sm:$0xff]
        %v1999 = vld [vmem:[#allocation3 + $0x28] sm:$0xff]
        %v2000 = vld [vmem:[#allocation3 + $0x30] sm:$0xff]
        %v2001 = vld [vmem:[#allocation3 + $0x38] sm:$0xff]
        %v2002 = vld [vmem:[#allocation3 + $0x40] sm:$0xff]
        %v2003 = vld [vmem:[#allocation3 + $0x48] sm:$0xff]
        %v2004 = vld [vmem:[#allocation3 + $0x50] sm:$0xff]
        %v2005 = vld [vmem:[#allocation3 + $0x58] sm:$0xff]
        %v2006 = vld [vmem:[#allocation3 + $0x60] sm:$0xff]
        %v2007 = vld [vmem:[#allocation3 + $0x68] sm:$0xff]
        %v2008 = vld [vmem:[#allocation3 + $0x70] sm:$0xff]
        %v2009 = vld [vmem:[#allocation3 + $0x78] sm:$0xff]
        %v2010 = vld [vmem:[#allocation3 + $0x80] sm:$0xff]
        %v2011 = vld [vmem:[#allocation3 + $0x88] sm:$0xff]
        %v2012 = vld [vmem:[#allocation3 + $0x90] sm:$0xff]
        %v2013 = vld [vmem:[#allocation3 + $0x98] sm:$0xff]
        %v2014 = vld [vmem:[#allocation3 + $0xa0] sm:$0xff]
        %v2015 = vld [vmem:[#allocation3 + $0xa8] sm:$0xff]
        %v2016 = vld [vmem:[#allocation3 + $0xb0] sm:$0xff]
        %v2017 = vld [vmem:[#allocation3 + $0xb8] sm:$0xff]
        %v2018 = vld [vmem:[#allocation3 + $0xc0] sm:$0xff]
        %v2019 = vld [vmem:[#allocation3 + $0xc8] sm:$0xff]
        %v2020 = vld [vmem:[#allocation3 + $0xd0] sm:$0xff]
        %v2021 = vld [vmem:[#allocation3 + $0xd8] sm:$0xff]
        %v2022 = vld [vmem:[#allocation3 + $0xe0] sm:$0xff]
        %v2023 = vld [vmem:[#allocation3 + $0xe8] sm:$0xff]
        %v2024 = vld [vmem:[#allocation3 + $0xf0] sm:$0xff]
        %v2025 = vld [vmem:[#allocation3 + $0xf8] sm:$0xff]
        %v2026 = vpack.c.bf16 %v1995, %v1994
        %v2027 = vpack.c.bf16 %v1997, %v1996
        %v2028 = vpack.c.bf16 %v1999, %v1998
        %v2029 = vpack.c.bf16 %v2001, %v2000
        %v2030 = vpack.c.bf16 %v2003, %v2002
        %v2031 = vpack.c.bf16 %v2005, %v2004
        %v2032 = vpack.c.bf16 %v2007, %v2006
        %v2033 = vpack.c.bf16 %v2009, %v2008
        %v2034 = vpack.c.bf16 %v2011, %v2010
        %v2035 = vpack.c.bf16 %v2013, %v2012
        %v2036 = vpack.c.bf16 %v2015, %v2014
        %v2037 = vpack.c.bf16 %v2017, %v2016
        %v2038 = vpack.c.bf16 %v2019, %v2018
        %v2039 = vpack.c.bf16 %v2021, %v2020
        %v2040 = vpack.c.bf16 %v2023, %v2022
        %v2041 = vpack.c.bf16 %v2025, %v2024
        %v2043 = vlaneseq
        %v2044 = vshrl.u32 %v2043, 7
        %v2045 = vsub.s32 0, %v2044
        %v2046 = vrot.slane %v384, %v2045
        %v2057 = vunpack.c.l.b16 %v375
        %v2058 = vunpack.c.l.b16 %v376
        %v2059 = vunpack.c.l.b16 %v377
        %v2060 = vunpack.c.l.b16 %v378
        %v2061 = vunpack.c.l.b16 %v379
        %v2062 = vunpack.c.l.b16 %v380
        %v2063 = vunpack.c.l.b16 %v381
        %v2064 = vunpack.c.l.b16 %v382
        %v2065 = vunpack.c.l.b16 %v383
        %v2066 = vpack.c.b16 %v2058, %v2057
        %v2067 = vpack.c.b16 %v2060, %v2059
        %v2068 = vpack.c.b16 %v2062, %v2061
        %v2069 = vpack.c.b16 %v2064, %v2063
        %v2070 = vpack.c.b16 %v2065, %v2065
        %vm2075 = vcmask 588800
        %v2077 = vsel %vm2075, %v2026, 0
        %v2080 = vsel %vm2075, %v2027, 0
        %v2083 = vsel %vm2075, %v2028, 0
        %v2086 = vsel %vm2075, %v2029, 0
        %v2089 = vsel %vm2075, %v2030, 0
        %v2092 = vsel %vm2075, %v2031, 0
        %v2095 = vsel %vm2075, %v2032, 0
        %v2098 = vsel %vm2075, %v2033, 0
        %v2101 = vsel %vm2075, %v2034, 0
        %v2104 = vsel %vm2075, %v2035, 0
        %v2107 = vsel %vm2075, %v2036, 0
        %v2110 = vsel %vm2075, %v2037, 0
        %v2113 = vsel %vm2075, %v2038, 0
        %v2116 = vsel %vm2075, %v2039, 0
        %v2119 = vsel %vm2075, %v2040, 0
        %v2122 = vsel %vm2075, %v2041, 0
        %vm2124 = vcmask 1043456
        %v2126 = vsel %vm2124, %v2070, 0
        %2128 = vmatprep.subr.bf16.mxu0 0
        %2129 = vmatpush1.bf16.msra.mxu0 %v2066
        %2130 = vmatprep.subr.bf16.mxu0 0
        %2131 = vmatpush1.bf16.msra.mxu0 %v2067
        %2132 = vmatprep.subr.bf16.mxu0 0
        %2133 = vmatpush1.bf16.msra.mxu0 %v2068
        %2134 = vmatprep.subr.bf16.mxu0 0
        %2135 = vmatpush1.bf16.msra.mxu0 %v2069
        %2136 = vmatprep.subr.bf16.mxu0 0
        %2137 = vmatpush1.bf16.msra.mxu0 %v2126
        %2138 = vmatprep.subr.bf16.mxu0 0
        %2139 = vmatpush1.bf16.msra.mxu0 0
        %2140 = vmatprep.subr.bf16.mxu0 0
        %2141 = vmatpush1.bf16.msra.mxu0 0
        %2142 = vmatprep.subr.bf16.mxu0 0
        %2143 = vmatpush1.bf16.msra.mxu0 0
        %2144 = vmatprep.subr.bf16.mxu0 0
        %2145 = vmatpush1.bf16.msra.mxu0 0
        %2146 = vmatprep.subr.bf16.mxu0 0
        %2147 = vmatpush1.bf16.msra.mxu0 0
        %2148 = vmatprep.subr.bf16.mxu0 0
        %2149 = vmatpush1.bf16.msra.mxu0 0
        %2150 = vmatprep.subr.bf16.mxu0 0
        %2151 = vmatpush1.bf16.msra.mxu0 0
        %2152 = vmatprep.subr.bf16.mxu0 0
        %2153 = vmatpush1.bf16.msra.mxu0 0
        %2154 = vmatprep.subr.bf16.mxu0 0
        %2155 = vmatpush1.bf16.msra.mxu0 0
        %2156 = vmatprep.subr.bf16.mxu0 0
        %2157 = vmatpush1.bf16.msra.mxu0 0
        %2158 = vmatprep.subr.bf16.mxu0 0
        %2159 = vmatpush1.bf16.msra.mxu0 0
        %2160 = vmatprep.mubr.bf16.mxu0 0
        %2161 = vmatmul.mubr.bf16.gmra.mrb[0].mxu0 %v2077
        %v2162 = vpop.f32.mrb[0].mxu0
        %v2163 = vadd.f32 %v2046, %v2162
        %v2164 = vpop.f32.mrb[0].mxu0
        %v2165 = vpop.f32.mrb[0].mxu0
        %v2166 = vadd.f32 %v2046, %v2165
        %v2167 = vpop.f32.mrb[0].mxu0
        %2168 = vmatprep.mubr.bf16.mxu0 0
        %2169 = vmatmul.mubr.bf16.gmra.mrb[0].mxu0 %v2080
        %v2170 = vpop.f32.mrb[0].mxu0
        %v2171 = vadd.f32 %v2046, %v2170
        %v2172 = vpop.f32.mrb[0].mxu0
        %v2173 = vpop.f32.mrb[0].mxu0
        %v2174 = vadd.f32 %v2046, %v2173
        %v2175 = vpop.f32.mrb[0].mxu0
        %2176 = vmatprep.mubr.bf16.mxu0 0
        %2177 = vmatmul.mubr.bf16.gmra.mrb[0].mxu0 %v2083
        %v2178 = vpop.f32.mrb[0].mxu0
        %v2179 = vadd.f32 %v2046, %v2178
        %v2180 = vpop.f32.mrb[0].mxu0
        %v2181 = vpop.f32.mrb[0].mxu0
        %v2182 = vadd.f32 %v2046, %v2181
        %v2183 = vpop.f32.mrb[0].mxu0
        %2184 = vmatprep.mubr.bf16.mxu0 0
        %2185 = vmatmul.mubr.bf16.gmra.mrb[0].mxu0 %v2086
        %v2186 = vpop.f32.mrb[0].mxu0
        %v2187 = vadd.f32 %v2046, %v2186
        %v2188 = vpop.f32.mrb[0].mxu0
        %v2189 = vpop.f32.mrb[0].mxu0
        %v2190 = vadd.f32 %v2046, %v2189
        %v2191 = vpop.f32.mrb[0].mxu0
        %2192 = vmatprep.mubr.bf16.mxu0 0
        %2193 = vmatmul.mubr.bf16.gmra.mrb[0].mxu0 %v2089
        %v2194 = vpop.f32.mrb[0].mxu0
        %v2195 = vadd.f32 %v2046, %v2194
        %v2196 = vpop.f32.mrb[0].mxu0
        %v2197 = vpop.f32.mrb[0].mxu0
        %v2198 = vadd.f32 %v2046, %v2197
        %v2199 = vpop.f32.mrb[0].mxu0
        %2200 = vmatprep.mubr.bf16.mxu0 0
        %2201 = vmatmul.mubr.bf16.gmra.mrb[0].mxu0 %v2092
        %v2202 = vpop.f32.mrb[0].mxu0
        %v2203 = vadd.f32 %v2046, %v2202
        %v2204 = vpop.f32.mrb[0].mxu0
        %v2205 = vpop.f32.mrb[0].mxu0
        %v2206 = vadd.f32 %v2046, %v2205
        %v2207 = vpop.f32.mrb[0].mxu0
        %2208 = vmatprep.mubr.bf16.mxu0 0
        %2209 = vmatmul.mubr.bf16.gmra.mrb[0].mxu0 %v2095
        %v2210 = vpop.f32.mrb[0].mxu0
        %v2211 = vadd.f32 %v2046, %v2210
        %v2212 = vpop.f32.mrb[0].mxu0
        %v2213 = vpop.f32.mrb[0].mxu0
        %v2214 = vadd.f32 %v2046, %v2213
        %v2215 = vpop.f32.mrb[0].mxu0
        %2216 = vmatprep.mubr.bf16.mxu0 0
        %2217 = vmatmul.mubr.bf16.gmra.mrb[0].mxu0 %v2098
        %v2218 = vpop.f32.mrb[0].mxu0
        %v2219 = vadd.f32 %v2046, %v2218
        %v2220 = vpop.f32.mrb[0].mxu0
        %v2221 = vpop.f32.mrb[0].mxu0
        %v2222 = vadd.f32 %v2046, %v2221
        %v2223 = vpop.f32.mrb[0].mxu0
        %2224 = vmatprep.mubr.bf16.mxu0 0
        %2225 = vmatmul.mubr.bf16.gmra.mrb[0].mxu0 %v2101
        %v2226 = vpop.f32.mrb[0].mxu0
        %v2227 = vadd.f32 %v2046, %v2226
        %v2228 = vpop.f32.mrb[0].mxu0
        %v2229 = vpop.f32.mrb[0].mxu0
        %v2230 = vadd.f32 %v2046, %v2229
        %v2231 = vpop.f32.mrb[0].mxu0
        %2232 = vmatprep.mubr.bf16.mxu0 0
        %2233 = vmatmul.mubr.bf16.gmra.mrb[0].mxu0 %v2104
        %v2234 = vpop.f32.mrb[0].mxu0
        %v2235 = vadd.f32 %v2046, %v2234
        %v2236 = vpop.f32.mrb[0].mxu0
        %v2237 = vpop.f32.mrb[0].mxu0
        %v2238 = vadd.f32 %v2046, %v2237
        %v2239 = vpop.f32.mrb[0].mxu0
        %2240 = vmatprep.mubr.bf16.mxu0 0
        %2241 = vmatmul.mubr.bf16.gmra.mrb[0].mxu0 %v2107
        %v2242 = vpop.f32.mrb[0].mxu0
        %v2243 = vadd.f32 %v2046, %v2242
        %v2244 = vpop.f32.mrb[0].mxu0
        %v2245 = vpop.f32.mrb[0].mxu0
        %v2246 = vadd.f32 %v2046, %v2245
        %v2247 = vpop.f32.mrb[0].mxu0
        %2248 = vmatprep.mubr.bf16.mxu0 0
        %2249 = vmatmul.mubr.bf16.gmra.mrb[0].mxu0 %v2110
        %v2250 = vpop.f32.mrb[0].mxu0
        %v2251 = vadd.f32 %v2046, %v2250
        %v2252 = vpop.f32.mrb[0].mxu0
        %v2253 = vpop.f32.mrb[0].mxu0
        %v2254 = vadd.f32 %v2046, %v2253
        %v2255 = vpop.f32.mrb[0].mxu0
        %2256 = vmatprep.mubr.bf16.mxu0 0
        %2257 = vmatmul.mubr.bf16.gmra.mrb[0].mxu0 %v2113
        %v2258 = vpop.f32.mrb[0].mxu0
        %v2259 = vadd.f32 %v2046, %v2258
        %v2260 = vpop.f32.mrb[0].mxu0
        %v2261 = vpop.f32.mrb[0].mxu0
        %v2262 = vadd.f32 %v2046, %v2261
        %v2263 = vpop.f32.mrb[0].mxu0
        %2264 = vmatprep.mubr.bf16.mxu0 0
        %2265 = vmatmul.mubr.bf16.gmra.mrb[0].mxu0 %v2116
        %v2266 = vpop.f32.mrb[0].mxu0
        %v2267 = vadd.f32 %v2046, %v2266
        %v2268 = vpop.f32.mrb[0].mxu0
        %v2269 = vpop.f32.mrb[0].mxu0
        %v2270 = vadd.f32 %v2046, %v2269
        %v2271 = vpop.f32.mrb[0].mxu0
        %2272 = vmatprep.mubr.bf16.mxu0 0
        %2273 = vmatmul.mubr.bf16.gmra.mrb[0].mxu0 %v2119
        %v2274 = vpop.f32.mrb[0].mxu0
        %v2275 = vadd.f32 %v2046, %v2274
        %v2276 = vpop.f32.mrb[0].mxu0
        %v2277 = vpop.f32.mrb[0].mxu0
        %v2278 = vadd.f32 %v2046, %v2277
        %v2279 = vpop.f32.mrb[0].mxu0
        %2280 = vmatprep.mubr.bf16.mxu0 0
        %2281 = vmatmul.mubr.bf16.gmra.mrb[0].mxu0 %v2122
        %v2282 = vpop.f32.mrb[0].mxu0
        %v2283 = vadd.f32 %v2046, %v2282
        %v2284 = vpop.f32.mrb[0].mxu0
        %v2285 = vpop.f32.mrb[0].mxu0
        %v2286 = vadd.f32 %v2046, %v2285
        %v2287 = vpop.f32.mrb[0].mxu0
        %2288 = vdwg.mxu0
        %v2289 = vmax.f32 %v2163, 0.0
        %v2290 = vmax.f32 %v2166, 0.0
        %v2291 = vmax.f32 %v2171, 0.0
        %v2292 = vmax.f32 %v2174, 0.0
        %v2293 = vmax.f32 %v2179, 0.0
        %v2294 = vmax.f32 %v2182, 0.0
        %v2295 = vmax.f32 %v2187, 0.0
        %v2296 = vmax.f32 %v2190, 0.0
        %v2297 = vmax.f32 %v2195, 0.0
        %v2298 = vmax.f32 %v2198, 0.0
        %v2299 = vmax.f32 %v2203, 0.0
        %v2300 = vmax.f32 %v2206, 0.0
        %v2301 = vmax.f32 %v2211, 0.0
        %v2302 = vmax.f32 %v2214, 0.0
        %v2303 = vmax.f32 %v2219, 0.0
        %v2304 = vmax.f32 %v2222, 0.0
        %v2305 = vmax.f32 %v2227, 0.0
        %v2306 = vmax.f32 %v2230, 0.0
        %v2307 = vmax.f32 %v2235, 0.0
        %v2308 = vmax.f32 %v2238, 0.0
        %v2309 = vmax.f32 %v2243, 0.0
        %v2310 = vmax.f32 %v2246, 0.0
        %v2311 = vmax.f32 %v2251, 0.0
        %v2312 = vmax.f32 %v2254, 0.0
        %v2313 = vmax.f32 %v2259, 0.0
        %v2314 = vmax.f32 %v2262, 0.0
        %v2315 = vmax.f32 %v2267, 0.0
        %v2316 = vmax.f32 %v2270, 0.0
        %v2317 = vmax.f32 %v2275, 0.0
        %v2318 = vmax.f32 %v2278, 0.0
        %v2319 = vmax.f32 %v2283, 0.0
        %v2320 = vmax.f32 %v2286, 0.0
        %2321 = vst.msk [vmem:[%s342 + $0x1] sm:$0xff] %vm264, %v2289
        %2322 = vst.msk [vmem:[%s342 + $0x9] sm:$0xff] %vm264, %v2290
        %2323 = vst.msk [vmem:[%s342 + $0x19] sm:$0xff] %vm264, %v2291
        %2324 = vst.msk [vmem:[%s342 + $0x21] sm:$0xff] %vm264, %v2292
        %2325 = vst.msk [vmem:[%s342 + $0x31] sm:$0xff] %vm264, %v2293
        %2326 = vst.msk [vmem:[%s342 + $0x39] sm:$0xff] %vm264, %v2294
        %2327 = vst.msk [vmem:[%s342 + $0x49] sm:$0xff] %vm264, %v2295
        %2328 = vst.msk [vmem:[%s342 + $0x51] sm:$0xff] %vm264, %v2296
        %2329 = vst.msk [vmem:[%s342 + $0x61] sm:$0xff] %vm264, %v2297
        %2330 = vst.msk [vmem:[%s342 + $0x69] sm:$0xff] %vm264, %v2298
        %2331 = vst.msk [vmem:[%s342 + $0x79] sm:$0xff] %vm264, %v2299
        %2332 = vst.msk [vmem:[%s342 + $0x81] sm:$0xff] %vm264, %v2300
        %2333 = vst.msk [vmem:[%s342 + $0x91] sm:$0xff] %vm264, %v2301
        %2334 = vst.msk [vmem:[%s342 + $0x99] sm:$0xff] %vm264, %v2302
        %2335 = vst.msk [vmem:[%s342 + $0xa9] sm:$0xff] %vm264, %v2303
        %2336 = vst.msk [vmem:[%s342 + $0xb1] sm:$0xff] %vm264, %v2304
        %2337 = vst.msk [vmem:[%s342 + $0xc1] sm:$0xff] %vm264, %v2305
        %2338 = vst.msk [vmem:[%s342 + $0xc9] sm:$0xff] %vm264, %v2306
        %2339 = vst.msk [vmem:[%s342 + $0xd9] sm:$0xff] %vm264, %v2307
        %2340 = vst.msk [vmem:[%s342 + $0xe1] sm:$0xff] %vm264, %v2308
        %2341 = vst.msk [vmem:[%s342 + $0xf1] sm:$0xff] %vm264, %v2309
        %2342 = vst.msk [vmem:[%s342 + $0xf9] sm:$0xff] %vm264, %v2310
        %2343 = vst.msk [vmem:[%s342 + $0x109] sm:$0xff] %vm264, %v2311
        %2344 = vst.msk [vmem:[%s342 + $0x111] sm:$0xff] %vm264, %v2312
        %2345 = vst.msk [vmem:[%s342 + $0x121] sm:$0xff] %vm264, %v2313
        %2346 = vst.msk [vmem:[%s342 + $0x129] sm:$0xff] %vm264, %v2314
        %2347 = vst.msk [vmem:[%s342 + $0x139] sm:$0xff] %vm264, %v2315
        %2348 = vst.msk [vmem:[%s342 + $0x141] sm:$0xff] %vm264, %v2316
        %2349 = vst.msk [vmem:[%s342 + $0x151] sm:$0xff] %vm264, %v2317
        %2350 = vst.msk [vmem:[%s342 + $0x159] sm:$0xff] %vm264, %v2318
        %2351 = vst.msk [vmem:[%s342 + $0x169] sm:$0xff] %vm264, %v2319
        %2352 = vst.msk [vmem:[%s342 + $0x171] sm:$0xff] %vm264, %v2320
        %v2353 = vld [vmem:[%s3] sm:$0xf]
        %v2354 = vld [vmem:[%s3 + $0x4] sm:$0xf]
        %v2355 = vld [vmem:[%s3 + $0x8] sm:$0xf]
        %v2356 = vld [vmem:[%s3 + $0xc] sm:$0xf]
        %v2357 = vld [vmem:[%s3 + $0x10] sm:$0xf]
        %v2358 = vld [vmem:[%s3 + $0x14] sm:$0xf]
        %v2359 = vld [vmem:[%s3 + $0x18] sm:$0xf]
        %v2360 = vld [vmem:[%s3 + $0x1c] sm:$0xf]
        %v2361 = vld [vmem:[%s3 + $0x20] sm:$0xf]
        %v2362 = vld [vmem:[%s4] sm:$0x1]
        %v2363 = vld [vmem:[#allocation2] sm:$0xff]
        %v2364 = vld [vmem:[#allocation2 + $0x8] sm:$0xff]
        %v2365 = vld [vmem:[#allocation2 + $0x18] sm:$0xff]
        %v2366 = vld [vmem:[#allocation2 + $0x20] sm:$0xff]
        %v2367 = vld [vmem:[#allocation2 + $0x30] sm:$0xff]
        %v2368 = vld [vmem:[#allocation2 + $0x38] sm:$0xff]
        %v2369 = vld [vmem:[#allocation2 + $0x48] sm:$0xff]
        %v2370 = vld [vmem:[#allocation2 + $0x50] sm:$0xff]
        %v2371 = vld [vmem:[#allocation2 + $0x60] sm:$0xff]
        %v2372 = vld [vmem:[#allocation2 + $0x68] sm:$0xff]
        %v2373 = vld [vmem:[#allocation2 + $0x78] sm:$0xff]
        %v2374 = vld [vmem:[#allocation2 + $0x80] sm:$0xff]
        %v2375 = vld [vmem:[#allocation2 + $0x90] sm:$0xff]
        %v2376 = vld [vmem:[#allocation2 + $0x98] sm:$0xff]
        %v2377 = vld [vmem:[#allocation2 + $0xa8] sm:$0xff]
        %v2378 = vld [vmem:[#allocation2 + $0xb0] sm:$0xff]
        %v2379 = vld [vmem:[#allocation2 + $0xc0] sm:$0xff]
        %v2380 = vld [vmem:[#allocation2 + $0xc8] sm:$0xff]
        %v2381 = vld [vmem:[#allocation2 + $0xd8] sm:$0xff]
        %v2382 = vld [vmem:[#allocation2 + $0xe0] sm:$0xff]
        %v2383 = vld [vmem:[#allocation2 + $0xf0] sm:$0xff]
        %v2384 = vld [vmem:[#allocation2 + $0xf8] sm:$0xff]
        %v2385 = vld [vmem:[#allocation2 + $0x108] sm:$0xff]
        %v2386 = vld [vmem:[#allocation2 + $0x110] sm:$0xff]
        %v2387 = vld [vmem:[#allocation2 + $0x120] sm:$0xff]
        %v2388 = vld [vmem:[#allocation2 + $0x128] sm:$0xff]
        %v2389 = vld [vmem:[#allocation2 + $0x138] sm:$0xff]
        %v2390 = vld [vmem:[#allocation2 + $0x140] sm:$0xff]
        %v2391 = vld [vmem:[#allocation2 + $0x150] sm:$0xff]
        %v2392 = vld [vmem:[#allocation2 + $0x158] sm:$0xff]
        %v2393 = vld [vmem:[#allocation2 + $0x168] sm:$0xff]
        %v2394 = vld [vmem:[#allocation2 + $0x170] sm:$0xff]
        %2395 = vst.msk [vmem:[#allocation3] sm:$0xff] %vm264, %v2363
        %2396 = vst.msk [vmem:[#allocation3 + $0x8] sm:$0xff] %vm264, %v2364
        %2397 = vst.msk [vmem:[#allocation3 + $0x10] sm:$0xff] %vm264, %v2365
        %2398 = vst.msk [vmem:[#allocation3 + $0x18] sm:$0xff] %vm264, %v2366
        %2399 = vst.msk [vmem:[#allocation3 + $0x20] sm:$0xff] %vm264, %v2367
        %2400 = vst.msk [vmem:[#allocation3 + $0x28] sm:$0xff] %vm264, %v2368
        %2401 = vst.msk [vmem:[#allocation3 + $0x30] sm:$0xff] %vm264, %v2369
        %2402 = vst.msk [vmem:[#allocation3 + $0x38] sm:$0xff] %vm264, %v2370
        %2403 = vst.msk [vmem:[#allocation3 + $0x40] sm:$0xff] %vm264, %v2371
        %2404 = vst.msk [vmem:[#allocation3 + $0x48] sm:$0xff] %vm264, %v2372
        %2405 = vst.msk [vmem:[#allocation3 + $0x50] sm:$0xff] %vm264, %v2373
        %2406 = vst.msk [vmem:[#allocation3 + $0x58] sm:$0xff] %vm264, %v2374
        %2407 = vst.msk [vmem:[#allocation3 + $0x60] sm:$0xff] %vm264, %v2375
        %2408 = vst.msk [vmem:[#allocation3 + $0x68] sm:$0xff] %vm264, %v2376
        %2409 = vst.msk [vmem:[#allocation3 + $0x70] sm:$0xff] %vm264, %v2377
        %2410 = vst.msk [vmem:[#allocation3 + $0x78] sm:$0xff] %vm264, %v2378
        %2411 = vst.msk [vmem:[#allocation3 + $0x80] sm:$0xff] %vm264, %v2379
        %2412 = vst.msk [vmem:[#allocation3 + $0x88] sm:$0xff] %vm264, %v2380
        %2413 = vst.msk [vmem:[#allocation3 + $0x90] sm:$0xff] %vm264, %v2381
        %2414 = vst.msk [vmem:[#allocation3 + $0x98] sm:$0xff] %vm264, %v2382
        %2415 = vst.msk [vmem:[#allocation3 + $0xa0] sm:$0xff] %vm264, %v2383
        %2416 = vst.msk [vmem:[#allocation3 + $0xa8] sm:$0xff] %vm264, %v2384
        %2417 = vst.msk [vmem:[#allocation3 + $0xb0] sm:$0xff] %vm264, %v2385
        %2418 = vst.msk [vmem:[#allocation3 + $0xb8] sm:$0xff] %vm264, %v2386
        %2419 = vst.msk [vmem:[#allocation3 + $0xc0] sm:$0xff] %vm264, %v2387
        %2420 = vst.msk [vmem:[#allocation3 + $0xc8] sm:$0xff] %vm264, %v2388
        %2421 = vst.msk [vmem:[#allocation3 + $0xd0] sm:$0xff] %vm264, %v2389
        %2422 = vst.msk [vmem:[#allocation3 + $0xd8] sm:$0xff] %vm264, %v2390
        %2423 = vst.msk [vmem:[#allocation3 + $0xe0] sm:$0xff] %vm264, %v2391
        %2424 = vst.msk [vmem:[#allocation3 + $0xe8] sm:$0xff] %vm264, %v2392
        %2425 = vst.msk [vmem:[#allocation3 + $0xf0] sm:$0xff] %vm264, %v2393
        %2426 = vst.msk [vmem:[#allocation3 + $0xf8] sm:$0xff] %vm264, %v2394
        %v2427 = vld [vmem:[#allocation2 + $0x1] sm:$0xff]
        %v2428 = vld [vmem:[#allocation2 + $0x9] sm:$0xff]
        %v2429 = vld [vmem:[#allocation2 + $0x19] sm:$0xff]
        %v2430 = vld [vmem:[#allocation2 + $0x21] sm:$0xff]
        %v2431 = vld [vmem:[#allocation2 + $0x31] sm:$0xff]
        %v2432 = vld [vmem:[#allocation2 + $0x39] sm:$0xff]
        %v2433 = vld [vmem:[#allocation2 + $0x49] sm:$0xff]
        %v2434 = vld [vmem:[#allocation2 + $0x51] sm:$0xff]
        %v2435 = vld [vmem:[#allocation2 + $0x61] sm:$0xff]
        %v2436 = vld [vmem:[#allocation2 + $0x69] sm:$0xff]
        %v2437 = vld [vmem:[#allocation2 + $0x79] sm:$0xff]
        %v2438 = vld [vmem:[#allocation2 + $0x81] sm:$0xff]
        %v2439 = vld [vmem:[#allocation2 + $0x91] sm:$0xff]
        %v2440 = vld [vmem:[#allocation2 + $0x99] sm:$0xff]
        %v2441 = vld [vmem:[#allocation2 + $0xa9] sm:$0xff]
        %v2442 = vld [vmem:[#allocation2 + $0xb1] sm:$0xff]
        %v2443 = vld [vmem:[#allocation2 + $0xc1] sm:$0xff]
        %v2444 = vld [vmem:[#allocation2 + $0xc9] sm:$0xff]
        %v2445 = vld [vmem:[#allocation2 + $0xd9] sm:$0xff]
        %v2446 = vld [vmem:[#allocation2 + $0xe1] sm:$0xff]
        %v2447 = vld [vmem:[#allocation2 + $0xf1] sm:$0xff]
        %v2448 = vld [vmem:[#allocation2 + $0xf9] sm:$0xff]
        %v2449 = vld [vmem:[#allocation2 + $0x109] sm:$0xff]
        %v2450 = vld [vmem:[#allocation2 + $0x111] sm:$0xff]
        %v2451 = vld [vmem:[#allocation2 + $0x121] sm:$0xff]
        %v2452 = vld [vmem:[#allocation2 + $0x129] sm:$0xff]
        %v2453 = vld [vmem:[#allocation2 + $0x139] sm:$0xff]
        %v2454 = vld [vmem:[#allocation2 + $0x141] sm:$0xff]
        %v2455 = vld [vmem:[#allocation2 + $0x151] sm:$0xff]
        %v2456 = vld [vmem:[#allocation2 + $0x159] sm:$0xff]
        %v2457 = vld [vmem:[#allocation2 + $0x169] sm:$0xff]
        %v2458 = vld [vmem:[#allocation2 + $0x171] sm:$0xff]
        %2491 = vrot.lane.b32.xlu0 %v2427, 8
        %v2492 = vpop.permute.xlu0 %2491
        %2493 = vrot.lane.b32.xlu0 %v2428, 8
        %v2494 = vpop.permute.xlu0 %2493
        %2495 = vrot.lane.b32.xlu0 %v2429, 8
        %v2496 = vpop.permute.xlu0 %2495
        %2497 = vrot.lane.b32.xlu0 %v2430, 8
        %v2498 = vpop.permute.xlu0 %2497
        %2499 = vrot.lane.b32.xlu0 %v2431, 8
        %v2500 = vpop.permute.xlu0 %2499
        %2501 = vrot.lane.b32.xlu0 %v2432, 8
        %v2502 = vpop.permute.xlu0 %2501
        %2503 = vrot.lane.b32.xlu0 %v2433, 8
        %v2504 = vpop.permute.xlu0 %2503
        %2505 = vrot.lane.b32.xlu0 %v2434, 8
        %v2506 = vpop.permute.xlu0 %2505
        %2507 = vrot.lane.b32.xlu0 %v2435, 8
        %v2508 = vpop.permute.xlu0 %2507
        %2509 = vrot.lane.b32.xlu0 %v2436, 8
        %v2510 = vpop.permute.xlu0 %2509
        %2511 = vrot.lane.b32.xlu0 %v2437, 8
        %v2512 = vpop.permute.xlu0 %2511
        %2513 = vrot.lane.b32.xlu0 %v2438, 8
        %v2514 = vpop.permute.xlu0 %2513
        %2515 = vrot.lane.b32.xlu0 %v2439, 8
        %v2516 = vpop.permute.xlu0 %2515
        %2517 = vrot.lane.b32.xlu0 %v2440, 8
        %v2518 = vpop.permute.xlu0 %2517
        %2519 = vrot.lane.b32.xlu0 %v2441, 8
        %v2520 = vpop.permute.xlu0 %2519
        %2521 = vrot.lane.b32.xlu0 %v2442, 8
        %v2522 = vpop.permute.xlu0 %2521
        %2523 = vrot.lane.b32.xlu0 %v2443, 8
        %v2524 = vpop.permute.xlu0 %2523
        %2525 = vrot.lane.b32.xlu0 %v2444, 8
        %v2526 = vpop.permute.xlu0 %2525
        %2527 = vrot.lane.b32.xlu0 %v2445, 8
        %v2528 = vpop.permute.xlu0 %2527
        %2529 = vrot.lane.b32.xlu0 %v2446, 8
        %v2530 = vpop.permute.xlu0 %2529
        %2531 = vrot.lane.b32.xlu0 %v2447, 8
        %v2532 = vpop.permute.xlu0 %2531
        %2533 = vrot.lane.b32.xlu0 %v2448, 8
        %v2534 = vpop.permute.xlu0 %2533
        %2535 = vrot.lane.b32.xlu0 %v2449, 8
        %v2536 = vpop.permute.xlu0 %2535
        %2537 = vrot.lane.b32.xlu0 %v2450, 8
        %v2538 = vpop.permute.xlu0 %2537
        %2539 = vrot.lane.b32.xlu0 %v2451, 8
        %v2540 = vpop.permute.xlu0 %2539
        %2541 = vrot.lane.b32.xlu0 %v2452, 8
        %v2542 = vpop.permute.xlu0 %2541
        %2543 = vrot.lane.b32.xlu0 %v2453, 8
        %v2544 = vpop.permute.xlu0 %2543
        %2545 = vrot.lane.b32.xlu0 %v2454, 8
        %v2546 = vpop.permute.xlu0 %2545
        %2547 = vrot.lane.b32.xlu0 %v2455, 8
        %v2548 = vpop.permute.xlu0 %2547
        %2549 = vrot.lane.b32.xlu0 %v2456, 8
        %v2550 = vpop.permute.xlu0 %2549
        %2551 = vrot.lane.b32.xlu0 %v2457, 8
        %v2552 = vpop.permute.xlu0 %2551
        %2553 = vrot.lane.b32.xlu0 %v2458, 8
        %v2554 = vpop.permute.xlu0 %2553
        %2587 = vst.msk [vmem:[#allocation3] sm:$0xff] %vm609, %v2492
        %2588 = vst.msk [vmem:[#allocation3 + $0x8] sm:$0xff] %vm609, %v2494
        %2589 = vst.msk [vmem:[#allocation3 + $0x10] sm:$0xff] %vm609, %v2496
        %2590 = vst.msk [vmem:[#allocation3 + $0x18] sm:$0xff] %vm609, %v2498
        %2591 = vst.msk [vmem:[#allocation3 + $0x20] sm:$0xff] %vm609, %v2500
        %2592 = vst.msk [vmem:[#allocation3 + $0x28] sm:$0xff] %vm609, %v2502
        %2593 = vst.msk [vmem:[#allocation3 + $0x30] sm:$0xff] %vm609, %v2504
        %2594 = vst.msk [vmem:[#allocation3 + $0x38] sm:$0xff] %vm609, %v2506
        %2595 = vst.msk [vmem:[#allocation3 + $0x40] sm:$0xff] %vm609, %v2508
        %2596 = vst.msk [vmem:[#allocation3 + $0x48] sm:$0xff] %vm609, %v2510
        %2597 = vst.msk [vmem:[#allocation3 + $0x50] sm:$0xff] %vm609, %v2512
        %2598 = vst.msk [vmem:[#allocation3 + $0x58] sm:$0xff] %vm609, %v2514
        %2599 = vst.msk [vmem:[#allocation3 + $0x60] sm:$0xff] %vm609, %v2516
        %2600 = vst.msk [vmem:[#allocation3 + $0x68] sm:$0xff] %vm609, %v2518
        %2601 = vst.msk [vmem:[#allocation3 + $0x70] sm:$0xff] %vm609, %v2520
        %2602 = vst.msk [vmem:[#allocation3 + $0x78] sm:$0xff] %vm609, %v2522
        %2603 = vst.msk [vmem:[#allocation3 + $0x80] sm:$0xff] %vm609, %v2524
        %2604 = vst.msk [vmem:[#allocation3 + $0x88] sm:$0xff] %vm609, %v2526
        %2605 = vst.msk [vmem:[#allocation3 + $0x90] sm:$0xff] %vm609, %v2528
        %2606 = vst.msk [vmem:[#allocation3 + $0x98] sm:$0xff] %vm609, %v2530
        %2607 = vst.msk [vmem:[#allocation3 + $0xa0] sm:$0xff] %vm609, %v2532
        %2608 = vst.msk [vmem:[#allocation3 + $0xa8] sm:$0xff] %vm609, %v2534
        %2609 = vst.msk [vmem:[#allocation3 + $0xb0] sm:$0xff] %vm609, %v2536
        %2610 = vst.msk [vmem:[#allocation3 + $0xb8] sm:$0xff] %vm609, %v2538
        %2611 = vst.msk [vmem:[#allocation3 + $0xc0] sm:$0xff] %vm609, %v2540
        %2612 = vst.msk [vmem:[#allocation3 + $0xc8] sm:$0xff] %vm609, %v2542
        %2613 = vst.msk [vmem:[#allocation3 + $0xd0] sm:$0xff] %vm609, %v2544
        %2614 = vst.msk [vmem:[#allocation3 + $0xd8] sm:$0xff] %vm609, %v2546
        %2615 = vst.msk [vmem:[#allocation3 + $0xe0] sm:$0xff] %vm609, %v2548
        %2616 = vst.msk [vmem:[#allocation3 + $0xe8] sm:$0xff] %vm609, %v2550
        %2617 = vst.msk [vmem:[#allocation3 + $0xf0] sm:$0xff] %vm609, %v2552
        %2618 = vst.msk [vmem:[#allocation3 + $0xf8] sm:$0xff] %vm609, %v2554
        %v2619 = vld [vmem:[#allocation2 + $0x2] sm:$0xff]
        %v2620 = vld [vmem:[#allocation2 + $0xa] sm:$0xff]
        %v2621 = vld [vmem:[#allocation2 + $0x1a] sm:$0xff]
        %v2622 = vld [vmem:[#allocation2 + $0x22] sm:$0xff]
        %v2623 = vld [vmem:[#allocation2 + $0x32] sm:$0xff]
        %v2624 = vld [vmem:[#allocation2 + $0x3a] sm:$0xff]
        %v2625 = vld [vmem:[#allocation2 + $0x4a] sm:$0xff]
        %v2626 = vld [vmem:[#allocation2 + $0x52] sm:$0xff]
        %v2627 = vld [vmem:[#allocation2 + $0x62] sm:$0xff]
        %v2628 = vld [vmem:[#allocation2 + $0x6a] sm:$0xff]
        %v2629 = vld [vmem:[#allocation2 + $0x7a] sm:$0xff]
        %v2630 = vld [vmem:[#allocation2 + $0x82] sm:$0xff]
        %v2631 = vld [vmem:[#allocation2 + $0x92] sm:$0xff]
        %v2632 = vld [vmem:[#allocation2 + $0x9a] sm:$0xff]
        %v2633 = vld [vmem:[#allocation2 + $0xaa] sm:$0xff]
        %v2634 = vld [vmem:[#allocation2 + $0xb2] sm:$0xff]
        %v2635 = vld [vmem:[#allocation2 + $0xc2] sm:$0xff]
        %v2636 = vld [vmem:[#allocation2 + $0xca] sm:$0xff]
        %v2637 = vld [vmem:[#allocation2 + $0xda] sm:$0xff]
        %v2638 = vld [vmem:[#allocation2 + $0xe2] sm:$0xff]
        %v2639 = vld [vmem:[#allocation2 + $0xf2] sm:$0xff]
        %v2640 = vld [vmem:[#allocation2 + $0xfa] sm:$0xff]
        %v2641 = vld [vmem:[#allocation2 + $0x10a] sm:$0xff]
        %v2642 = vld [vmem:[#allocation2 + $0x112] sm:$0xff]
        %v2643 = vld [vmem:[#allocation2 + $0x122] sm:$0xff]
        %v2644 = vld [vmem:[#allocation2 + $0x12a] sm:$0xff]
        %v2645 = vld [vmem:[#allocation2 + $0x13a] sm:$0xff]
        %v2646 = vld [vmem:[#allocation2 + $0x142] sm:$0xff]
        %v2647 = vld [vmem:[#allocation2 + $0x152] sm:$0xff]
        %v2648 = vld [vmem:[#allocation2 + $0x15a] sm:$0xff]
        %v2649 = vld [vmem:[#allocation2 + $0x16a] sm:$0xff]
        %v2650 = vld [vmem:[#allocation2 + $0x172] sm:$0xff]
        %2683 = vrot.lane.b32.xlu0 %v2619, 16
        %v2684 = vpop.permute.xlu0 %2683
        %2685 = vrot.lane.b32.xlu0 %v2620, 16
        %v2686 = vpop.permute.xlu0 %2685
        %2687 = vrot.lane.b32.xlu0 %v2621, 16
        %v2688 = vpop.permute.xlu0 %2687
        %2689 = vrot.lane.b32.xlu0 %v2622, 16
        %v2690 = vpop.permute.xlu0 %2689
        %2691 = vrot.lane.b32.xlu0 %v2623, 16
        %v2692 = vpop.permute.xlu0 %2691
        %2693 = vrot.lane.b32.xlu0 %v2624, 16
        %v2694 = vpop.permute.xlu0 %2693
        %2695 = vrot.lane.b32.xlu0 %v2625, 16
        %v2696 = vpop.permute.xlu0 %2695
        %2697 = vrot.lane.b32.xlu0 %v2626, 16
        %v2698 = vpop.permute.xlu0 %2697
        %2699 = vrot.lane.b32.xlu0 %v2627, 16
        %v2700 = vpop.permute.xlu0 %2699
        %2701 = vrot.lane.b32.xlu0 %v2628, 16
        %v2702 = vpop.permute.xlu0 %2701
        %2703 = vrot.lane.b32.xlu0 %v2629, 16
        %v2704 = vpop.permute.xlu0 %2703
        %2705 = vrot.lane.b32.xlu0 %v2630, 16
        %v2706 = vpop.permute.xlu0 %2705
        %2707 = vrot.lane.b32.xlu0 %v2631, 16
        %v2708 = vpop.permute.xlu0 %2707
        %2709 = vrot.lane.b32.xlu0 %v2632, 16
        %v2710 = vpop.permute.xlu0 %2709
        %2711 = vrot.lane.b32.xlu0 %v2633, 16
        %v2712 = vpop.permute.xlu0 %2711
        %2713 = vrot.lane.b32.xlu0 %v2634, 16
        %v2714 = vpop.permute.xlu0 %2713
        %2715 = vrot.lane.b32.xlu0 %v2635, 16
        %v2716 = vpop.permute.xlu0 %2715
        %2717 = vrot.lane.b32.xlu0 %v2636, 16
        %v2718 = vpop.permute.xlu0 %2717
        %2719 = vrot.lane.b32.xlu0 %v2637, 16
        %v2720 = vpop.permute.xlu0 %2719
        %2721 = vrot.lane.b32.xlu0 %v2638, 16
        %v2722 = vpop.permute.xlu0 %2721
        %2723 = vrot.lane.b32.xlu0 %v2639, 16
        %v2724 = vpop.permute.xlu0 %2723
        %2725 = vrot.lane.b32.xlu0 %v2640, 16
        %v2726 = vpop.permute.xlu0 %2725
        %2727 = vrot.lane.b32.xlu0 %v2641, 16
        %v2728 = vpop.permute.xlu0 %2727
        %2729 = vrot.lane.b32.xlu0 %v2642, 16
        %v2730 = vpop.permute.xlu0 %2729
        %2731 = vrot.lane.b32.xlu0 %v2643, 16
        %v2732 = vpop.permute.xlu0 %2731
        %2733 = vrot.lane.b32.xlu0 %v2644, 16
        %v2734 = vpop.permute.xlu0 %2733
        %2735 = vrot.lane.b32.xlu0 %v2645, 16
        %v2736 = vpop.permute.xlu0 %2735
        %2737 = vrot.lane.b32.xlu0 %v2646, 16
        %v2738 = vpop.permute.xlu0 %2737
        %2739 = vrot.lane.b32.xlu0 %v2647, 16
        %v2740 = vpop.permute.xlu0 %2739
        %2741 = vrot.lane.b32.xlu0 %v2648, 16
        %v2742 = vpop.permute.xlu0 %2741
        %2743 = vrot.lane.b32.xlu0 %v2649, 16
        %v2744 = vpop.permute.xlu0 %2743
        %2745 = vrot.lane.b32.xlu0 %v2650, 16
        %v2746 = vpop.permute.xlu0 %2745
        %2779 = vst.msk [vmem:[#allocation3] sm:$0xff] %vm802, %v2684
        %2780 = vst.msk [vmem:[#allocation3 + $0x8] sm:$0xff] %vm802, %v2686
        %2781 = vst.msk [vmem:[#allocation3 + $0x10] sm:$0xff] %vm802, %v2688
        %2782 = vst.msk [vmem:[#allocation3 + $0x18] sm:$0xff] %vm802, %v2690
        %2783 = vst.msk [vmem:[#allocation3 + $0x20] sm:$0xff] %vm802, %v2692
        %2784 = vst.msk [vmem:[#allocation3 + $0x28] sm:$0xff] %vm802, %v2694
        %2785 = vst.msk [vmem:[#allocation3 + $0x30] sm:$0xff] %vm802, %v2696
        %2786 = vst.msk [vmem:[#allocation3 + $0x38] sm:$0xff] %vm802, %v2698
        %2787 = vst.msk [vmem:[#allocation3 + $0x40] sm:$0xff] %vm802, %v2700
        %2788 = vst.msk [vmem:[#allocation3 + $0x48] sm:$0xff] %vm802, %v2702
        %2789 = vst.msk [vmem:[#allocation3 + $0x50] sm:$0xff] %vm802, %v2704
        %2790 = vst.msk [vmem:[#allocation3 + $0x58] sm:$0xff] %vm802, %v2706
        %2791 = vst.msk [vmem:[#allocation3 + $0x60] sm:$0xff] %vm802, %v2708
        %2792 = vst.msk [vmem:[#allocation3 + $0x68] sm:$0xff] %vm802, %v2710
        %2793 = vst.msk [vmem:[#allocation3 + $0x70] sm:$0xff] %vm802, %v2712
        %2794 = vst.msk [vmem:[#allocation3 + $0x78] sm:$0xff] %vm802, %v2714
        %2795 = vst.msk [vmem:[#allocation3 + $0x80] sm:$0xff] %vm802, %v2716
        %2796 = vst.msk [vmem:[#allocation3 + $0x88] sm:$0xff] %vm802, %v2718
        %2797 = vst.msk [vmem:[#allocation3 + $0x90] sm:$0xff] %vm802, %v2720
        %2798 = vst.msk [vmem:[#allocation3 + $0x98] sm:$0xff] %vm802, %v2722
        %2799 = vst.msk [vmem:[#allocation3 + $0xa0] sm:$0xff] %vm802, %v2724
        %2800 = vst.msk [vmem:[#allocation3 + $0xa8] sm:$0xff] %vm802, %v2726
        %2801 = vst.msk [vmem:[#allocation3 + $0xb0] sm:$0xff] %vm802, %v2728
        %2802 = vst.msk [vmem:[#allocation3 + $0xb8] sm:$0xff] %vm802, %v2730
        %2803 = vst.msk [vmem:[#allocation3 + $0xc0] sm:$0xff] %vm802, %v2732
        %2804 = vst.msk [vmem:[#allocation3 + $0xc8] sm:$0xff] %vm802, %v2734
        %2805 = vst.msk [vmem:[#allocation3 + $0xd0] sm:$0xff] %vm802, %v2736
        %2806 = vst.msk [vmem:[#allocation3 + $0xd8] sm:$0xff] %vm802, %v2738
        %2807 = vst.msk [vmem:[#allocation3 + $0xe0] sm:$0xff] %vm802, %v2740
        %2808 = vst.msk [vmem:[#allocation3 + $0xe8] sm:$0xff] %vm802, %v2742
        %2809 = vst.msk [vmem:[#allocation3 + $0xf0] sm:$0xff] %vm802, %v2744
        %2810 = vst.msk [vmem:[#allocation3 + $0xf8] sm:$0xff] %vm802, %v2746
        %v2811 = vld [vmem:[%s342] sm:$0xff]
        %v2812 = vld [vmem:[%s342 + $0x8] sm:$0xff]
        %v2813 = vld [vmem:[%s342 + $0x18] sm:$0xff]
        %v2814 = vld [vmem:[%s342 + $0x20] sm:$0xff]
        %v2815 = vld [vmem:[%s342 + $0x30] sm:$0xff]
        %v2816 = vld [vmem:[%s342 + $0x38] sm:$0xff]
        %v2817 = vld [vmem:[%s342 + $0x48] sm:$0xff]
        %v2818 = vld [vmem:[%s342 + $0x50] sm:$0xff]
        %v2819 = vld [vmem:[%s342 + $0x60] sm:$0xff]
        %v2820 = vld [vmem:[%s342 + $0x68] sm:$0xff]
        %v2821 = vld [vmem:[%s342 + $0x78] sm:$0xff]
        %v2822 = vld [vmem:[%s342 + $0x80] sm:$0xff]
        %v2823 = vld [vmem:[%s342 + $0x90] sm:$0xff]
        %v2824 = vld [vmem:[%s342 + $0x98] sm:$0xff]
        %v2825 = vld [vmem:[%s342 + $0xa8] sm:$0xff]
        %v2826 = vld [vmem:[%s342 + $0xb0] sm:$0xff]
        %v2827 = vld [vmem:[%s342 + $0xc0] sm:$0xff]
        %v2828 = vld [vmem:[%s342 + $0xc8] sm:$0xff]
        %v2829 = vld [vmem:[%s342 + $0xd8] sm:$0xff]
        %v2830 = vld [vmem:[%s342 + $0xe0] sm:$0xff]
        %v2831 = vld [vmem:[%s342 + $0xf0] sm:$0xff]
        %v2832 = vld [vmem:[%s342 + $0xf8] sm:$0xff]
        %v2833 = vld [vmem:[%s342 + $0x108] sm:$0xff]
        %v2834 = vld [vmem:[%s342 + $0x110] sm:$0xff]
        %v2835 = vld [vmem:[%s342 + $0x120] sm:$0xff]
        %v2836 = vld [vmem:[%s342 + $0x128] sm:$0xff]
        %v2837 = vld [vmem:[%s342 + $0x138] sm:$0xff]
        %v2838 = vld [vmem:[%s342 + $0x140] sm:$0xff]
        %v2839 = vld [vmem:[%s342 + $0x150] sm:$0xff]
        %v2840 = vld [vmem:[%s342 + $0x158] sm:$0xff]
        %v2841 = vld [vmem:[%s342 + $0x168] sm:$0xff]
        %v2842 = vld [vmem:[%s342 + $0x170] sm:$0xff]
        %2875 = vrot.lane.b32.xlu0 %v2811, 24
        %v2876 = vpop.permute.xlu0 %2875
        %2877 = vrot.lane.b32.xlu0 %v2812, 24
        %v2878 = vpop.permute.xlu0 %2877
        %2879 = vrot.lane.b32.xlu0 %v2813, 24
        %v2880 = vpop.permute.xlu0 %2879
        %2881 = vrot.lane.b32.xlu0 %v2814, 24
        %v2882 = vpop.permute.xlu0 %2881
        %2883 = vrot.lane.b32.xlu0 %v2815, 24
        %v2884 = vpop.permute.xlu0 %2883
        %2885 = vrot.lane.b32.xlu0 %v2816, 24
        %v2886 = vpop.permute.xlu0 %2885
        %2887 = vrot.lane.b32.xlu0 %v2817, 24
        %v2888 = vpop.permute.xlu0 %2887
        %2889 = vrot.lane.b32.xlu0 %v2818, 24
        %v2890 = vpop.permute.xlu0 %2889
        %2891 = vrot.lane.b32.xlu0 %v2819, 24
        %v2892 = vpop.permute.xlu0 %2891
        %2893 = vrot.lane.b32.xlu0 %v2820, 24
        %v2894 = vpop.permute.xlu0 %2893
        %2895 = vrot.lane.b32.xlu0 %v2821, 24
        %v2896 = vpop.permute.xlu0 %2895
        %2897 = vrot.lane.b32.xlu0 %v2822, 24
        %v2898 = vpop.permute.xlu0 %2897
        %2899 = vrot.lane.b32.xlu0 %v2823, 24
        %v2900 = vpop.permute.xlu0 %2899
        %2901 = vrot.lane.b32.xlu0 %v2824, 24
        %v2902 = vpop.permute.xlu0 %2901
        %2903 = vrot.lane.b32.xlu0 %v2825, 24
        %v2904 = vpop.permute.xlu0 %2903
        %2905 = vrot.lane.b32.xlu0 %v2826, 24
        %v2906 = vpop.permute.xlu0 %2905
        %2907 = vrot.lane.b32.xlu0 %v2827, 24
        %v2908 = vpop.permute.xlu0 %2907
        %2909 = vrot.lane.b32.xlu0 %v2828, 24
        %v2910 = vpop.permute.xlu0 %2909
        %2911 = vrot.lane.b32.xlu0 %v2829, 24
        %v2912 = vpop.permute.xlu0 %2911
        %2913 = vrot.lane.b32.xlu0 %v2830, 24
        %v2914 = vpop.permute.xlu0 %2913
        %2915 = vrot.lane.b32.xlu0 %v2831, 24
        %v2916 = vpop.permute.xlu0 %2915
        %2917 = vrot.lane.b32.xlu0 %v2832, 24
        %v2918 = vpop.permute.xlu0 %2917
        %2919 = vrot.lane.b32.xlu0 %v2833, 24
        %v2920 = vpop.permute.xlu0 %2919
        %2921 = vrot.lane.b32.xlu0 %v2834, 24
        %v2922 = vpop.permute.xlu0 %2921
        %2923 = vrot.lane.b32.xlu0 %v2835, 24
        %v2924 = vpop.permute.xlu0 %2923
        %2925 = vrot.lane.b32.xlu0 %v2836, 24
        %v2926 = vpop.permute.xlu0 %2925
        %2927 = vrot.lane.b32.xlu0 %v2837, 24
        %v2928 = vpop.permute.xlu0 %2927
        %2929 = vrot.lane.b32.xlu0 %v2838, 24
        %v2930 = vpop.permute.xlu0 %2929
        %2931 = vrot.lane.b32.xlu0 %v2839, 24
        %v2932 = vpop.permute.xlu0 %2931
        %2933 = vrot.lane.b32.xlu0 %v2840, 24
        %v2934 = vpop.permute.xlu0 %2933
        %2935 = vrot.lane.b32.xlu0 %v2841, 24
        %v2936 = vpop.permute.xlu0 %2935
        %2937 = vrot.lane.b32.xlu0 %v2842, 24
        %v2938 = vpop.permute.xlu0 %2937
        %2971 = vst.msk [vmem:[#allocation3] sm:$0xff] %vm995, %v2876
        %2972 = vst.msk [vmem:[#allocation3 + $0x8] sm:$0xff] %vm995, %v2878
        %2973 = vst.msk [vmem:[#allocation3 + $0x10] sm:$0xff] %vm995, %v2880
        %2974 = vst.msk [vmem:[#allocation3 + $0x18] sm:$0xff] %vm995, %v2882
        %2975 = vst.msk [vmem:[#allocation3 + $0x20] sm:$0xff] %vm995, %v2884
        %2976 = vst.msk [vmem:[#allocation3 + $0x28] sm:$0xff] %vm995, %v2886
        %2977 = vst.msk [vmem:[#allocation3 + $0x30] sm:$0xff] %vm995, %v2888
        %2978 = vst.msk [vmem:[#allocation3 + $0x38] sm:$0xff] %vm995, %v2890
        %2979 = vst.msk [vmem:[#allocation3 + $0x40] sm:$0xff] %vm995, %v2892
        %2980 = vst.msk [vmem:[#allocation3 + $0x48] sm:$0xff] %vm995, %v2894
        %2981 = vst.msk [vmem:[#allocation3 + $0x50] sm:$0xff] %vm995, %v2896
        %2982 = vst.msk [vmem:[#allocation3 + $0x58] sm:$0xff] %vm995, %v2898
        %2983 = vst.msk [vmem:[#allocation3 + $0x60] sm:$0xff] %vm995, %v2900
        %2984 = vst.msk [vmem:[#allocation3 + $0x68] sm:$0xff] %vm995, %v2902
        %2985 = vst.msk [vmem:[#allocation3 + $0x70] sm:$0xff] %vm995, %v2904
        %2986 = vst.msk [vmem:[#allocation3 + $0x78] sm:$0xff] %vm995, %v2906
        %2987 = vst.msk [vmem:[#allocation3 + $0x80] sm:$0xff] %vm995, %v2908
        %2988 = vst.msk [vmem:[#allocation3 + $0x88] sm:$0xff] %vm995, %v2910
        %2989 = vst.msk [vmem:[#allocation3 + $0x90] sm:$0xff] %vm995, %v2912
        %2990 = vst.msk [vmem:[#allocation3 + $0x98] sm:$0xff] %vm995, %v2914
        %2991 = vst.msk [vmem:[#allocation3 + $0xa0] sm:$0xff] %vm995, %v2916
        %2992 = vst.msk [vmem:[#allocation3 + $0xa8] sm:$0xff] %vm995, %v2918
        %2993 = vst.msk [vmem:[#allocation3 + $0xb0] sm:$0xff] %vm995, %v2920
        %2994 = vst.msk [vmem:[#allocation3 + $0xb8] sm:$0xff] %vm995, %v2922
        %2995 = vst.msk [vmem:[#allocation3 + $0xc0] sm:$0xff] %vm995, %v2924
        %2996 = vst.msk [vmem:[#allocation3 + $0xc8] sm:$0xff] %vm995, %v2926
        %2997 = vst.msk [vmem:[#allocation3 + $0xd0] sm:$0xff] %vm995, %v2928
        %2998 = vst.msk [vmem:[#allocation3 + $0xd8] sm:$0xff] %vm995, %v2930
        %2999 = vst.msk [vmem:[#allocation3 + $0xe0] sm:$0xff] %vm995, %v2932
        %3000 = vst.msk [vmem:[#allocation3 + $0xe8] sm:$0xff] %vm995, %v2934
        %3001 = vst.msk [vmem:[#allocation3 + $0xf0] sm:$0xff] %vm995, %v2936
        %3002 = vst.msk [vmem:[#allocation3 + $0xf8] sm:$0xff] %vm995, %v2938
        %v3003 = vld [vmem:[%s342 + $0x1] sm:$0xff]
        %v3004 = vld [vmem:[%s342 + $0x9] sm:$0xff]
        %v3005 = vld [vmem:[%s342 + $0x19] sm:$0xff]
        %v3006 = vld [vmem:[%s342 + $0x21] sm:$0xff]
        %v3007 = vld [vmem:[%s342 + $0x31] sm:$0xff]
        %v3008 = vld [vmem:[%s342 + $0x39] sm:$0xff]
        %v3009 = vld [vmem:[%s342 + $0x49] sm:$0xff]
        %v3010 = vld [vmem:[%s342 + $0x51] sm:$0xff]
        %v3011 = vld [vmem:[%s342 + $0x61] sm:$0xff]
        %v3012 = vld [vmem:[%s342 + $0x69] sm:$0xff]
        %v3013 = vld [vmem:[%s342 + $0x79] sm:$0xff]
        %v3014 = vld [vmem:[%s342 + $0x81] sm:$0xff]
        %v3015 = vld [vmem:[%s342 + $0x91] sm:$0xff]
        %v3016 = vld [vmem:[%s342 + $0x99] sm:$0xff]
        %v3017 = vld [vmem:[%s342 + $0xa9] sm:$0xff]
        %v3018 = vld [vmem:[%s342 + $0xb1] sm:$0xff]
        %v3019 = vld [vmem:[%s342 + $0xc1] sm:$0xff]
        %v3020 = vld [vmem:[%s342 + $0xc9] sm:$0xff]
        %v3021 = vld [vmem:[%s342 + $0xd9] sm:$0xff]
        %v3022 = vld [vmem:[%s342 + $0xe1] sm:$0xff]
        %v3023 = vld [vmem:[%s342 + $0xf1] sm:$0xff]
        %v3024 = vld [vmem:[%s342 + $0xf9] sm:$0xff]
        %v3025 = vld [vmem:[%s342 + $0x109] sm:$0xff]
        %v3026 = vld [vmem:[%s342 + $0x111] sm:$0xff]
        %v3027 = vld [vmem:[%s342 + $0x121] sm:$0xff]
        %v3028 = vld [vmem:[%s342 + $0x129] sm:$0xff]
        %v3029 = vld [vmem:[%s342 + $0x139] sm:$0xff]
        %v3030 = vld [vmem:[%s342 + $0x141] sm:$0xff]
        %v3031 = vld [vmem:[%s342 + $0x151] sm:$0xff]
        %v3032 = vld [vmem:[%s342 + $0x159] sm:$0xff]
        %v3033 = vld [vmem:[%s342 + $0x169] sm:$0xff]
        %v3034 = vld [vmem:[%s342 + $0x171] sm:$0xff]
        %3067 = vrot.lane.b32.xlu0 %v3003, 32
        %v3068 = vpop.permute.xlu0 %3067
        %3069 = vrot.lane.b32.xlu0 %v3004, 32
        %v3070 = vpop.permute.xlu0 %3069
        %3071 = vrot.lane.b32.xlu0 %v3005, 32
        %v3072 = vpop.permute.xlu0 %3071
        %3073 = vrot.lane.b32.xlu0 %v3006, 32
        %v3074 = vpop.permute.xlu0 %3073
        %3075 = vrot.lane.b32.xlu0 %v3007, 32
        %v3076 = vpop.permute.xlu0 %3075
        %3077 = vrot.lane.b32.xlu0 %v3008, 32
        %v3078 = vpop.permute.xlu0 %3077
        %3079 = vrot.lane.b32.xlu0 %v3009, 32
        %v3080 = vpop.permute.xlu0 %3079
        %3081 = vrot.lane.b32.xlu0 %v3010, 32
        %v3082 = vpop.permute.xlu0 %3081
        %3083 = vrot.lane.b32.xlu0 %v3011, 32
        %v3084 = vpop.permute.xlu0 %3083
        %3085 = vrot.lane.b32.xlu0 %v3012, 32
        %v3086 = vpop.permute.xlu0 %3085
        %3087 = vrot.lane.b32.xlu0 %v3013, 32
        %v3088 = vpop.permute.xlu0 %3087
        %3089 = vrot.lane.b32.xlu0 %v3014, 32
        %v3090 = vpop.permute.xlu0 %3089
        %3091 = vrot.lane.b32.xlu0 %v3015, 32
        %v3092 = vpop.permute.xlu0 %3091
        %3093 = vrot.lane.b32.xlu0 %v3016, 32
        %v3094 = vpop.permute.xlu0 %3093
        %3095 = vrot.lane.b32.xlu0 %v3017, 32
        %v3096 = vpop.permute.xlu0 %3095
        %3097 = vrot.lane.b32.xlu0 %v3018, 32
        %v3098 = vpop.permute.xlu0 %3097
        %3099 = vrot.lane.b32.xlu0 %v3019, 32
        %v3100 = vpop.permute.xlu0 %3099
        %3101 = vrot.lane.b32.xlu0 %v3020, 32
        %v3102 = vpop.permute.xlu0 %3101
        %3103 = vrot.lane.b32.xlu0 %v3021, 32
        %v3104 = vpop.permute.xlu0 %3103
        %3105 = vrot.lane.b32.xlu0 %v3022, 32
        %v3106 = vpop.permute.xlu0 %3105
        %3107 = vrot.lane.b32.xlu0 %v3023, 32
        %v3108 = vpop.permute.xlu0 %3107
        %3109 = vrot.lane.b32.xlu0 %v3024, 32
        %v3110 = vpop.permute.xlu0 %3109
        %3111 = vrot.lane.b32.xlu0 %v3025, 32
        %v3112 = vpop.permute.xlu0 %3111
        %3113 = vrot.lane.b32.xlu0 %v3026, 32
        %v3114 = vpop.permute.xlu0 %3113
        %3115 = vrot.lane.b32.xlu0 %v3027, 32
        %v3116 = vpop.permute.xlu0 %3115
        %3117 = vrot.lane.b32.xlu0 %v3028, 32
        %v3118 = vpop.permute.xlu0 %3117
        %3119 = vrot.lane.b32.xlu0 %v3029, 32
        %v3120 = vpop.permute.xlu0 %3119
        %3121 = vrot.lane.b32.xlu0 %v3030, 32
        %v3122 = vpop.permute.xlu0 %3121
        %3123 = vrot.lane.b32.xlu0 %v3031, 32
        %v3124 = vpop.permute.xlu0 %3123
        %3125 = vrot.lane.b32.xlu0 %v3032, 32
        %v3126 = vpop.permute.xlu0 %3125
        %3127 = vrot.lane.b32.xlu0 %v3033, 32
        %v3128 = vpop.permute.xlu0 %3127
        %3129 = vrot.lane.b32.xlu0 %v3034, 32
        %v3130 = vpop.permute.xlu0 %3129
        %3163 = vst.msk [vmem:[#allocation3] sm:$0xff] %vm1188, %v3068
        %3164 = vst.msk [vmem:[#allocation3 + $0x8] sm:$0xff] %vm1188, %v3070
        %3165 = vst.msk [vmem:[#allocation3 + $0x10] sm:$0xff] %vm1188, %v3072
        %3166 = vst.msk [vmem:[#allocation3 + $0x18] sm:$0xff] %vm1188, %v3074
        %3167 = vst.msk [vmem:[#allocation3 + $0x20] sm:$0xff] %vm1188, %v3076
        %3168 = vst.msk [vmem:[#allocation3 + $0x28] sm:$0xff] %vm1188, %v3078
        %3169 = vst.msk [vmem:[#allocation3 + $0x30] sm:$0xff] %vm1188, %v3080
        %3170 = vst.msk [vmem:[#allocation3 + $0x38] sm:$0xff] %vm1188, %v3082
        %3171 = vst.msk [vmem:[#allocation3 + $0x40] sm:$0xff] %vm1188, %v3084
        %3172 = vst.msk [vmem:[#allocation3 + $0x48] sm:$0xff] %vm1188, %v3086
        %3173 = vst.msk [vmem:[#allocation3 + $0x50] sm:$0xff] %vm1188, %v3088
        %3174 = vst.msk [vmem:[#allocation3 + $0x58] sm:$0xff] %vm1188, %v3090
        %3175 = vst.msk [vmem:[#allocation3 + $0x60] sm:$0xff] %vm1188, %v3092
        %3176 = vst.msk [vmem:[#allocation3 + $0x68] sm:$0xff] %vm1188, %v3094
        %3177 = vst.msk [vmem:[#allocation3 + $0x70] sm:$0xff] %vm1188, %v3096
        %3178 = vst.msk [vmem:[#allocation3 + $0x78] sm:$0xff] %vm1188, %v3098
        %3179 = vst.msk [vmem:[#allocation3 + $0x80] sm:$0xff] %vm1188, %v3100
        %3180 = vst.msk [vmem:[#allocation3 + $0x88] sm:$0xff] %vm1188, %v3102
        %3181 = vst.msk [vmem:[#allocation3 + $0x90] sm:$0xff] %vm1188, %v3104
        %3182 = vst.msk [vmem:[#allocation3 + $0x98] sm:$0xff] %vm1188, %v3106
        %3183 = vst.msk [vmem:[#allocation3 + $0xa0] sm:$0xff] %vm1188, %v3108
        %3184 = vst.msk [vmem:[#allocation3 + $0xa8] sm:$0xff] %vm1188, %v3110
        %3185 = vst.msk [vmem:[#allocation3 + $0xb0] sm:$0xff] %vm1188, %v3112
        %3186 = vst.msk [vmem:[#allocation3 + $0xb8] sm:$0xff] %vm1188, %v3114
        %3187 = vst.msk [vmem:[#allocation3 + $0xc0] sm:$0xff] %vm1188, %v3116
        %3188 = vst.msk [vmem:[#allocation3 + $0xc8] sm:$0xff] %vm1188, %v3118
        %3189 = vst.msk [vmem:[#allocation3 + $0xd0] sm:$0xff] %vm1188, %v3120
        %3190 = vst.msk [vmem:[#allocation3 + $0xd8] sm:$0xff] %vm1188, %v3122
        %3191 = vst.msk [vmem:[#allocation3 + $0xe0] sm:$0xff] %vm1188, %v3124
        %3192 = vst.msk [vmem:[#allocation3 + $0xe8] sm:$0xff] %vm1188, %v3126
        %3193 = vst.msk [vmem:[#allocation3 + $0xf0] sm:$0xff] %vm1188, %v3128
        %3194 = vst.msk [vmem:[#allocation3 + $0xf8] sm:$0xff] %vm1188, %v3130
        %v3195 = vld [vmem:[%s342 + $0x2] sm:$0xff]
        %v3196 = vld [vmem:[%s342 + $0xa] sm:$0xff]
        %v3197 = vld [vmem:[%s342 + $0x1a] sm:$0xff]
        %v3198 = vld [vmem:[%s342 + $0x22] sm:$0xff]
        %v3199 = vld [vmem:[%s342 + $0x32] sm:$0xff]
        %v3200 = vld [vmem:[%s342 + $0x3a] sm:$0xff]
        %v3201 = vld [vmem:[%s342 + $0x4a] sm:$0xff]
        %v3202 = vld [vmem:[%s342 + $0x52] sm:$0xff]
        %v3203 = vld [vmem:[%s342 + $0x62] sm:$0xff]
        %v3204 = vld [vmem:[%s342 + $0x6a] sm:$0xff]
        %v3205 = vld [vmem:[%s342 + $0x7a] sm:$0xff]
        %v3206 = vld [vmem:[%s342 + $0x82] sm:$0xff]
        %v3207 = vld [vmem:[%s342 + $0x92] sm:$0xff]
        %v3208 = vld [vmem:[%s342 + $0x9a] sm:$0xff]
        %v3209 = vld [vmem:[%s342 + $0xaa] sm:$0xff]
        %v3210 = vld [vmem:[%s342 + $0xb2] sm:$0xff]
        %v3211 = vld [vmem:[%s342 + $0xc2] sm:$0xff]
        %v3212 = vld [vmem:[%s342 + $0xca] sm:$0xff]
        %v3213 = vld [vmem:[%s342 + $0xda] sm:$0xff]
        %v3214 = vld [vmem:[%s342 + $0xe2] sm:$0xff]
        %v3215 = vld [vmem:[%s342 + $0xf2] sm:$0xff]
        %v3216 = vld [vmem:[%s342 + $0xfa] sm:$0xff]
        %v3217 = vld [vmem:[%s342 + $0x10a] sm:$0xff]
        %v3218 = vld [vmem:[%s342 + $0x112] sm:$0xff]
        %v3219 = vld [vmem:[%s342 + $0x122] sm:$0xff]
        %v3220 = vld [vmem:[%s342 + $0x12a] sm:$0xff]
        %v3221 = vld [vmem:[%s342 + $0x13a] sm:$0xff]
        %v3222 = vld [vmem:[%s342 + $0x142] sm:$0xff]
        %v3223 = vld [vmem:[%s342 + $0x152] sm:$0xff]
        %v3224 = vld [vmem:[%s342 + $0x15a] sm:$0xff]
        %v3225 = vld [vmem:[%s342 + $0x16a] sm:$0xff]
        %v3226 = vld [vmem:[%s342 + $0x172] sm:$0xff]
        %3259 = vrot.lane.b32.xlu0 %v3195, 40
        %v3260 = vpop.permute.xlu0 %3259
        %3261 = vrot.lane.b32.xlu0 %v3196, 40
        %v3262 = vpop.permute.xlu0 %3261
        %3263 = vrot.lane.b32.xlu0 %v3197, 40
        %v3264 = vpop.permute.xlu0 %3263
        %3265 = vrot.lane.b32.xlu0 %v3198, 40
        %v3266 = vpop.permute.xlu0 %3265
        %3267 = vrot.lane.b32.xlu0 %v3199, 40
        %v3268 = vpop.permute.xlu0 %3267
        %3269 = vrot.lane.b32.xlu0 %v3200, 40
        %v3270 = vpop.permute.xlu0 %3269
        %3271 = vrot.lane.b32.xlu0 %v3201, 40
        %v3272 = vpop.permute.xlu0 %3271
        %3273 = vrot.lane.b32.xlu0 %v3202, 40
        %v3274 = vpop.permute.xlu0 %3273
        %3275 = vrot.lane.b32.xlu0 %v3203, 40
        %v3276 = vpop.permute.xlu0 %3275
        %3277 = vrot.lane.b32.xlu0 %v3204, 40
        %v3278 = vpop.permute.xlu0 %3277
        %3279 = vrot.lane.b32.xlu0 %v3205, 40
        %v3280 = vpop.permute.xlu0 %3279
        %3281 = vrot.lane.b32.xlu0 %v3206, 40
        %v3282 = vpop.permute.xlu0 %3281
        %3283 = vrot.lane.b32.xlu0 %v3207, 40
        %v3284 = vpop.permute.xlu0 %3283
        %3285 = vrot.lane.b32.xlu0 %v3208, 40
        %v3286 = vpop.permute.xlu0 %3285
        %3287 = vrot.lane.b32.xlu0 %v3209, 40
        %v3288 = vpop.permute.xlu0 %3287
        %3289 = vrot.lane.b32.xlu0 %v3210, 40
        %v3290 = vpop.permute.xlu0 %3289
        %3291 = vrot.lane.b32.xlu0 %v3211, 40
        %v3292 = vpop.permute.xlu0 %3291
        %3293 = vrot.lane.b32.xlu0 %v3212, 40
        %v3294 = vpop.permute.xlu0 %3293
        %3295 = vrot.lane.b32.xlu0 %v3213, 40
        %v3296 = vpop.permute.xlu0 %3295
        %3297 = vrot.lane.b32.xlu0 %v3214, 40
        %v3298 = vpop.permute.xlu0 %3297
        %3299 = vrot.lane.b32.xlu0 %v3215, 40
        %v3300 = vpop.permute.xlu0 %3299
        %3301 = vrot.lane.b32.xlu0 %v3216, 40
        %v3302 = vpop.permute.xlu0 %3301
        %3303 = vrot.lane.b32.xlu0 %v3217, 40
        %v3304 = vpop.permute.xlu0 %3303
        %3305 = vrot.lane.b32.xlu0 %v3218, 40
        %v3306 = vpop.permute.xlu0 %3305
        %3307 = vrot.lane.b32.xlu0 %v3219, 40
        %v3308 = vpop.permute.xlu0 %3307
        %3309 = vrot.lane.b32.xlu0 %v3220, 40
        %v3310 = vpop.permute.xlu0 %3309
        %3311 = vrot.lane.b32.xlu0 %v3221, 40
        %v3312 = vpop.permute.xlu0 %3311
        %3313 = vrot.lane.b32.xlu0 %v3222, 40
        %v3314 = vpop.permute.xlu0 %3313
        %3315 = vrot.lane.b32.xlu0 %v3223, 40
        %v3316 = vpop.permute.xlu0 %3315
        %3317 = vrot.lane.b32.xlu0 %v3224, 40
        %v3318 = vpop.permute.xlu0 %3317
        %3319 = vrot.lane.b32.xlu0 %v3225, 40
        %v3320 = vpop.permute.xlu0 %3319
        %3321 = vrot.lane.b32.xlu0 %v3226, 40
        %v3322 = vpop.permute.xlu0 %3321
        %3355 = vst.msk [vmem:[#allocation3] sm:$0xff] %vm1381, %v3260
        %3356 = vst.msk [vmem:[#allocation3 + $0x8] sm:$0xff] %vm1381, %v3262
        %3357 = vst.msk [vmem:[#allocation3 + $0x10] sm:$0xff] %vm1381, %v3264
        %3358 = vst.msk [vmem:[#allocation3 + $0x18] sm:$0xff] %vm1381, %v3266
        %3359 = vst.msk [vmem:[#allocation3 + $0x20] sm:$0xff] %vm1381, %v3268
        %3360 = vst.msk [vmem:[#allocation3 + $0x28] sm:$0xff] %vm1381, %v3270
        %3361 = vst.msk [vmem:[#allocation3 + $0x30] sm:$0xff] %vm1381, %v3272
        %3362 = vst.msk [vmem:[#allocation3 + $0x38] sm:$0xff] %vm1381, %v3274
        %3363 = vst.msk [vmem:[#allocation3 + $0x40] sm:$0xff] %vm1381, %v3276
        %3364 = vst.msk [vmem:[#allocation3 + $0x48] sm:$0xff] %vm1381, %v3278
        %3365 = vst.msk [vmem:[#allocation3 + $0x50] sm:$0xff] %vm1381, %v3280
        %3366 = vst.msk [vmem:[#allocation3 + $0x58] sm:$0xff] %vm1381, %v3282
        %3367 = vst.msk [vmem:[#allocation3 + $0x60] sm:$0xff] %vm1381, %v3284
        %3368 = vst.msk [vmem:[#allocation3 + $0x68] sm:$0xff] %vm1381, %v3286
        %3369 = vst.msk [vmem:[#allocation3 + $0x70] sm:$0xff] %vm1381, %v3288
        %3370 = vst.msk [vmem:[#allocation3 + $0x78] sm:$0xff] %vm1381, %v3290
        %3371 = vst.msk [vmem:[#allocation3 + $0x80] sm:$0xff] %vm1381, %v3292
        %3372 = vst.msk [vmem:[#allocation3 + $0x88] sm:$0xff] %vm1381, %v3294
        %3373 = vst.msk [vmem:[#allocation3 + $0x90] sm:$0xff] %vm1381, %v3296
        %3374 = vst.msk [vmem:[#allocation3 + $0x98] sm:$0xff] %vm1381, %v3298
        %3375 = vst.msk [vmem:[#allocation3 + $0xa0] sm:$0xff] %vm1381, %v3300
        %3376 = vst.msk [vmem:[#allocation3 + $0xa8] sm:$0xff] %vm1381, %v3302
        %3377 = vst.msk [vmem:[#allocation3 + $0xb0] sm:$0xff] %vm1381, %v3304
        %3378 = vst.msk [vmem:[#allocation3 + $0xb8] sm:$0xff] %vm1381, %v3306
        %3379 = vst.msk [vmem:[#allocation3 + $0xc0] sm:$0xff] %vm1381, %v3308
        %3380 = vst.msk [vmem:[#allocation3 + $0xc8] sm:$0xff] %vm1381, %v3310
        %3381 = vst.msk [vmem:[#allocation3 + $0xd0] sm:$0xff] %vm1381, %v3312
        %3382 = vst.msk [vmem:[#allocation3 + $0xd8] sm:$0xff] %vm1381, %v3314
        %3383 = vst.msk [vmem:[#allocation3 + $0xe0] sm:$0xff] %vm1381, %v3316
        %3384 = vst.msk [vmem:[#allocation3 + $0xe8] sm:$0xff] %vm1381, %v3318
        %3385 = vst.msk [vmem:[#allocation3 + $0xf0] sm:$0xff] %vm1381, %v3320
        %3386 = vst.msk [vmem:[#allocation3 + $0xf8] sm:$0xff] %vm1381, %v3322
        %v3387 = vld [vmem:[%s1414] sm:$0xff]
        %v3388 = vld [vmem:[%s1414 + $0x8] sm:$0xff]
        %v3389 = vld [vmem:[%s1414 + $0x18] sm:$0xff]
        %v3390 = vld [vmem:[%s1414 + $0x20] sm:$0xff]
        %v3391 = vld [vmem:[%s1414 + $0x30] sm:$0xff]
        %v3392 = vld [vmem:[%s1414 + $0x38] sm:$0xff]
        %v3393 = vld [vmem:[%s1414 + $0x48] sm:$0xff]
        %v3394 = vld [vmem:[%s1414 + $0x50] sm:$0xff]
        %v3395 = vld [vmem:[%s1414 + $0x60] sm:$0xff]
        %v3396 = vld [vmem:[%s1414 + $0x68] sm:$0xff]
        %v3397 = vld [vmem:[%s1414 + $0x78] sm:$0xff]
        %v3398 = vld [vmem:[%s1414 + $0x80] sm:$0xff]
        %v3399 = vld [vmem:[%s1414 + $0x90] sm:$0xff]
        %v3400 = vld [vmem:[%s1414 + $0x98] sm:$0xff]
        %v3401 = vld [vmem:[%s1414 + $0xa8] sm:$0xff]
        %v3402 = vld [vmem:[%s1414 + $0xb0] sm:$0xff]
        %v3403 = vld [vmem:[%s1414 + $0xc0] sm:$0xff]
        %v3404 = vld [vmem:[%s1414 + $0xc8] sm:$0xff]
        %v3405 = vld [vmem:[%s1414 + $0xd8] sm:$0xff]
        %v3406 = vld [vmem:[%s1414 + $0xe0] sm:$0xff]
        %v3407 = vld [vmem:[%s1414 + $0xf0] sm:$0xff]
        %v3408 = vld [vmem:[%s1414 + $0xf8] sm:$0xff]
        %v3409 = vld [vmem:[%s1414 + $0x108] sm:$0xff]
        %v3410 = vld [vmem:[%s1414 + $0x110] sm:$0xff]
        %v3411 = vld [vmem:[%s1414 + $0x120] sm:$0xff]
        %v3412 = vld [vmem:[%s1414 + $0x128] sm:$0xff]
        %v3413 = vld [vmem:[%s1414 + $0x138] sm:$0xff]
        %v3414 = vld [vmem:[%s1414 + $0x140] sm:$0xff]
        %v3415 = vld [vmem:[%s1414 + $0x150] sm:$0xff]
        %v3416 = vld [vmem:[%s1414 + $0x158] sm:$0xff]
        %v3417 = vld [vmem:[%s1414 + $0x168] sm:$0xff]
        %v3418 = vld [vmem:[%s1414 + $0x170] sm:$0xff]
        %3451 = vrot.lane.b32.xlu0 %v3387, 48
        %v3452 = vpop.permute.xlu0 %3451
        %3453 = vrot.lane.b32.xlu0 %v3388, 48
        %v3454 = vpop.permute.xlu0 %3453
        %3455 = vrot.lane.b32.xlu0 %v3389, 48
        %v3456 = vpop.permute.xlu0 %3455
        %3457 = vrot.lane.b32.xlu0 %v3390, 48
        %v3458 = vpop.permute.xlu0 %3457
        %3459 = vrot.lane.b32.xlu0 %v3391, 48
        %v3460 = vpop.permute.xlu0 %3459
        %3461 = vrot.lane.b32.xlu0 %v3392, 48
        %v3462 = vpop.permute.xlu0 %3461
        %3463 = vrot.lane.b32.xlu0 %v3393, 48
        %v3464 = vpop.permute.xlu0 %3463
        %3465 = vrot.lane.b32.xlu0 %v3394, 48
        %v3466 = vpop.permute.xlu0 %3465
        %3467 = vrot.lane.b32.xlu0 %v3395, 48
        %v3468 = vpop.permute.xlu0 %3467
        %3469 = vrot.lane.b32.xlu0 %v3396, 48
        %v3470 = vpop.permute.xlu0 %3469
        %3471 = vrot.lane.b32.xlu0 %v3397, 48
        %v3472 = vpop.permute.xlu0 %3471
        %3473 = vrot.lane.b32.xlu0 %v3398, 48
        %v3474 = vpop.permute.xlu0 %3473
        %3475 = vrot.lane.b32.xlu0 %v3399, 48
        %v3476 = vpop.permute.xlu0 %3475
        %3477 = vrot.lane.b32.xlu0 %v3400, 48
        %v3478 = vpop.permute.xlu0 %3477
        %3479 = vrot.lane.b32.xlu0 %v3401, 48
        %v3480 = vpop.permute.xlu0 %3479
        %3481 = vrot.lane.b32.xlu0 %v3402, 48
        %v3482 = vpop.permute.xlu0 %3481
        %3483 = vrot.lane.b32.xlu0 %v3403, 48
        %v3484 = vpop.permute.xlu0 %3483
        %3485 = vrot.lane.b32.xlu0 %v3404, 48
        %v3486 = vpop.permute.xlu0 %3485
        %3487 = vrot.lane.b32.xlu0 %v3405, 48
        %v3488 = vpop.permute.xlu0 %3487
        %3489 = vrot.lane.b32.xlu0 %v3406, 48
        %v3490 = vpop.permute.xlu0 %3489
        %3491 = vrot.lane.b32.xlu0 %v3407, 48
        %v3492 = vpop.permute.xlu0 %3491
        %3493 = vrot.lane.b32.xlu0 %v3408, 48
        %v3494 = vpop.permute.xlu0 %3493
        %3495 = vrot.lane.b32.xlu0 %v3409, 48
        %v3496 = vpop.permute.xlu0 %3495
        %3497 = vrot.lane.b32.xlu0 %v3410, 48
        %v3498 = vpop.permute.xlu0 %3497
        %3499 = vrot.lane.b32.xlu0 %v3411, 48
        %v3500 = vpop.permute.xlu0 %3499
        %3501 = vrot.lane.b32.xlu0 %v3412, 48
        %v3502 = vpop.permute.xlu0 %3501
        %3503 = vrot.lane.b32.xlu0 %v3413, 48
        %v3504 = vpop.permute.xlu0 %3503
        %3505 = vrot.lane.b32.xlu0 %v3414, 48
        %v3506 = vpop.permute.xlu0 %3505
        %3507 = vrot.lane.b32.xlu0 %v3415, 48
        %v3508 = vpop.permute.xlu0 %3507
        %3509 = vrot.lane.b32.xlu0 %v3416, 48
        %v3510 = vpop.permute.xlu0 %3509
        %3511 = vrot.lane.b32.xlu0 %v3417, 48
        %v3512 = vpop.permute.xlu0 %3511
        %3513 = vrot.lane.b32.xlu0 %v3418, 48
        %v3514 = vpop.permute.xlu0 %3513
        %3547 = vst.msk [vmem:[#allocation3] sm:$0xff] %vm1575, %v3452
        %3548 = vst.msk [vmem:[#allocation3 + $0x8] sm:$0xff] %vm1575, %v3454
        %3549 = vst.msk [vmem:[#allocation3 + $0x10] sm:$0xff] %vm1575, %v3456
        %3550 = vst.msk [vmem:[#allocation3 + $0x18] sm:$0xff] %vm1575, %v3458
        %3551 = vst.msk [vmem:[#allocation3 + $0x20] sm:$0xff] %vm1575, %v3460
        %3552 = vst.msk [vmem:[#allocation3 + $0x28] sm:$0xff] %vm1575, %v3462
        %3553 = vst.msk [vmem:[#allocation3 + $0x30] sm:$0xff] %vm1575, %v3464
        %3554 = vst.msk [vmem:[#allocation3 + $0x38] sm:$0xff] %vm1575, %v3466
        %3555 = vst.msk [vmem:[#allocation3 + $0x40] sm:$0xff] %vm1575, %v3468
        %3556 = vst.msk [vmem:[#allocation3 + $0x48] sm:$0xff] %vm1575, %v3470
        %3557 = vst.msk [vmem:[#allocation3 + $0x50] sm:$0xff] %vm1575, %v3472
        %3558 = vst.msk [vmem:[#allocation3 + $0x58] sm:$0xff] %vm1575, %v3474
        %3559 = vst.msk [vmem:[#allocation3 + $0x60] sm:$0xff] %vm1575, %v3476
        %3560 = vst.msk [vmem:[#allocation3 + $0x68] sm:$0xff] %vm1575, %v3478
        %3561 = vst.msk [vmem:[#allocation3 + $0x70] sm:$0xff] %vm1575, %v3480
        %3562 = vst.msk [vmem:[#allocation3 + $0x78] sm:$0xff] %vm1575, %v3482
        %3563 = vst.msk [vmem:[#allocation3 + $0x80] sm:$0xff] %vm1575, %v3484
        %3564 = vst.msk [vmem:[#allocation3 + $0x88] sm:$0xff] %vm1575, %v3486
        %3565 = vst.msk [vmem:[#allocation3 + $0x90] sm:$0xff] %vm1575, %v3488
        %3566 = vst.msk [vmem:[#allocation3 + $0x98] sm:$0xff] %vm1575, %v3490
        %3567 = vst.msk [vmem:[#allocation3 + $0xa0] sm:$0xff] %vm1575, %v3492
        %3568 = vst.msk [vmem:[#allocation3 + $0xa8] sm:$0xff] %vm1575, %v3494
        %3569 = vst.msk [vmem:[#allocation3 + $0xb0] sm:$0xff] %vm1575, %v3496
        %3570 = vst.msk [vmem:[#allocation3 + $0xb8] sm:$0xff] %vm1575, %v3498
        %3571 = vst.msk [vmem:[#allocation3 + $0xc0] sm:$0xff] %vm1575, %v3500
        %3572 = vst.msk [vmem:[#allocation3 + $0xc8] sm:$0xff] %vm1575, %v3502
        %3573 = vst.msk [vmem:[#allocation3 + $0xd0] sm:$0xff] %vm1575, %v3504
        %3574 = vst.msk [vmem:[#allocation3 + $0xd8] sm:$0xff] %vm1575, %v3506
        %3575 = vst.msk [vmem:[#allocation3 + $0xe0] sm:$0xff] %vm1575, %v3508
        %3576 = vst.msk [vmem:[#allocation3 + $0xe8] sm:$0xff] %vm1575, %v3510
        %3577 = vst.msk [vmem:[#allocation3 + $0xf0] sm:$0xff] %vm1575, %v3512
        %3578 = vst.msk [vmem:[#allocation3 + $0xf8] sm:$0xff] %vm1575, %v3514
        %v3579 = vld [vmem:[%s1414 + $0x1] sm:$0xff]
        %v3580 = vld [vmem:[%s1414 + $0x9] sm:$0xff]
        %v3581 = vld [vmem:[%s1414 + $0x19] sm:$0xff]
        %v3582 = vld [vmem:[%s1414 + $0x21] sm:$0xff]
        %v3583 = vld [vmem:[%s1414 + $0x31] sm:$0xff]
        %v3584 = vld [vmem:[%s1414 + $0x39] sm:$0xff]
        %v3585 = vld [vmem:[%s1414 + $0x49] sm:$0xff]
        %v3586 = vld [vmem:[%s1414 + $0x51] sm:$0xff]
        %v3587 = vld [vmem:[%s1414 + $0x61] sm:$0xff]
        %v3588 = vld [vmem:[%s1414 + $0x69] sm:$0xff]
        %v3589 = vld [vmem:[%s1414 + $0x79] sm:$0xff]
        %v3590 = vld [vmem:[%s1414 + $0x81] sm:$0xff]
        %v3591 = vld [vmem:[%s1414 + $0x91] sm:$0xff]
        %v3592 = vld [vmem:[%s1414 + $0x99] sm:$0xff]
        %v3593 = vld [vmem:[%s1414 + $0xa9] sm:$0xff]
        %v3594 = vld [vmem:[%s1414 + $0xb1] sm:$0xff]
        %v3595 = vld [vmem:[%s1414 + $0xc1] sm:$0xff]
        %v3596 = vld [vmem:[%s1414 + $0xc9] sm:$0xff]
        %v3597 = vld [vmem:[%s1414 + $0xd9] sm:$0xff]
        %v3598 = vld [vmem:[%s1414 + $0xe1] sm:$0xff]
        %v3599 = vld [vmem:[%s1414 + $0xf1] sm:$0xff]
        %v3600 = vld [vmem:[%s1414 + $0xf9] sm:$0xff]
        %v3601 = vld [vmem:[%s1414 + $0x109] sm:$0xff]
        %v3602 = vld [vmem:[%s1414 + $0x111] sm:$0xff]
        %v3603 = vld [vmem:[%s1414 + $0x121] sm:$0xff]
        %v3604 = vld [vmem:[%s1414 + $0x129] sm:$0xff]
        %v3605 = vld [vmem:[%s1414 + $0x139] sm:$0xff]
        %v3606 = vld [vmem:[%s1414 + $0x141] sm:$0xff]
        %v3607 = vld [vmem:[%s1414 + $0x151] sm:$0xff]
        %v3608 = vld [vmem:[%s1414 + $0x159] sm:$0xff]
        %v3609 = vld [vmem:[%s1414 + $0x169] sm:$0xff]
        %v3610 = vld [vmem:[%s1414 + $0x171] sm:$0xff]
        %3643 = vrot.lane.b32.xlu0 %v3579, 56
        %v3644 = vpop.permute.xlu0 %3643
        %3645 = vrot.lane.b32.xlu0 %v3580, 56
        %v3646 = vpop.permute.xlu0 %3645
        %3647 = vrot.lane.b32.xlu0 %v3581, 56
        %v3648 = vpop.permute.xlu0 %3647
        %3649 = vrot.lane.b32.xlu0 %v3582, 56
        %v3650 = vpop.permute.xlu0 %3649
        %3651 = vrot.lane.b32.xlu0 %v3583, 56
        %v3652 = vpop.permute.xlu0 %3651
        %3653 = vrot.lane.b32.xlu0 %v3584, 56
        %v3654 = vpop.permute.xlu0 %3653
        %3655 = vrot.lane.b32.xlu0 %v3585, 56
        %v3656 = vpop.permute.xlu0 %3655
        %3657 = vrot.lane.b32.xlu0 %v3586, 56
        %v3658 = vpop.permute.xlu0 %3657
        %3659 = vrot.lane.b32.xlu0 %v3587, 56
        %v3660 = vpop.permute.xlu0 %3659
        %3661 = vrot.lane.b32.xlu0 %v3588, 56
        %v3662 = vpop.permute.xlu0 %3661
        %3663 = vrot.lane.b32.xlu0 %v3589, 56
        %v3664 = vpop.permute.xlu0 %3663
        %3665 = vrot.lane.b32.xlu0 %v3590, 56
        %v3666 = vpop.permute.xlu0 %3665
        %3667 = vrot.lane.b32.xlu0 %v3591, 56
        %v3668 = vpop.permute.xlu0 %3667
        %3669 = vrot.lane.b32.xlu0 %v3592, 56
        %v3670 = vpop.permute.xlu0 %3669
        %3671 = vrot.lane.b32.xlu0 %v3593, 56
        %v3672 = vpop.permute.xlu0 %3671
        %3673 = vrot.lane.b32.xlu0 %v3594, 56
        %v3674 = vpop.permute.xlu0 %3673
        %3675 = vrot.lane.b32.xlu0 %v3595, 56
        %v3676 = vpop.permute.xlu0 %3675
        %3677 = vrot.lane.b32.xlu0 %v3596, 56
        %v3678 = vpop.permute.xlu0 %3677
        %3679 = vrot.lane.b32.xlu0 %v3597, 56
        %v3680 = vpop.permute.xlu0 %3679
        %3681 = vrot.lane.b32.xlu0 %v3598, 56
        %v3682 = vpop.permute.xlu0 %3681
        %3683 = vrot.lane.b32.xlu0 %v3599, 56
        %v3684 = vpop.permute.xlu0 %3683
        %3685 = vrot.lane.b32.xlu0 %v3600, 56
        %v3686 = vpop.permute.xlu0 %3685
        %3687 = vrot.lane.b32.xlu0 %v3601, 56
        %v3688 = vpop.permute.xlu0 %3687
        %3689 = vrot.lane.b32.xlu0 %v3602, 56
        %v3690 = vpop.permute.xlu0 %3689
        %3691 = vrot.lane.b32.xlu0 %v3603, 56
        %v3692 = vpop.permute.xlu0 %3691
        %3693 = vrot.lane.b32.xlu0 %v3604, 56
        %v3694 = vpop.permute.xlu0 %3693
        %3695 = vrot.lane.b32.xlu0 %v3605, 56
        %v3696 = vpop.permute.xlu0 %3695
        %3697 = vrot.lane.b32.xlu0 %v3606, 56
        %v3698 = vpop.permute.xlu0 %3697
        %3699 = vrot.lane.b32.xlu0 %v3607, 56
        %v3700 = vpop.permute.xlu0 %3699
        %3701 = vrot.lane.b32.xlu0 %v3608, 56
        %v3702 = vpop.permute.xlu0 %3701
        %3703 = vrot.lane.b32.xlu0 %v3609, 56
        %v3704 = vpop.permute.xlu0 %3703
        %3705 = vrot.lane.b32.xlu0 %v3610, 56
        %v3706 = vpop.permute.xlu0 %3705
        %3739 = vst.msk [vmem:[#allocation3] sm:$0xff] %vm1768, %v3644
        %3740 = vst.msk [vmem:[#allocation3 + $0x8] sm:$0xff] %vm1768, %v3646
        %3741 = vst.msk [vmem:[#allocation3 + $0x10] sm:$0xff] %vm1768, %v3648
        %3742 = vst.msk [vmem:[#allocation3 + $0x18] sm:$0xff] %vm1768, %v3650
        %3743 = vst.msk [vmem:[#allocation3 + $0x20] sm:$0xff] %vm1768, %v3652
        %3744 = vst.msk [vmem:[#allocation3 + $0x28] sm:$0xff] %vm1768, %v3654
        %3745 = vst.msk [vmem:[#allocation3 + $0x30] sm:$0xff] %vm1768, %v3656
        %3746 = vst.msk [vmem:[#allocation3 + $0x38] sm:$0xff] %vm1768, %v3658
        %3747 = vst.msk [vmem:[#allocation3 + $0x40] sm:$0xff] %vm1768, %v3660
        %3748 = vst.msk [vmem:[#allocation3 + $0x48] sm:$0xff] %vm1768, %v3662
        %3749 = vst.msk [vmem:[#allocation3 + $0x50] sm:$0xff] %vm1768, %v3664
        %3750 = vst.msk [vmem:[#allocation3 + $0x58] sm:$0xff] %vm1768, %v3666
        %3751 = vst.msk [vmem:[#allocation3 + $0x60] sm:$0xff] %vm1768, %v3668
        %3752 = vst.msk [vmem:[#allocation3 + $0x68] sm:$0xff] %vm1768, %v3670
        %3753 = vst.msk [vmem:[#allocation3 + $0x70] sm:$0xff] %vm1768, %v3672
        %3754 = vst.msk [vmem:[#allocation3 + $0x78] sm:$0xff] %vm1768, %v3674
        %3755 = vst.msk [vmem:[#allocation3 + $0x80] sm:$0xff] %vm1768, %v3676
        %3756 = vst.msk [vmem:[#allocation3 + $0x88] sm:$0xff] %vm1768, %v3678
        %3757 = vst.msk [vmem:[#allocation3 + $0x90] sm:$0xff] %vm1768, %v3680
        %3758 = vst.msk [vmem:[#allocation3 + $0x98] sm:$0xff] %vm1768, %v3682
        %3759 = vst.msk [vmem:[#allocation3 + $0xa0] sm:$0xff] %vm1768, %v3684
        %3760 = vst.msk [vmem:[#allocation3 + $0xa8] sm:$0xff] %vm1768, %v3686
        %3761 = vst.msk [vmem:[#allocation3 + $0xb0] sm:$0xff] %vm1768, %v3688
        %3762 = vst.msk [vmem:[#allocation3 + $0xb8] sm:$0xff] %vm1768, %v3690
        %3763 = vst.msk [vmem:[#allocation3 + $0xc0] sm:$0xff] %vm1768, %v3692
        %3764 = vst.msk [vmem:[#allocation3 + $0xc8] sm:$0xff] %vm1768, %v3694
        %3765 = vst.msk [vmem:[#allocation3 + $0xd0] sm:$0xff] %vm1768, %v3696
        %3766 = vst.msk [vmem:[#allocation3 + $0xd8] sm:$0xff] %vm1768, %v3698
        %3767 = vst.msk [vmem:[#allocation3 + $0xe0] sm:$0xff] %vm1768, %v3700
        %3768 = vst.msk [vmem:[#allocation3 + $0xe8] sm:$0xff] %vm1768, %v3702
        %3769 = vst.msk [vmem:[#allocation3 + $0xf0] sm:$0xff] %vm1768, %v3704
        %3770 = vst.msk [vmem:[#allocation3 + $0xf8] sm:$0xff] %vm1768, %v3706
        %v3771 = vld [vmem:[%s1414 + $0x2] sm:$0xff]
        %v3772 = vld [vmem:[%s1414 + $0xa] sm:$0xff]
        %v3773 = vld [vmem:[%s1414 + $0x1a] sm:$0xff]
        %v3774 = vld [vmem:[%s1414 + $0x22] sm:$0xff]
        %v3775 = vld [vmem:[%s1414 + $0x32] sm:$0xff]
        %v3776 = vld [vmem:[%s1414 + $0x3a] sm:$0xff]
        %v3777 = vld [vmem:[%s1414 + $0x4a] sm:$0xff]
        %v3778 = vld [vmem:[%s1414 + $0x52] sm:$0xff]
        %v3779 = vld [vmem:[%s1414 + $0x62] sm:$0xff]
        %v3780 = vld [vmem:[%s1414 + $0x6a] sm:$0xff]
        %v3781 = vld [vmem:[%s1414 + $0x7a] sm:$0xff]
        %v3782 = vld [vmem:[%s1414 + $0x82] sm:$0xff]
        %v3783 = vld [vmem:[%s1414 + $0x92] sm:$0xff]
        %v3784 = vld [vmem:[%s1414 + $0x9a] sm:$0xff]
        %v3785 = vld [vmem:[%s1414 + $0xaa] sm:$0xff]
        %v3786 = vld [vmem:[%s1414 + $0xb2] sm:$0xff]
        %v3787 = vld [vmem:[%s1414 + $0xc2] sm:$0xff]
        %v3788 = vld [vmem:[%s1414 + $0xca] sm:$0xff]
        %v3789 = vld [vmem:[%s1414 + $0xda] sm:$0xff]
        %v3790 = vld [vmem:[%s1414 + $0xe2] sm:$0xff]
        %v3791 = vld [vmem:[%s1414 + $0xf2] sm:$0xff]
        %v3792 = vld [vmem:[%s1414 + $0xfa] sm:$0xff]
        %v3793 = vld [vmem:[%s1414 + $0x10a] sm:$0xff]
        %v3794 = vld [vmem:[%s1414 + $0x112] sm:$0xff]
        %v3795 = vld [vmem:[%s1414 + $0x122] sm:$0xff]
        %v3796 = vld [vmem:[%s1414 + $0x12a] sm:$0xff]
        %v3797 = vld [vmem:[%s1414 + $0x13a] sm:$0xff]
        %v3798 = vld [vmem:[%s1414 + $0x142] sm:$0xff]
        %v3799 = vld [vmem:[%s1414 + $0x152] sm:$0xff]
        %v3800 = vld [vmem:[%s1414 + $0x15a] sm:$0xff]
        %v3801 = vld [vmem:[%s1414 + $0x16a] sm:$0xff]
        %v3802 = vld [vmem:[%s1414 + $0x172] sm:$0xff]
        %3835 = vrot.lane.b32.xlu0 %v3771, 64
        %v3836 = vpop.permute.xlu0 %3835
        %3837 = vrot.lane.b32.xlu0 %v3772, 64
        %v3838 = vpop.permute.xlu0 %3837
        %3839 = vrot.lane.b32.xlu0 %v3773, 64
        %v3840 = vpop.permute.xlu0 %3839
        %3841 = vrot.lane.b32.xlu0 %v3774, 64
        %v3842 = vpop.permute.xlu0 %3841
        %3843 = vrot.lane.b32.xlu0 %v3775, 64
        %v3844 = vpop.permute.xlu0 %3843
        %3845 = vrot.lane.b32.xlu0 %v3776, 64
        %v3846 = vpop.permute.xlu0 %3845
        %3847 = vrot.lane.b32.xlu0 %v3777, 64
        %v3848 = vpop.permute.xlu0 %3847
        %3849 = vrot.lane.b32.xlu0 %v3778, 64
        %v3850 = vpop.permute.xlu0 %3849
        %3851 = vrot.lane.b32.xlu0 %v3779, 64
        %v3852 = vpop.permute.xlu0 %3851
        %3853 = vrot.lane.b32.xlu0 %v3780, 64
        %v3854 = vpop.permute.xlu0 %3853
        %3855 = vrot.lane.b32.xlu0 %v3781, 64
        %v3856 = vpop.permute.xlu0 %3855
        %3857 = vrot.lane.b32.xlu0 %v3782, 64
        %v3858 = vpop.permute.xlu0 %3857
        %3859 = vrot.lane.b32.xlu0 %v3783, 64
        %v3860 = vpop.permute.xlu0 %3859
        %3861 = vrot.lane.b32.xlu0 %v3784, 64
        %v3862 = vpop.permute.xlu0 %3861
        %3863 = vrot.lane.b32.xlu0 %v3785, 64
        %v3864 = vpop.permute.xlu0 %3863
        %3865 = vrot.lane.b32.xlu0 %v3786, 64
        %v3866 = vpop.permute.xlu0 %3865
        %3867 = vrot.lane.b32.xlu0 %v3787, 64
        %v3868 = vpop.permute.xlu0 %3867
        %3869 = vrot.lane.b32.xlu0 %v3788, 64
        %v3870 = vpop.permute.xlu0 %3869
        %3871 = vrot.lane.b32.xlu0 %v3789, 64
        %v3872 = vpop.permute.xlu0 %3871
        %3873 = vrot.lane.b32.xlu0 %v3790, 64
        %v3874 = vpop.permute.xlu0 %3873
        %3875 = vrot.lane.b32.xlu0 %v3791, 64
        %v3876 = vpop.permute.xlu0 %3875
        %3877 = vrot.lane.b32.xlu0 %v3792, 64
        %v3878 = vpop.permute.xlu0 %3877
        %3879 = vrot.lane.b32.xlu0 %v3793, 64
        %v3880 = vpop.permute.xlu0 %3879
        %3881 = vrot.lane.b32.xlu0 %v3794, 64
        %v3882 = vpop.permute.xlu0 %3881
        %3883 = vrot.lane.b32.xlu0 %v3795, 64
        %v3884 = vpop.permute.xlu0 %3883
        %3885 = vrot.lane.b32.xlu0 %v3796, 64
        %v3886 = vpop.permute.xlu0 %3885
        %3887 = vrot.lane.b32.xlu0 %v3797, 64
        %v3888 = vpop.permute.xlu0 %3887
        %3889 = vrot.lane.b32.xlu0 %v3798, 64
        %v3890 = vpop.permute.xlu0 %3889
        %3891 = vrot.lane.b32.xlu0 %v3799, 64
        %v3892 = vpop.permute.xlu0 %3891
        %3893 = vrot.lane.b32.xlu0 %v3800, 64
        %v3894 = vpop.permute.xlu0 %3893
        %3895 = vrot.lane.b32.xlu0 %v3801, 64
        %v3896 = vpop.permute.xlu0 %3895
        %3897 = vrot.lane.b32.xlu0 %v3802, 64
        %v3898 = vpop.permute.xlu0 %3897
        %3931 = vst.msk [vmem:[#allocation3] sm:$0xff] %vm1961, %v3836
        %3932 = vst.msk [vmem:[#allocation3 + $0x8] sm:$0xff] %vm1961, %v3838
        %3933 = vst.msk [vmem:[#allocation3 + $0x10] sm:$0xff] %vm1961, %v3840
        %3934 = vst.msk [vmem:[#allocation3 + $0x18] sm:$0xff] %vm1961, %v3842
        %3935 = vst.msk [vmem:[#allocation3 + $0x20] sm:$0xff] %vm1961, %v3844
        %3936 = vst.msk [vmem:[#allocation3 + $0x28] sm:$0xff] %vm1961, %v3846
        %3937 = vst.msk [vmem:[#allocation3 + $0x30] sm:$0xff] %vm1961, %v3848
        %3938 = vst.msk [vmem:[#allocation3 + $0x38] sm:$0xff] %vm1961, %v3850
        %3939 = vst.msk [vmem:[#allocation3 + $0x40] sm:$0xff] %vm1961, %v3852
        %3940 = vst.msk [vmem:[#allocation3 + $0x48] sm:$0xff] %vm1961, %v3854
        %3941 = vst.msk [vmem:[#allocation3 + $0x50] sm:$0xff] %vm1961, %v3856
        %3942 = vst.msk [vmem:[#allocation3 + $0x58] sm:$0xff] %vm1961, %v3858
        %3943 = vst.msk [vmem:[#allocation3 + $0x60] sm:$0xff] %vm1961, %v3860
        %3944 = vst.msk [vmem:[#allocation3 + $0x68] sm:$0xff] %vm1961, %v3862
        %3945 = vst.msk [vmem:[#allocation3 + $0x70] sm:$0xff] %vm1961, %v3864
        %3946 = vst.msk [vmem:[#allocation3 + $0x78] sm:$0xff] %vm1961, %v3866
        %3947 = vst.msk [vmem:[#allocation3 + $0x80] sm:$0xff] %vm1961, %v3868
        %3948 = vst.msk [vmem:[#allocation3 + $0x88] sm:$0xff] %vm1961, %v3870
        %3949 = vst.msk [vmem:[#allocation3 + $0x90] sm:$0xff] %vm1961, %v3872
        %3950 = vst.msk [vmem:[#allocation3 + $0x98] sm:$0xff] %vm1961, %v3874
        %3951 = vst.msk [vmem:[#allocation3 + $0xa0] sm:$0xff] %vm1961, %v3876
        %3952 = vst.msk [vmem:[#allocation3 + $0xa8] sm:$0xff] %vm1961, %v3878
        %3953 = vst.msk [vmem:[#allocation3 + $0xb0] sm:$0xff] %vm1961, %v3880
        %3954 = vst.msk [vmem:[#allocation3 + $0xb8] sm:$0xff] %vm1961, %v3882
        %3955 = vst.msk [vmem:[#allocation3 + $0xc0] sm:$0xff] %vm1961, %v3884
        %3956 = vst.msk [vmem:[#allocation3 + $0xc8] sm:$0xff] %vm1961, %v3886
        %3957 = vst.msk [vmem:[#allocation3 + $0xd0] sm:$0xff] %vm1961, %v3888
        %3958 = vst.msk [vmem:[#allocation3 + $0xd8] sm:$0xff] %vm1961, %v3890
        %3959 = vst.msk [vmem:[#allocation3 + $0xe0] sm:$0xff] %vm1961, %v3892
        %3960 = vst.msk [vmem:[#allocation3 + $0xe8] sm:$0xff] %vm1961, %v3894
        %3961 = vst.msk [vmem:[#allocation3 + $0xf0] sm:$0xff] %vm1961, %v3896
        %3962 = vst.msk [vmem:[#allocation3 + $0xf8] sm:$0xff] %vm1961, %v3898
        %v3963 = vld [vmem:[#allocation3] sm:$0xff]
        %v3964 = vld [vmem:[#allocation3 + $0x8] sm:$0xff]
        %v3965 = vld [vmem:[#allocation3 + $0x10] sm:$0xff]
        %v3966 = vld [vmem:[#allocation3 + $0x18] sm:$0xff]
        %v3967 = vld [vmem:[#allocation3 + $0x20] sm:$0xff]
        %v3968 = vld [vmem:[#allocation3 + $0x28] sm:$0xff]
        %v3969 = vld [vmem:[#allocation3 + $0x30] sm:$0xff]
        %v3970 = vld [vmem:[#allocation3 + $0x38] sm:$0xff]
        %v3971 = vld [vmem:[#allocation3 + $0x40] sm:$0xff]
        %v3972 = vld [vmem:[#allocation3 + $0x48] sm:$0xff]
        %v3973 = vld [vmem:[#allocation3 + $0x50] sm:$0xff]
        %v3974 = vld [vmem:[#allocation3 + $0x58] sm:$0xff]
        %v3975 = vld [vmem:[#allocation3 + $0x60] sm:$0xff]
        %v3976 = vld [vmem:[#allocation3 + $0x68] sm:$0xff]
        %v3977 = vld [vmem:[#allocation3 + $0x70] sm:$0xff]
        %v3978 = vld [vmem:[#allocation3 + $0x78] sm:$0xff]
        %v3979 = vld [vmem:[#allocation3 + $0x80] sm:$0xff]
        %v3980 = vld [vmem:[#allocation3 + $0x88] sm:$0xff]
        %v3981 = vld [vmem:[#allocation3 + $0x90] sm:$0xff]
        %v3982 = vld [vmem:[#allocation3 + $0x98] sm:$0xff]
        %v3983 = vld [vmem:[#allocation3 + $0xa0] sm:$0xff]
        %v3984 = vld [vmem:[#allocation3 + $0xa8] sm:$0xff]
        %v3985 = vld [vmem:[#allocation3 + $0xb0] sm:$0xff]
        %v3986 = vld [vmem:[#allocation3 + $0xb8] sm:$0xff]
        %v3987 = vld [vmem:[#allocation3 + $0xc0] sm:$0xff]
        %v3988 = vld [vmem:[#allocation3 + $0xc8] sm:$0xff]
        %v3989 = vld [vmem:[#allocation3 + $0xd0] sm:$0xff]
        %v3990 = vld [vmem:[#allocation3 + $0xd8] sm:$0xff]
        %v3991 = vld [vmem:[#allocation3 + $0xe0] sm:$0xff]
        %v3992 = vld [vmem:[#allocation3 + $0xe8] sm:$0xff]
        %v3993 = vld [vmem:[#allocation3 + $0xf0] sm:$0xff]
        %v3994 = vld [vmem:[#allocation3 + $0xf8] sm:$0xff]
        %v3995 = vpack.c.bf16 %v3964, %v3963
        %v3996 = vpack.c.bf16 %v3966, %v3965
        %v3997 = vpack.c.bf16 %v3968, %v3967
        %v3998 = vpack.c.bf16 %v3970, %v3969
        %v3999 = vpack.c.bf16 %v3972, %v3971
        %v4000 = vpack.c.bf16 %v3974, %v3973
        %v4001 = vpack.c.bf16 %v3976, %v3975
        %v4002 = vpack.c.bf16 %v3978, %v3977
        %v4003 = vpack.c.bf16 %v3980, %v3979
        %v4004 = vpack.c.bf16 %v3982, %v3981
        %v4005 = vpack.c.bf16 %v3984, %v3983
        %v4006 = vpack.c.bf16 %v3986, %v3985
        %v4007 = vpack.c.bf16 %v3988, %v3987
        %v4008 = vpack.c.bf16 %v3990, %v3989
        %v4009 = vpack.c.bf16 %v3992, %v3991
        %v4010 = vpack.c.bf16 %v3994, %v3993
        %v4012 = vlaneseq
        %v4013 = vshrl.u32 %v4012, 7
        %v4014 = vsub.s32 0, %v4013
        %v4015 = vrot.slane %v2362, %v4014
        %v4026 = vunpack.c.l.b16 %v2353
        %v4027 = vunpack.c.l.b16 %v2354
        %v4028 = vunpack.c.l.b16 %v2355
        %v4029 = vunpack.c.l.b16 %v2356
        %v4030 = vunpack.c.l.b16 %v2357
        %v4031 = vunpack.c.l.b16 %v2358
        %v4032 = vunpack.c.l.b16 %v2359
        %v4033 = vunpack.c.l.b16 %v2360
        %v4034 = vunpack.c.l.b16 %v2361
        %v4035 = vpack.c.b16 %v4027, %v4026
        %v4036 = vpack.c.b16 %v4029, %v4028
        %v4037 = vpack.c.b16 %v4031, %v4030
        %v4038 = vpack.c.b16 %v4033, %v4032
        %v4039 = vpack.c.b16 %v4034, %v4034
        %v4045 = vsel %vm2075, %v3995, 0
        %v4048 = vsel %vm2075, %v3996, 0
        %v4051 = vsel %vm2075, %v3997, 0
        %v4054 = vsel %vm2075, %v3998, 0
        %v4057 = vsel %vm2075, %v3999, 0
        %v4060 = vsel %vm2075, %v4000, 0
        %v4063 = vsel %vm2075, %v4001, 0
        %v4066 = vsel %vm2075, %v4002, 0
        %v4069 = vsel %vm2075, %v4003, 0
        %v4072 = vsel %vm2075, %v4004, 0
        %v4075 = vsel %vm2075, %v4005, 0
        %v4078 = vsel %vm2075, %v4006, 0
        %v4081 = vsel %vm2075, %v4007, 0
        %v4084 = vsel %vm2075, %v4008, 0
        %v4087 = vsel %vm2075, %v4009, 0
        %v4090 = vsel %vm2075, %v4010, 0
        %v4093 = vsel %vm2124, %v4039, 0
        %4095 = vmatprep.subr.bf16.mxu0 0
        %4096 = vmatpush1.bf16.msra.mxu0 %v4035
        %4097 = vmatprep.subr.bf16.mxu0 0
        %4098 = vmatpush1.bf16.msra.mxu0 %v4036
        %4099 = vmatprep.subr.bf16.mxu0 0
        %4100 = vmatpush1.bf16.msra.mxu0 %v4037
        %4101 = vmatprep.subr.bf16.mxu0 0
        %4102 = vmatpush1.bf16.msra.mxu0 %v4038
        %4103 = vmatprep.subr.bf16.mxu0 0
        %4104 = vmatpush1.bf16.msra.mxu0 %v4093
        %4105 = vmatprep.subr.bf16.mxu0 0
        %4106 = vmatpush1.bf16.msra.mxu0 0
        %4107 = vmatprep.subr.bf16.mxu0 0
        %4108 = vmatpush1.bf16.msra.mxu0 0
        %4109 = vmatprep.subr.bf16.mxu0 0
        %4110 = vmatpush1.bf16.msra.mxu0 0
        %4111 = vmatprep.subr.bf16.mxu0 0
        %4112 = vmatpush1.bf16.msra.mxu0 0
        %4113 = vmatprep.subr.bf16.mxu0 0
        %4114 = vmatpush1.bf16.msra.mxu0 0
        %4115 = vmatprep.subr.bf16.mxu0 0
        %4116 = vmatpush1.bf16.msra.mxu0 0
        %4117 = vmatprep.subr.bf16.mxu0 0
        %4118 = vmatpush1.bf16.msra.mxu0 0
        %4119 = vmatprep.subr.bf16.mxu0 0
        %4120 = vmatpush1.bf16.msra.mxu0 0
        %4121 = vmatprep.subr.bf16.mxu0 0
        %4122 = vmatpush1.bf16.msra.mxu0 0
        %4123 = vmatprep.subr.bf16.mxu0 0
        %4124 = vmatpush1.bf16.msra.mxu0 0
        %4125 = vmatprep.subr.bf16.mxu0 0
        %4126 = vmatpush1.bf16.msra.mxu0 0
        %4127 = vmatprep.mubr.bf16.mxu0 0
        %4128 = vmatmul.mubr.bf16.gmra.mrb[0].mxu0 %v4045
        %v4129 = vpop.f32.mrb[0].mxu0
        %v4130 = vadd.f32 %v4015, %v4129
        %v4131 = vpop.f32.mrb[0].mxu0
        %v4132 = vpop.f32.mrb[0].mxu0
        %v4133 = vadd.f32 %v4015, %v4132
        %v4134 = vpop.f32.mrb[0].mxu0
        %4135 = vmatprep.mubr.bf16.mxu0 0
        %4136 = vmatmul.mubr.bf16.gmra.mrb[0].mxu0 %v4048
        %v4137 = vpop.f32.mrb[0].mxu0
        %v4138 = vadd.f32 %v4015, %v4137
        %v4139 = vpop.f32.mrb[0].mxu0
        %v4140 = vpop.f32.mrb[0].mxu0
        %v4141 = vadd.f32 %v4015, %v4140
        %v4142 = vpop.f32.mrb[0].mxu0
        %4143 = vmatprep.mubr.bf16.mxu0 0
        %4144 = vmatmul.mubr.bf16.gmra.mrb[0].mxu0 %v4051
        %v4145 = vpop.f32.mrb[0].mxu0
        %v4146 = vadd.f32 %v4015, %v4145
        %v4147 = vpop.f32.mrb[0].mxu0
        %v4148 = vpop.f32.mrb[0].mxu0
        %v4149 = vadd.f32 %v4015, %v4148
        %v4150 = vpop.f32.mrb[0].mxu0
        %4151 = vmatprep.mubr.bf16.mxu0 0
        %4152 = vmatmul.mubr.bf16.gmra.mrb[0].mxu0 %v4054
        %v4153 = vpop.f32.mrb[0].mxu0
        %v4154 = vadd.f32 %v4015, %v4153
        %v4155 = vpop.f32.mrb[0].mxu0
        %v4156 = vpop.f32.mrb[0].mxu0
        %v4157 = vadd.f32 %v4015, %v4156
        %v4158 = vpop.f32.mrb[0].mxu0
        %4159 = vmatprep.mubr.bf16.mxu0 0
        %4160 = vmatmul.mubr.bf16.gmra.mrb[0].mxu0 %v4057
        %v4161 = vpop.f32.mrb[0].mxu0
        %v4162 = vadd.f32 %v4015, %v4161
        %v4163 = vpop.f32.mrb[0].mxu0
        %v4164 = vpop.f32.mrb[0].mxu0
        %v4165 = vadd.f32 %v4015, %v4164
        %v4166 = vpop.f32.mrb[0].mxu0
        %4167 = vmatprep.mubr.bf16.mxu0 0
        %4168 = vmatmul.mubr.bf16.gmra.mrb[0].mxu0 %v4060
        %v4169 = vpop.f32.mrb[0].mxu0
        %v4170 = vadd.f32 %v4015, %v4169
        %v4171 = vpop.f32.mrb[0].mxu0
        %v4172 = vpop.f32.mrb[0].mxu0
        %v4173 = vadd.f32 %v4015, %v4172
        %v4174 = vpop.f32.mrb[0].mxu0
        %4175 = vmatprep.mubr.bf16.mxu0 0
        %4176 = vmatmul.mubr.bf16.gmra.mrb[0].mxu0 %v4063
        %v4177 = vpop.f32.mrb[0].mxu0
        %v4178 = vadd.f32 %v4015, %v4177
        %v4179 = vpop.f32.mrb[0].mxu0
        %v4180 = vpop.f32.mrb[0].mxu0
        %v4181 = vadd.f32 %v4015, %v4180
        %v4182 = vpop.f32.mrb[0].mxu0
        %4183 = vmatprep.mubr.bf16.mxu0 0
        %4184 = vmatmul.mubr.bf16.gmra.mrb[0].mxu0 %v4066
        %v4185 = vpop.f32.mrb[0].mxu0
        %v4186 = vadd.f32 %v4015, %v4185
        %v4187 = vpop.f32.mrb[0].mxu0
        %v4188 = vpop.f32.mrb[0].mxu0
        %v4189 = vadd.f32 %v4015, %v4188
        %v4190 = vpop.f32.mrb[0].mxu0
        %4191 = vmatprep.mubr.bf16.mxu0 0
        %4192 = vmatmul.mubr.bf16.gmra.mrb[0].mxu0 %v4069
        %v4193 = vpop.f32.mrb[0].mxu0
        %v4194 = vadd.f32 %v4015, %v4193
        %v4195 = vpop.f32.mrb[0].mxu0
        %v4196 = vpop.f32.mrb[0].mxu0
        %v4197 = vadd.f32 %v4015, %v4196
        %v4198 = vpop.f32.mrb[0].mxu0
        %4199 = vmatprep.mubr.bf16.mxu0 0
        %4200 = vmatmul.mubr.bf16.gmra.mrb[0].mxu0 %v4072
        %v4201 = vpop.f32.mrb[0].mxu0
        %v4202 = vadd.f32 %v4015, %v4201
        %v4203 = vpop.f32.mrb[0].mxu0
        %v4204 = vpop.f32.mrb[0].mxu0
        %v4205 = vadd.f32 %v4015, %v4204
        %v4206 = vpop.f32.mrb[0].mxu0
        %4207 = vmatprep.mubr.bf16.mxu0 0
        %4208 = vmatmul.mubr.bf16.gmra.mrb[0].mxu0 %v4075
        %v4209 = vpop.f32.mrb[0].mxu0
        %v4210 = vadd.f32 %v4015, %v4209
        %v4211 = vpop.f32.mrb[0].mxu0
        %v4212 = vpop.f32.mrb[0].mxu0
        %v4213 = vadd.f32 %v4015, %v4212
        %v4214 = vpop.f32.mrb[0].mxu0
        %4215 = vmatprep.mubr.bf16.mxu0 0
        %4216 = vmatmul.mubr.bf16.gmra.mrb[0].mxu0 %v4078
        %v4217 = vpop.f32.mrb[0].mxu0
        %v4218 = vadd.f32 %v4015, %v4217
        %v4219 = vpop.f32.mrb[0].mxu0
        %v4220 = vpop.f32.mrb[0].mxu0
        %v4221 = vadd.f32 %v4015, %v4220
        %v4222 = vpop.f32.mrb[0].mxu0
        %4223 = vmatprep.mubr.bf16.mxu0 0
        %4224 = vmatmul.mubr.bf16.gmra.mrb[0].mxu0 %v4081
        %v4225 = vpop.f32.mrb[0].mxu0
        %v4226 = vadd.f32 %v4015, %v4225
        %v4227 = vpop.f32.mrb[0].mxu0
        %v4228 = vpop.f32.mrb[0].mxu0
        %v4229 = vadd.f32 %v4015, %v4228
        %v4230 = vpop.f32.mrb[0].mxu0
        %4231 = vmatprep.mubr.bf16.mxu0 0
        %4232 = vmatmul.mubr.bf16.gmra.mrb[0].mxu0 %v4084
        %v4233 = vpop.f32.mrb[0].mxu0
        %v4234 = vadd.f32 %v4015, %v4233
        %v4235 = vpop.f32.mrb[0].mxu0
        %v4236 = vpop.f32.mrb[0].mxu0
        %v4237 = vadd.f32 %v4015, %v4236
        %v4238 = vpop.f32.mrb[0].mxu0
        %4239 = vmatprep.mubr.bf16.mxu0 0
        %4240 = vmatmul.mubr.bf16.gmra.mrb[0].mxu0 %v4087
        %v4241 = vpop.f32.mrb[0].mxu0
        %v4242 = vadd.f32 %v4015, %v4241
        %v4243 = vpop.f32.mrb[0].mxu0
        %v4244 = vpop.f32.mrb[0].mxu0
        %v4245 = vadd.f32 %v4015, %v4244
        %v4246 = vpop.f32.mrb[0].mxu0
        %4247 = vmatprep.mubr.bf16.mxu0 0
        %4248 = vmatmul.mubr.bf16.gmra.mrb[0].mxu0 %v4090
        %v4249 = vpop.f32.mrb[0].mxu0
        %v4250 = vadd.f32 %v4015, %v4249
        %v4251 = vpop.f32.mrb[0].mxu0
        %v4252 = vpop.f32.mrb[0].mxu0
        %v4253 = vadd.f32 %v4015, %v4252
        %v4254 = vpop.f32.mrb[0].mxu0
        %4255 = vdwg.mxu0
        %v4256 = vsel %vm264, %v4130, 0.0
        %v4257 = vsel %vm264, %v4133, 0.0
        %v4258 = vadd.f32 %v4256, %v4257
        %v4259 = vsel %vm264, %v4138, 0.0
        %v4260 = vadd.f32 %v4258, %v4259
        %v4261 = vsel %vm264, %v4141, 0.0
        %v4262 = vadd.f32 %v4260, %v4261
        %v4263 = vsel %vm264, %v4146, 0.0
        %v4264 = vadd.f32 %v4262, %v4263
        %v4265 = vsel %vm264, %v4149, 0.0
        %v4266 = vadd.f32 %v4264, %v4265
        %v4267 = vsel %vm264, %v4154, 0.0
        %v4268 = vadd.f32 %v4266, %v4267
        %v4269 = vsel %vm264, %v4157, 0.0
        %v4270 = vadd.f32 %v4268, %v4269
        %v4271 = vsel %vm264, %v4162, 0.0
        %v4272 = vadd.f32 %v4270, %v4271
        %v4273 = vsel %vm264, %v4165, 0.0
        %v4274 = vadd.f32 %v4272, %v4273
        %v4275 = vsel %vm264, %v4170, 0.0
        %v4276 = vadd.f32 %v4274, %v4275
        %v4277 = vsel %vm264, %v4173, 0.0
        %v4278 = vadd.f32 %v4276, %v4277
        %v4279 = vsel %vm264, %v4178, 0.0
        %v4280 = vadd.f32 %v4278, %v4279
        %v4281 = vsel %vm264, %v4181, 0.0
        %v4282 = vadd.f32 %v4280, %v4281
        %v4283 = vsel %vm264, %v4186, 0.0
        %v4284 = vadd.f32 %v4282, %v4283
        %v4285 = vsel %vm264, %v4189, 0.0
        %v4286 = vadd.f32 %v4284, %v4285
        %v4287 = vsel %vm264, %v4194, 0.0
        %v4288 = vadd.f32 %v4286, %v4287
        %v4289 = vsel %vm264, %v4197, 0.0
        %v4290 = vadd.f32 %v4288, %v4289
        %v4291 = vsel %vm264, %v4202, 0.0
        %v4292 = vadd.f32 %v4290, %v4291
        %v4293 = vsel %vm264, %v4205, 0.0
        %v4294 = vadd.f32 %v4292, %v4293
        %v4295 = vsel %vm264, %v4210, 0.0
        %v4296 = vadd.f32 %v4294, %v4295
        %v4297 = vsel %vm264, %v4213, 0.0
        %v4298 = vadd.f32 %v4296, %v4297
        %v4299 = vsel %vm264, %v4218, 0.0
        %v4300 = vadd.f32 %v4298, %v4299
        %v4301 = vsel %vm264, %v4221, 0.0
        %v4302 = vadd.f32 %v4300, %v4301
        %v4303 = vsel %vm264, %v4226, 0.0
        %v4304 = vadd.f32 %v4302, %v4303
        %v4305 = vsel %vm264, %v4229, 0.0
        %v4306 = vadd.f32 %v4304, %v4305
        %v4307 = vsel %vm264, %v4234, 0.0
        %v4308 = vadd.f32 %v4306, %v4307
        %v4309 = vsel %vm264, %v4237, 0.0
        %v4310 = vadd.f32 %v4308, %v4309
        %v4311 = vsel %vm264, %v4242, 0.0
        %v4312 = vadd.f32 %v4310, %v4311
        %v4313 = vsel %vm264, %v4245, 0.0
        %v4314 = vadd.f32 %v4312, %v4313
        %v4315 = vsel %vm264, %v4250, 0.0
        %v4316 = vadd.f32 %v4314, %v4315
        %v4317 = vsel %vm264, %v4253, 0.0
        %v4318 = vadd.f32 %v4316, %v4317
        %v4319 = vrot.slane %v4318, 4
        %v4320 = vadd.f32 %v4318, %v4319
        %v4321 = vrot.slane %v4320, 2
        %v4322 = vadd.f32 %v4320, %v4321
        %v4323 = vrot.slane %v4322, 1
        %v4324 = vadd.f32 %v4322, %v4323
        %4325 = vst.msk [vmem:[%s252] sm:$0x1] %vm273, %v4324
        %v4326 = vmul.f32 %v4130, %v4130
        %v4327 = vmul.f32 %v4133, %v4133
        %v4328 = vmul.f32 %v4138, %v4138
        %v4329 = vmul.f32 %v4141, %v4141
        %v4330 = vmul.f32 %v4146, %v4146
        %v4331 = vmul.f32 %v4149, %v4149
        %v4332 = vmul.f32 %v4154, %v4154
        %v4333 = vmul.f32 %v4157, %v4157
        %v4334 = vmul.f32 %v4162, %v4162
        %v4335 = vmul.f32 %v4165, %v4165
        %v4336 = vmul.f32 %v4170, %v4170
        %v4337 = vmul.f32 %v4173, %v4173
        %v4338 = vmul.f32 %v4178, %v4178
        %v4339 = vmul.f32 %v4181, %v4181
        %v4340 = vmul.f32 %v4186, %v4186
        %v4341 = vmul.f32 %v4189, %v4189
        %v4342 = vmul.f32 %v4194, %v4194
        %v4343 = vmul.f32 %v4197, %v4197
        %v4344 = vmul.f32 %v4202, %v4202
        %v4345 = vmul.f32 %v4205, %v4205
        %v4346 = vmul.f32 %v4210, %v4210
        %v4347 = vmul.f32 %v4213, %v4213
        %v4348 = vmul.f32 %v4218, %v4218
        %v4349 = vmul.f32 %v4221, %v4221
        %v4350 = vmul.f32 %v4226, %v4226
        %v4351 = vmul.f32 %v4229, %v4229
        %v4352 = vmul.f32 %v4234, %v4234
        %v4353 = vmul.f32 %v4237, %v4237
        %v4354 = vmul.f32 %v4242, %v4242
        %v4355 = vmul.f32 %v4245, %v4245
        %v4356 = vmul.f32 %v4250, %v4250
        %v4357 = vmul.f32 %v4253, %v4253
        %v4358 = vsel %vm264, %v4326, 0.0
        %v4359 = vsel %vm264, %v4327, 0.0
        %v4360 = vadd.f32 %v4358, %v4359
        %v4361 = vsel %vm264, %v4328, 0.0
        %v4362 = vadd.f32 %v4360, %v4361
        %v4363 = vsel %vm264, %v4329, 0.0
        %v4364 = vadd.f32 %v4362, %v4363
        %v4365 = vsel %vm264, %v4330, 0.0
        %v4366 = vadd.f32 %v4364, %v4365
        %v4367 = vsel %vm264, %v4331, 0.0
        %v4368 = vadd.f32 %v4366, %v4367
        %v4369 = vsel %vm264, %v4332, 0.0
        %v4370 = vadd.f32 %v4368, %v4369
        %v4371 = vsel %vm264, %v4333, 0.0
        %v4372 = vadd.f32 %v4370, %v4371
        %v4373 = vsel %vm264, %v4334, 0.0
        %v4374 = vadd.f32 %v4372, %v4373
        %v4375 = vsel %vm264, %v4335, 0.0
        %v4376 = vadd.f32 %v4374, %v4375
        %v4377 = vsel %vm264, %v4336, 0.0
        %v4378 = vadd.f32 %v4376, %v4377
        %v4379 = vsel %vm264, %v4337, 0.0
        %v4380 = vadd.f32 %v4378, %v4379
        %v4381 = vsel %vm264, %v4338, 0.0
        %v4382 = vadd.f32 %v4380, %v4381
        %v4383 = vsel %vm264, %v4339, 0.0
        %v4384 = vadd.f32 %v4382, %v4383
        %v4385 = vsel %vm264, %v4340, 0.0
        %v4386 = vadd.f32 %v4384, %v4385
        %v4387 = vsel %vm264, %v4341, 0.0
        %v4388 = vadd.f32 %v4386, %v4387
        %v4389 = vsel %vm264, %v4342, 0.0
        %v4390 = vadd.f32 %v4388, %v4389
        %v4391 = vsel %vm264, %v4343, 0.0
        %v4392 = vadd.f32 %v4390, %v4391
        %v4393 = vsel %vm264, %v4344, 0.0
        %v4394 = vadd.f32 %v4392, %v4393
        %v4395 = vsel %vm264, %v4345, 0.0
        %v4396 = vadd.f32 %v4394, %v4395
        %v4397 = vsel %vm264, %v4346, 0.0
        %v4398 = vadd.f32 %v4396, %v4397
        %v4399 = vsel %vm264, %v4347, 0.0
        %v4400 = vadd.f32 %v4398, %v4399
        %v4401 = vsel %vm264, %v4348, 0.0
        %v4402 = vadd.f32 %v4400, %v4401
        %v4403 = vsel %vm264, %v4349, 0.0
        %v4404 = vadd.f32 %v4402, %v4403
        %v4405 = vsel %vm264, %v4350, 0.0
        %v4406 = vadd.f32 %v4404, %v4405
        %v4407 = vsel %vm264, %v4351, 0.0
        %v4408 = vadd.f32 %v4406, %v4407
        %v4409 = vsel %vm264, %v4352, 0.0
        %v4410 = vadd.f32 %v4408, %v4409
        %v4411 = vsel %vm264, %v4353, 0.0
        %v4412 = vadd.f32 %v4410, %v4411
        %v4413 = vsel %vm264, %v4354, 0.0
        %v4414 = vadd.f32 %v4412, %v4413
        %v4415 = vsel %vm264, %v4355, 0.0
        %v4416 = vadd.f32 %v4414, %v4415
        %v4417 = vsel %vm264, %v4356, 0.0
        %v4418 = vadd.f32 %v4416, %v4417
        %v4419 = vsel %vm264, %v4357, 0.0
        %v4420 = vadd.f32 %v4418, %v4419
        %v4421 = vrot.slane %v4420, 4
        %v4422 = vadd.f32 %v4420, %v4421
        %v4423 = vrot.slane %v4422, 2
        %v4424 = vadd.f32 %v4422, %v4423
        %v4425 = vrot.slane %v4424, 1
        %v4426 = vadd.f32 %v4424, %v4425
        %4427 = vst.msk [vmem:[%s252 + $0x1] sm:$0x1] %vm273, %v4426
        %4428 = vst.msk [vmem:[%s262] sm:$0xff] %vm264, %v4130
        %4429 = vst.msk [vmem:[%s262 + $0x8] sm:$0xff] %vm264, %v4133
        %4430 = vst.msk [vmem:[%s262 + $0x10] sm:$0xff] %vm264, %v4138
        %4431 = vst.msk [vmem:[%s262 + $0x18] sm:$0xff] %vm264, %v4141
        %4432 = vst.msk [vmem:[%s262 + $0x20] sm:$0xff] %vm264, %v4146
        %4433 = vst.msk [vmem:[%s262 + $0x28] sm:$0xff] %vm264, %v4149
        %4434 = vst.msk [vmem:[%s262 + $0x30] sm:$0xff] %vm264, %v4154
        %4435 = vst.msk [vmem:[%s262 + $0x38] sm:$0xff] %vm264, %v4157
        %4436 = vst.msk [vmem:[%s262 + $0x40] sm:$0xff] %vm264, %v4162
        %4437 = vst.msk [vmem:[%s262 + $0x48] sm:$0xff] %vm264, %v4165
        %4438 = vst.msk [vmem:[%s262 + $0x50] sm:$0xff] %vm264, %v4170
        %4439 = vst.msk [vmem:[%s262 + $0x58] sm:$0xff] %vm264, %v4173
        %4440 = vst.msk [vmem:[%s262 + $0x60] sm:$0xff] %vm264, %v4178
        %4441 = vst.msk [vmem:[%s262 + $0x68] sm:$0xff] %vm264, %v4181
        %4442 = vst.msk [vmem:[%s262 + $0x70] sm:$0xff] %vm264, %v4186
        %4443 = vst.msk [vmem:[%s262 + $0x78] sm:$0xff] %vm264, %v4189
        %4444 = vst.msk [vmem:[%s262 + $0x80] sm:$0xff] %vm264, %v4194
        %4445 = vst.msk [vmem:[%s262 + $0x88] sm:$0xff] %vm264, %v4197
        %4446 = vst.msk [vmem:[%s262 + $0x90] sm:$0xff] %vm264, %v4202
        %4447 = vst.msk [vmem:[%s262 + $0x98] sm:$0xff] %vm264, %v4205
        %4448 = vst.msk [vmem:[%s262 + $0xa0] sm:$0xff] %vm264, %v4210
        %4449 = vst.msk [vmem:[%s262 + $0xa8] sm:$0xff] %vm264, %v4213
        %4450 = vst.msk [vmem:[%s262 + $0xb0] sm:$0xff] %vm264, %v4218
        %4451 = vst.msk [vmem:[%s262 + $0xb8] sm:$0xff] %vm264, %v4221
        %4452 = vst.msk [vmem:[%s262 + $0xc0] sm:$0xff] %vm264, %v4226
        %4453 = vst.msk [vmem:[%s262 + $0xc8] sm:$0xff] %vm264, %v4229
        %4454 = vst.msk [vmem:[%s262 + $0xd0] sm:$0xff] %vm264, %v4234
        %4455 = vst.msk [vmem:[%s262 + $0xd8] sm:$0xff] %vm264, %v4237
        %4456 = vst.msk [vmem:[%s262 + $0xe0] sm:$0xff] %vm264, %v4242
        %4457 = vst.msk [vmem:[%s262 + $0xe8] sm:$0xff] %vm264, %v4245
        %4458 = vst.msk [vmem:[%s262 + $0xf0] sm:$0xff] %vm264, %v4250
        %4459 = vst.msk [vmem:[%s262 + $0xf8] sm:$0xff] %vm264, %v4253
        %p4460 = scmp.lt.s32.totalorder %s21, 1
        %s4461 = scalar_select %p4460, %s21, 1
        %s4462 = smul.addr %s4461, 32
        %s4463 = smul.addr %s4462, 8
        %s4464 = scalar_lea.vmem %s5, %s4463
        %s4465 = sand.u32 %s165, 1
        %s4466 = scalar_lea.sflag [#allocation5], %s4465
        %s4467 = sand.u32 %s165, 1
        %s4468 = smul.addr %s4467, 2
        %s4469 = scalar_lea.vmem [#allocation4], %s4468
        // Predicated region
        $region41: #{tpu_custom_call.1} parent=39 // pred_check
          %p4470 = pneg %p149
        $region42: #{tpu_custom_call.1} parent=39 // pred_check_branch
          %4472 = sbr.rel (%p4470) target = $region44
        $region43: #{tpu_custom_call.1} parent=39 // pred_region
          _
        $region44: #{tpu_custom_call.1} parent=39 // pred_fallthru
          _
        // Predicated region
        $region45: #{tpu_custom_call.1} parent=39 // pred_check
          %p4473 = pneg %p175
        $region46: #{tpu_custom_call.1} parent=39 // pred_check_branch
          %4475 = sbr.rel (%p4473) target = $region48
        $region47: #{tpu_custom_call.1} parent=39 // pred_region
          %s4477 = ssub.s32 32, 32
          %4478 = vsyncadd %s4466, %s4477
          %s4479 = smul.addr %s21, 32
          %s4480 = scalar_lea.hbm %s6, %s4479
          %s4482 = sshll.u32 %s4469, 4
          %s4483 = int_to_ptr.vmem [resolvable:$true] %s4482
          %4485 = dma.vmem_to_hbm [thread:$0]  %s4483, 32, %s4480, %s4466
        $region48: #{tpu_custom_call.1} parent=39 // pred_fallthru
          _
      $region40: #{tpu_custom_call.1} parent=5 // pred_fallthru
        _
      %p4486 = scmp.le.s32.totalorder 2, %s16
      // Predicated region
      $region49: #{tpu_custom_call.1} parent=5 // pred_check
        %p4487 = pneg %p4486
      $region50: #{tpu_custom_call.1} parent=5 // pred_check_branch
        %4489 = sbr.rel (%p4487) target = $region52
      $region51: #{tpu_custom_call.1} parent=5 // pred_region
        %s4490 = ssub.s32 %s16, 2
        // Predicated region
        $region53: #{tpu_custom_call.1} parent=51 // pred_check
          %p4491 = pneg %p155
        $region54: #{tpu_custom_call.1} parent=51 // pred_check_branch
          %4493 = sbr.rel (%p4491) target = $region56
        $region55: #{tpu_custom_call.1} parent=51 // pred_region
          %p4494 = scmp.lt.s32.totalorder %s22, 1
          %s4495 = scalar_select %p4494, %s22, 1
          %s4496 = smul.addr %s4495, 32
          %s4497 = smul.addr %s4496, 8
          %s4498 = scalar_lea.vmem %s5, %s4497
        $region56: #{tpu_custom_call.1} parent=51 // pred_fallthru
          _
        // Predicated region
        $region57: #{tpu_custom_call.1} parent=51 // pred_check
          %p4499 = pneg %p181
        $region58: #{tpu_custom_call.1} parent=51 // pred_check_branch
          %4501 = sbr.rel (%p4499) target = $region60
        $region59: #{tpu_custom_call.1} parent=51 // pred_region
          %s4502 = sand.u32 %s166, 1
          %s4503 = scalar_lea.sflag [#allocation5], %s4502
          %s4504 = sand.u32 %s166, 1
          %s4505 = smul.addr %s4504, 2
          %s4506 = scalar_lea.vmem [#allocation4], %s4505
          %4507 = dma.done %s4503, 32
        $region60: #{tpu_custom_call.1} parent=51 // pred_fallthru
          _
      $region52: #{tpu_custom_call.1} parent=5 // pred_fallthru
        _
    $region6: #{tpu_custom_call.1} parent=1 // loop_footer
      %s20 = sadd.s32 1, %s16
    $region7: #{tpu_custom_call.1} parent=1 // loop_footer_branch
      %15 = sbr.rel target = $region3
    $region8: #{tpu_custom_call.1} parent=1 // loop_exit
      _
    %4508 = vsyncpa [#allocation5], 1
    %s4509 = scalar_lea.sflag [#allocation5], 1
    %4510 = vsyncpa %s4509, 1

</llo_original>
